<compile_context>
chip_gen: v7x
topology: tpu7x:2x2x1
jax: 0.10.0
libtpu: 0.0.40
codegen_flags: <defaults>
</compile_context>

<pallas_src>
import numpy as np

import jax
import jax.numpy as jnp
from jax import lax
from jax.experimental import pallas as pl
from jax.experimental.pallas import tpu as pltpu


# --------------------------------------------------------------------------- #
# Static nearest-neighbour gather plan (host side, numpy).
# --------------------------------------------------------------------------- #
def _nearest_idx(dst, src):
    """Nearest source index for each destination index (exact integer math)."""
    return (np.arange(dst) * src) // dst


def _combined_selection(idx_h, idx_w, src_hw, dtype):
    """One-hot (Hs*Ws, Ho*Wo) matrix implementing the fused 2-D nearest gather.

    Returns None when the gather is the identity (same resolution, identity
    index maps) so the kernel can skip the matmul entirely.
    """
    hs, ws = src_hw
    ho, wo = int(idx_h.shape[0]), int(idx_w.shape[0])
    if (hs, ws) == (ho, wo) \
            and np.array_equal(idx_h, np.arange(ho)) \
            and np.array_equal(idx_w, np.arange(wo)):
        return None
    src_flat = (idx_h[:, None] * ws + idx_w[None, :]).reshape(-1)   # (Ho*Wo,)
    m = np.zeros((hs * ws, ho * wo), dtype=np.float32)
    m[src_flat, np.arange(ho * wo)] = 1.0
    return jnp.asarray(m, dtype=dtype)


# --------------------------------------------------------------------------- #
# Kernel.
# --------------------------------------------------------------------------- #
def _make_gp_sum_kernel(plan):
    """plan: per input (x0, x1, x2), True iff it needs a selection matmul."""
    n_mats = sum(plan)

    def _resample(x, s):
        if s is None:
            return x                      # identity: upcast deferred to accumulate
        # One-hot selection matmul on the MXU.  HIGHEST precision keeps f32
        # data exact (multi-pass); bf16 data is a single exact bf16 pass.
        prec = (lax.Precision.HIGHEST if x.dtype == jnp.float32
                else lax.Precision.DEFAULT)
        return jnp.dot(x, s, preferred_element_type=jnp.float32, precision=prec)

    def kernel(*refs):
        x_refs = refs[:3]                 # (tc, K0), (tc, K1), (tc, K2)
        mat_refs = refs[3:3 + n_mats]
        out_ref = refs[3 + n_mats]        # (tc, Kout)  -- lane-dense

        mats, mi = [], 0
        for need in plan:
            mats.append(mat_refs[mi][...] if need else None)
            mi += int(need)

        x0 = x_refs[0][...]               # native-resolution x0 tile
        # Global context from the already-resident x0 tile (XLU reduce + EUP).
        ctx = jax.nn.sigmoid(
            jnp.mean(x0.astype(jnp.float32), axis=1, keepdims=True))   # (tc, 1)

        x0r = _resample(x0, mats[0])                 # out <- x1.HW <- x0 (composed)
        x1r = _resample(x_refs[1][...], mats[1])     # out <- x1
        x2r = _resample(x_refs[2][...], mats[2])     # out <- x2

        # Accumulate into a single f32 buffer (minimal simultaneously-live temps).
        acc = x0r.astype(jnp.float32)
        acc = acc + x2r.astype(jnp.float32)
        acc = acc + ctx * x1r.astype(jnp.float32)
        out_ref[...] = acc.astype(out_ref.dtype)

    return kernel


# --------------------------------------------------------------------------- #
# Wrapper.
# --------------------------------------------------------------------------- #
def _vmem_plan():
    """(vmem_limit_bytes, per-step block budget) sized for the TPU generation."""
    MiB = 1024 * 1024
    try:
        cap = int(getattr(pltpu.get_tpu_info(), "vmem_capacity_bytes", 64 * MiB))
    except Exception:
        cap = 64 * MiB                    # conservative (v7x-sized) fallback
    if cap >= 100 * MiB:                  # v5e / v6e: 128 MiB physical VMEM
        return 48 * MiB, 16 * MiB
    return 36 * MiB, 10 * MiB             # v7x: 64 MiB per TensorCore


def gp_sum(x0, x1, x2, out_shape):
    """GP_SUM forward. out_shape is an NCHW tuple (like torch.Size)."""
    N, C, Ho, Wo = (int(s) for s in out_shape)
    H0, W0 = int(x0.shape[2]), int(x0.shape[3])
    H1, W1 = int(x1.shape[2]), int(x1.shape[3])
    H2, W2 = int(x2.shape[2]), int(x2.shape[3])
    K0, K1, K2, Kout = H0 * W0, H1 * W1, H2 * W2, Ho * Wo
    out_dtype = jnp.result_type(x0.dtype, x1.dtype, x2.dtype)

    # --- static gather plan (composed out -> x1.HW -> x0 for the x0 path) ----
    oh1, ow1 = _nearest_idx(Ho, H1), _nearest_idx(Wo, W1)              # out -> x1
    oh0, ow0 = _nearest_idx(H1, H0)[oh1], _nearest_idx(W1, W0)[ow1]    # out -> x1 -> x0
    oh2, ow2 = _nearest_idx(Ho, H2), _nearest_idx(Wo, W2)              # out -> x2

    sels = [
        _combined_selection(oh0, ow0, (H0, W0), x0.dtype),
        _combined_selection(oh1, ow1, (H1, W1), x1.dtype),
        _combined_selection(oh2, ow2, (H2, W2), x2.dtype),
    ]
    plan = tuple(s is not None for s in sels)
    mats = [s for s in sels if s is not None]
    mats_bytes = sum(int(m.size) * np.dtype(m.dtype).itemsize for m in mats)

    # --- generation-aware channel tile ---------------------------------------
    MiB = 1024 * 1024
    vmem_limit_bytes, block_budget = _vmem_plan()
    i0, i1, i2 = (np.dtype(a.dtype).itemsize for a in (x0, x1, x2))
    out_item = np.dtype(out_dtype).itemsize
    # Double-buffered in/out blocks + in-kernel f32 temporaries (x0r/x2r/acc + ctx path).
    per_ch_bytes = (2 * (K0 * i0 + K1 * i1 + K2 * i2)
                    + 2 * Kout * out_item
                    + 4 * (3 * Kout + K0))
    budget = max(2 * MiB,
                 min(block_budget, vmem_limit_bytes - 2 * mats_bytes - 4 * MiB))

    # (8,128) layout rule: the second-minor block dim (tc) must be a multiple of
    # the sublane packing (8 f32 / 16 bf16 / 32 int8) or equal to the full dim C.
    mult = max(8 * (4 // np.dtype(a.dtype).itemsize) for a in (x0, x1, x2))
    mult = max(mult, 8 * (4 // out_item))
    cands = sorted({C, *range(mult, C, mult)})
    fitting = [t for t in cands if t * per_ch_bytes <= budget]
    tc = max(fitting) if fitting else min(cands)

    def n_steps(t):
        return N * (-(-C // t))

    if n_steps(tc) < 4:                   # prefer >= 2 grid steps per v7x core
        better = [t for t in fitting if n_steps(t) >= 4]
        if better:
            tc = max(better)
    grid = (N, -(-C // tc))

    # --- lane-dense flattening (free reshapes in HBM) -------------------------
    x0f = x0.reshape(N, C, K0)
    x1f = x1.reshape(N, C, K1)
    x2f = x2.reshape(N, C, K2)

    in_specs = [
        pl.BlockSpec((None, tc, K0), lambda n, c: (n, c, 0)),
        pl.BlockSpec((None, tc, K1), lambda n, c: (n, c, 0)),
        pl.BlockSpec((None, tc, K2), lambda n, c: (n, c, 0)),
    ] + [pl.BlockSpec(m.shape, lambda n, c: (0, 0)) for m in mats]
    # NOTE: the selection-matrix block index never changes, so Pallas skips the
    # re-DMA across grid steps; the second pipeline buffer is counted above.

    out_flat = pl.pallas_call(
        _make_gp_sum_kernel(plan),
        out_shape=jax.ShapeDtypeStruct((N, C, Kout), out_dtype),
        grid=grid,
        in_specs=in_specs,
        out_specs=pl.BlockSpec((None, tc, Kout), lambda n, c: (n, c, 0)),
        compiler_params=pltpu.CompilerParams(
            dimension_semantics=("parallel", "parallel"),
            vmem_limit_bytes=vmem_limit_bytes,
        ),
    )(x0f, x1f, x2f, *mats)

    return out_flat.reshape(N, C, Ho, Wo)


# --------------------------------------------------------------------------- #
# Plain-JAX reference (faithful, unfused re-implementation of the PyTorch code).
# --------------------------------------------------------------------------- #
def _nearest_interp_ref(x, size):
    H, W = x.shape[2], x.shape[3]
    Ho, Wo = int(size[0]), int(size[1])
    if (H, W) == (Ho, Wo):
        return x
    hi = (jnp.arange(Ho) * H) // Ho
    wi = (jnp.arange(Wo) * W) // Wo
    return x[:, :, hi, :][:, :, :, wi]


def _reference(x0, x1, x2, out_shape):
    # GP([x0, x1], x1.shape): x1 already at the GP target resolution.
    ctx = jax.nn.sigmoid(jnp.mean(x0, axis=(2, 3), keepdims=True))
    gp = ctx * x1 + _nearest_interp_ref(x0, x1.shape[2:])
    # SUM([gp, x2], out_shape)
    x2r = x2 if tuple(x2.shape) == tuple(out_shape) else _nearest_interp_ref(x2, out_shape[2:])
    return x2r + _nearest_interp_ref(gp, out_shape[2:])


if __name__ == "__main__":
    key = jax.random.PRNGKey(0)
    k0, k1, k2 = jax.random.split(key, 3)

    N, C = 2, 4
    x0 = jax.random.normal(k0, (N, C, 8, 8), dtype=jnp.float32)     # coarse level
    x1 = jax.random.normal(k1, (N, C, 16, 16), dtype=jnp.float32)   # mid level
    x2 = jax.random.normal(k2, (N, C, 32, 32), dtype=jnp.float32)   # fine level
    out_shape = (N, C, 16, 16)

    out = jax.block_until_ready(gp_sum(x0, x1, x2, out_shape))
    ref = _reference(x0, x1, x2, out_shape)

    assert out.shape == tuple(out_shape)
    assert out.dtype == ref.dtype
    # One-hot selection matmuls (precision=HIGHEST for f32 data) reproduce the
    # gathered values (near-)exactly; the only expected differences are tiny
    # mean/sigmoid rounding deltas (~1e-7).  A wrong gathered pixel or a
    # precision regression (single-pass bf16 on f32 data) is O(1e-3..1) and
    # would be caught by this tolerance.
    err = float(jnp.max(jnp.abs(out - ref)))
    assert jnp.allclose(out, ref, atol=1e-4, rtol=1e-4), err

    print("KERNEL_OK")
</pallas_src>

<mosaic_0001>
module attributes {stable_mosaic.version = 11 : i64} {
  func.func @kernel(%arg0: i32, %arg1: i32, %arg2: memref<1x4x64xf32, #tpu.memory_space<vmem>>, %arg3: memref<1x4x256xf32, #tpu.memory_space<vmem>>, %arg4: memref<1x4x1024xf32, #tpu.memory_space<vmem>>, %arg5: memref<64x256xf32, #tpu.memory_space<vmem>>, %arg6: memref<1024x256xf32, #tpu.memory_space<vmem>>, %arg7: memref<1x4x256xf32, #tpu.memory_space<vmem>>) attributes {dimension_semantics = [#tpu.dimension_semantics<parallel>, #tpu.dimension_semantics<parallel>], iteration_bounds = array<i64: 2, 1>, scalar_prefetch = 0 : i64, scratch_operands = 0 : i64, tpu.core_type = #tpu.core_type<tc>, window_params = [{transform_indices = @transform_0, window_bounds = array<i64: 1, 4, 64>}, {transform_indices = @transform_1, window_bounds = array<i64: 1, 4, 256>}, {transform_indices = @transform_2, window_bounds = array<i64: 1, 4, 1024>}, {pipeline_mode = #tpu.pipeline_mode<synchronous>, transform_indices = @transform_3, window_bounds = array<i64: 64, 256>}, {pipeline_mode = #tpu.pipeline_mode<synchronous>, transform_indices = @transform_4, window_bounds = array<i64: 1024, 256>}, {transform_indices = @transform_5, window_bounds = array<i64: 1, 4, 256>}]} {
    %c0 = arith.constant 0 : index
    %c0_0 = arith.constant 0 : index
    %0 = vector.load %arg5[%c0, %c0_0] : memref<64x256xf32, #tpu.memory_space<vmem>>, vector<64x256xf32>
    %c0_1 = arith.constant 0 : index
    %c0_2 = arith.constant 0 : index
    %1 = vector.load %arg6[%c0_1, %c0_2] : memref<1024x256xf32, #tpu.memory_space<vmem>>, vector<1024x256xf32>
    %c0_3 = arith.constant 0 : index
    %c0_4 = arith.constant 0 : index
    %c0_5 = arith.constant 0 : index
    %2 = vector.load %arg2[%c0_3, %c0_4, %c0_5] : memref<1x4x64xf32, #tpu.memory_space<vmem>>, vector<1x4x64xf32>
    %3 = vector.shape_cast %2 : vector<1x4x64xf32> to vector<4x64xf32>
    %cst = arith.constant dense<0.000000e+00> : vector<4xf32>
    %4 = vector.multi_reduction <add>, %3, %cst [1] : vector<4x64xf32> to vector<4xf32>
    %5 = vector.shape_cast %4 : vector<4xf32> to vector<4x1xf32>
    %cst_6 = arith.constant 6.400000e+01 : f32
    %6 = vector.broadcast %cst_6 : f32 to vector<4x1xf32>
    %7 = arith.divf %5, %6 : vector<4x1xf32>
    %8 = arith.negf %7 : vector<4x1xf32>
    %9 = math.exp %8 : vector<4x1xf32>
    %cst_7 = arith.constant 1.000000e+00 : f32
    %10 = vector.broadcast %cst_7 : f32 to vector<4x1xf32>
    %11 = arith.addf %10, %9 : vector<4x1xf32>
    %12 = arith.divf %10, %11 : vector<4x1xf32>
    %cst_8 = arith.constant dense<0.000000e+00> : vector<4x256xf32>
    %13 = tpu.matmul %3, %0, %cst_8 {dimension_numbers = #tpu.dot_dimension_numbers<[1], [0], [0], [1], [0, 0, 1, 1], [], []>, precision = #tpu.contract_precision<fp32>} : vector<4x64xf32>, vector<64x256xf32>, vector<4x256xf32> -> vector<4x256xf32>
    %c0_9 = arith.constant 0 : index
    %c0_10 = arith.constant 0 : index
    %c0_11 = arith.constant 0 : index
    %14 = vector.load %arg3[%c0_9, %c0_10, %c0_11] : memref<1x4x256xf32, #tpu.memory_space<vmem>>, vector<1x4x256xf32>
    %15 = vector.shape_cast %14 : vector<1x4x256xf32> to vector<4x256xf32>
    %c0_12 = arith.constant 0 : index
    %c0_13 = arith.constant 0 : index
    %c0_14 = arith.constant 0 : index
    %16 = vector.load %arg4[%c0_12, %c0_13, %c0_14] : memref<1x4x1024xf32, #tpu.memory_space<vmem>>, vector<1x4x1024xf32>
    %17 = vector.shape_cast %16 : vector<1x4x1024xf32> to vector<4x1024xf32>
    %cst_15 = arith.constant dense<0.000000e+00> : vector<4x256xf32>
    %18 = tpu.matmul %17, %1, %cst_15 {dimension_numbers = #tpu.dot_dimension_numbers<[1], [0], [0], [1], [0, 0, 1, 1], [], []>, precision = #tpu.contract_precision<fp32>} : vector<4x1024xf32>, vector<1024x256xf32>, vector<4x256xf32> -> vector<4x256xf32>
    %19 = arith.addf %13, %18 : vector<4x256xf32>
    %20 = vector.broadcast %12 : vector<4x1xf32> to vector<4x256xf32>
    %21 = arith.mulf %20, %15 : vector<4x256xf32>
    %22 = arith.addf %19, %21 : vector<4x256xf32>
    %c0_16 = arith.constant 0 : index
    %c0_17 = arith.constant 0 : index
    %c0_18 = arith.constant 0 : index
    %23 = vector.load %arg7[%c0_16, %c0_17, %c0_18] : memref<1x4x256xf32, #tpu.memory_space<vmem>>, vector<1x4x256xf32>
    %24 = vector.shape_cast %23 : vector<1x4x256xf32> to vector<4x256xf32>
    %25 = vector.shape_cast %22 : vector<4x256xf32> to vector<1x4x256xf32>
    tpu.vector_store %arg7[%c0_16, %c0_17, %c0_18], %25 {strides = array<i32>} : memref<1x4x256xf32, #tpu.memory_space<vmem>>, vector<1x4x256xf32>,
    return
  }
  func.func @transform_0(%arg0: i32, %arg1: i32) -> (i32, i32, i32) {
    %c0_i32 = arith.constant 0 : i32
    %c0_i32_0 = arith.constant 0 : i32
    return %arg0, %arg1, %c0_i32 : i32, i32, i32
  }
  func.func @transform_1(%arg0: i32, %arg1: i32) -> (i32, i32, i32) {
    %c0_i32 = arith.constant 0 : i32
    %c0_i32_0 = arith.constant 0 : i32
    return %arg0, %arg1, %c0_i32 : i32, i32, i32
  }
  func.func @transform_2(%arg0: i32, %arg1: i32) -> (i32, i32, i32) {
    %c0_i32 = arith.constant 0 : i32
    %c0_i32_0 = arith.constant 0 : i32
    return %arg0, %arg1, %c0_i32 : i32, i32, i32
  }
  func.func @transform_3(%arg0: i32, %arg1: i32) -> (i32, i32) {
    %c0_i32 = arith.constant 0 : i32
    %c0_i32_0 = arith.constant 0 : i32
    %c0_i32_1 = arith.constant 0 : i32
    return %c0_i32, %c0_i32_0 : i32, i32
  }
  func.func @transform_4(%arg0: i32, %arg1: i32) -> (i32, i32) {
    %c0_i32 = arith.constant 0 : i32
    %c0_i32_0 = arith.constant 0 : i32
    %c0_i32_1 = arith.constant 0 : i32
    return %c0_i32, %c0_i32_0 : i32, i32
  }
  func.func @transform_5(%arg0: i32, %arg1: i32) -> (i32, i32, i32) {
    %c0_i32 = arith.constant 0 : i32
    %c0_i32_0 = arith.constant 0 : i32
    return %arg0, %arg1, %c0_i32 : i32, i32, i32
  }
}

</mosaic_0001>

<llo_original>
// kernel: tpu_custom_call.1
$region0: #{tpu_custom_call.1}
  #allocation0 [shape = 'u32[]', space=smem, size = 0x4, offset = 0x4, fixed_abs, tag = 'smem constant byte address 0x4 - core index']
  #allocation1 [shape = 'u32[144,128]{1,0:T(1,128)}', space=vmem, size = 0x12000, scoped, tag = 'internal scratch']
  %s0 = inlined_call_operand.hbm [shape: f32[2,4,64], index: 0, kind: input, shape index: {}]
  %s1 = inlined_call_operand.hbm [shape: f32[2,4,256], index: 1, kind: input, shape index: {}]
  %s2 = inlined_call_operand.hbm [shape: f32[2,4,1024], index: 2, kind: input, shape index: {}]
  %s3 = inlined_call_operand.hbm [shape: f32[64,256], index: 3, kind: input, shape index: {}]
  %s4 = inlined_call_operand.hbm [shape: f32[1024,256], index: 4, kind: input, shape index: {}]
  %s5 = inlined_call_operand.hbm [shape: f32[2,4,256], index: 5, kind: output, shape index: {}]
  %s6 = sld [smem:[#allocation0]]
  $region73: #{tpu_custom_call.1} parent=0
    _
  %s8 = ssub.s32 1, %s6
  %s9 = scalar_select 0, %s8, %s6
  $region1: #{tpu_custom_call.1} parent=0
    #allocation2 [shape = 'u8[4096]{0}', space=vmem, size = 0x1000, scoped, tag = 'input window, operand 0']
    #allocation3 [shape = 's32[2]{0}', space=sflag, size = 0x8, scoped, tag = 'scoped memory for tpu_custom_call.1']
    #allocation4 [shape = 's32[2]{0}', space=sflag, size = 0x8, scoped, tag = 'scoped memory for tpu_custom_call.1']
    #allocation5 [shape = 'u8[8192]{0}', space=vmem, size = 0x2000, scoped, tag = 'input window, operand 1']
    #allocation6 [shape = 's32[2]{0}', space=sflag, size = 0x8, scoped, tag = 'scoped memory for tpu_custom_call.1']
    #allocation7 [shape = 'u8[32768]{0}', space=vmem, size = 0x8000, scoped, tag = 'input window, operand 2']
    #allocation8 [shape = 'u8[65536]{0}', space=vmem, size = 0x10000, scoped, tag = 'input window, operand 3, single buffered']
    #allocation9 [shape = 's32[1]{0}', space=sflag, size = 0x4, scoped, tag = 'scoped memory for tpu_custom_call.1']
    #allocation10 [shape = 'u8[1048576]{0}', space=vmem, size = 0x100000, scoped, tag = 'input window, operand 4, single buffered']
    #allocation11 [shape = 'u8[8192]{0}', space=vmem, size = 0x2000, scoped, tag = 'output window, operand 0']
    %10 = vsyncpa [#allocation3], 0
    %s11 = scalar_lea.sflag [#allocation3], 1
    %12 = vsyncpa %s11, 0
    %13 = vsyncpa [#allocation6], 0
    %s14 = scalar_lea.sflag [#allocation6], 1
    %15 = vsyncpa %s14, 0
    %16 = vsyncpa [#allocation9], 0
    %17 = vsyncpa [#allocation4], 0
    %s18 = scalar_lea.sflag [#allocation4], 1
    %19 = vsyncpa %s18, 0
    loop: start=0, step=1, limit=4
    $region2: #{tpu_custom_call.1} parent=1 // loop_pre_header
      _
    $region3: #{tpu_custom_call.1} parent=1 // loop_header
      %s21 = sphi 0, %s25
      %p22 = scmp.ge.s32.totalorder %s21, 4
      %s28 = sphi 0, %s40
      %s29 = sphi 0, %s36
      %s30 = sphi 0, %s28
      %s31 = sphi 0, %s29
      %s32 = sphi 0, %s30
      %s33 = sphi 0, %s31
      %s45 = sphi 0, %s47
      %s48 = sphi 0, %s45
      %s49 = sphi 0, %s48
      %s65 = sphi 0, %s49
      %s73 = sphi 0, %s75
      %s76 = sphi 0, %s73
      %s77 = sphi 0, %s76
      %s93 = sphi 0, %s77
      %s101 = sphi 0, %s103
      %s104 = sphi 0, %s101
      %s105 = sphi 0, %s104
      %s121 = sphi 0, %s105
      %s125 = sphi 0, %s125
      %s127 = sphi 0, %s125
      %s128 = sphi 0, %s127
      %s142 = sphi 0, %s128
      %s146 = sphi 0, %s146
      %s148 = sphi 0, %s146
      %s149 = sphi 0, %s148
      %s163 = sphi 0, %s149
      %s171 = sphi 0, %s173
      %s174 = sphi 0, %s171
      %s175 = sphi 0, %s174
      %s191 = sphi 0, %s175
    $region4: #{tpu_custom_call.1} parent=1 // loop_header_branch
      %24 = sbr.rel (%p22) target = $region8
    $region5: #{tpu_custom_call.1} parent=1 // loop_body
      %s26 = ssub.s32 %s21, 1
      %s27 = ssub.s32 %s21, 2
      %s34 = sadd.s32 1, %s29
      %p35 = scmp.ge.s32.totalorder %s34, 1
      %s36 = scalar_select %p35, 0, %s34
      %s37 = sadd.s32 1, %s28
      %s38 = scalar_select %p35, %s37, %s28
      %p39 = scmp.ge.s32.totalorder %s38, 2
      %s40 = scalar_select %p39, 0, %s38
      %s41 = ssub.s32 %s28, %s40
      %s42 = ssub.s32 %s29, %s36
      %s43 = sor.u32 %s41, %s42
      %p44 = scmp.eq.s32.totalorder %s43, 0
      %s46 = sadd.s32 %s45, 1
      %s47 = scalar_select %p44, %s45, %s46
      %p50 = pneg %p44
      %p51 = scmp.eq.s32.totalorder %s21, 1
      %p52 = por %p50, %p51
      %p53 = scmp.ne.s32.totalorder %s45, %s48
      %p54 = scmp.eq.s32.totalorder %s21, 0
      %p55 = por %p53, %p54
      %p56 = scmp.ne.s32.totalorder %s45, %s48
      %p57 = scmp.eq.s32.totalorder %s26, 1
      %p58 = por %p56, %p57
      %p59 = scmp.ne.s32.totalorder %s48, %s49
      %p60 = scmp.eq.s32.totalorder %s26, 0
      %p61 = por %p59, %p60
      %p62 = scmp.ne.s32.totalorder %s48, %s49
      %p63 = scmp.eq.s32.totalorder %s27, 1
      %p64 = por %p62, %p63
      %p66 = scmp.ne.s32.totalorder %s49, %s65
      %p67 = scmp.eq.s32.totalorder %s27, 0
      %p68 = por %p66, %p67
      %s69 = ssub.s32 %s28, %s40
      %s70 = ssub.s32 %s29, %s36
      %s71 = sor.u32 %s69, %s70
      %p72 = scmp.eq.s32.totalorder %s71, 0
      %s74 = sadd.s32 %s73, 1
      %s75 = scalar_select %p72, %s73, %s74
      %p78 = pneg %p72
      %p79 = scmp.eq.s32.totalorder %s21, 1
      %p80 = por %p78, %p79
      %p81 = scmp.ne.s32.totalorder %s73, %s76
      %p82 = scmp.eq.s32.totalorder %s21, 0
      %p83 = por %p81, %p82
      %p84 = scmp.ne.s32.totalorder %s73, %s76
      %p85 = scmp.eq.s32.totalorder %s26, 1
      %p86 = por %p84, %p85
      %p87 = scmp.ne.s32.totalorder %s76, %s77
      %p88 = scmp.eq.s32.totalorder %s26, 0
      %p89 = por %p87, %p88
      %p90 = scmp.ne.s32.totalorder %s76, %s77
      %p91 = scmp.eq.s32.totalorder %s27, 1
      %p92 = por %p90, %p91
      %p94 = scmp.ne.s32.totalorder %s77, %s93
      %p95 = scmp.eq.s32.totalorder %s27, 0
      %p96 = por %p94, %p95
      %s97 = ssub.s32 %s28, %s40
      %s98 = ssub.s32 %s29, %s36
      %s99 = sor.u32 %s97, %s98
      %p100 = scmp.eq.s32.totalorder %s99, 0
      %s102 = sadd.s32 %s101, 1
      %s103 = scalar_select %p100, %s101, %s102
      %p106 = pneg %p100
      %p107 = scmp.eq.s32.totalorder %s21, 1
      %p108 = por %p106, %p107
      %p109 = scmp.ne.s32.totalorder %s101, %s104
      %p110 = scmp.eq.s32.totalorder %s21, 0
      %p111 = por %p109, %p110
      %p112 = scmp.ne.s32.totalorder %s101, %s104
      %p113 = scmp.eq.s32.totalorder %s26, 1
      %p114 = por %p112, %p113
      %p115 = scmp.ne.s32.totalorder %s104, %s105
      %p116 = scmp.eq.s32.totalorder %s26, 0
      %p117 = por %p115, %p116
      %p118 = scmp.ne.s32.totalorder %s104, %s105
      %p119 = scmp.eq.s32.totalorder %s27, 1
      %p120 = por %p118, %p119
      %p122 = scmp.ne.s32.totalorder %s105, %s121
      %p123 = scmp.eq.s32.totalorder %s27, 0
      %p124 = por %p122, %p123
      %s126 = sadd.s32 %s125, 1
      %p129 = scmp.eq.s32.totalorder %s21, 1
      %p130 = scmp.ne.s32.totalorder %s125, %s127
      %p131 = scmp.eq.s32.totalorder %s21, 0
      %p132 = por %p130, %p131
      %p133 = scmp.ne.s32.totalorder %s125, %s127
      %p134 = scmp.eq.s32.totalorder %s26, 1
      %p135 = por %p133, %p134
      %p136 = scmp.ne.s32.totalorder %s127, %s128
      %p137 = scmp.eq.s32.totalorder %s26, 0
      %p138 = por %p136, %p137
      %p139 = scmp.ne.s32.totalorder %s127, %s128
      %p140 = scmp.eq.s32.totalorder %s27, 1
      %p141 = por %p139, %p140
      %p143 = scmp.ne.s32.totalorder %s128, %s142
      %p144 = scmp.eq.s32.totalorder %s27, 0
      %p145 = por %p143, %p144
      %s147 = sadd.s32 %s146, 1
      %p150 = scmp.eq.s32.totalorder %s21, 1
      %p151 = scmp.ne.s32.totalorder %s146, %s148
      %p152 = scmp.eq.s32.totalorder %s21, 0
      %p153 = por %p151, %p152
      %p154 = scmp.ne.s32.totalorder %s146, %s148
      %p155 = scmp.eq.s32.totalorder %s26, 1
      %p156 = por %p154, %p155
      %p157 = scmp.ne.s32.totalorder %s148, %s149
      %p158 = scmp.eq.s32.totalorder %s26, 0
      %p159 = por %p157, %p158
      %p160 = scmp.ne.s32.totalorder %s148, %s149
      %p161 = scmp.eq.s32.totalorder %s27, 1
      %p162 = por %p160, %p161
      %p164 = scmp.ne.s32.totalorder %s149, %s163
      %p165 = scmp.eq.s32.totalorder %s27, 0
      %p166 = por %p164, %p165
      %s167 = ssub.s32 %s28, %s40
      %s168 = ssub.s32 %s29, %s36
      %s169 = sor.u32 %s167, %s168
      %p170 = scmp.eq.s32.totalorder %s169, 0
      %s172 = sadd.s32 %s171, 1
      %s173 = scalar_select %p170, %s171, %s172
      %p176 = pneg %p170
      %p177 = scmp.eq.s32.totalorder %s21, 1
      %p178 = por %p176, %p177
      %p179 = scmp.ne.s32.totalorder %s171, %s174
      %p180 = scmp.eq.s32.totalorder %s21, 0
      %p181 = por %p179, %p180
      %p182 = scmp.ne.s32.totalorder %s171, %s174
      %p183 = scmp.eq.s32.totalorder %s26, 1
      %p184 = por %p182, %p183
      %p185 = scmp.ne.s32.totalorder %s174, %s175
      %p186 = scmp.eq.s32.totalorder %s26, 0
      %p187 = por %p185, %p186
      %p188 = scmp.ne.s32.totalorder %s174, %s175
      %p189 = scmp.eq.s32.totalorder %s27, 1
      %p190 = por %p188, %p189
      %p192 = scmp.ne.s32.totalorder %s175, %s191
      %p193 = scmp.eq.s32.totalorder %s27, 0
      %p194 = por %p192, %p193
      %p195 = scmp.le.s32.totalorder 1, %s21
      %p196 = scmp.lt.s32.totalorder %s21, 3
      %p197 = pnand %p195, %p196
      %p198 = pneg %p197
      // Predicated region
      $region9: #{tpu_custom_call.1} parent=5 // pred_check
        _
      $region10: #{tpu_custom_call.1} parent=5 // pred_check_branch
        %200 = sbr.rel (%p197) target = $region12
      $region11: #{tpu_custom_call.1} parent=5 // pred_region
        %s201 = ssub.s32 %s21, 1
        // Predicated region
        $region13: #{tpu_custom_call.1} parent=11 // pred_check
          %p202 = pneg %p138
        $region14: #{tpu_custom_call.1} parent=11 // pred_check_branch
          %204 = sbr.rel (%p202) target = $region16
        $region15: #{tpu_custom_call.1} parent=11 // pred_region
          %s206 = ssub.s32 2048, 2048
          %207 = vsyncadd [#allocation9], %s206
          %s208 = sshll.u32 [#allocation8], 4
          %s209 = int_to_ptr.vmem [resolvable:$true] %s208
          %214 = dma.hbm_to_vmem [thread:$0]  %s3, 2048, %s209, [#allocation9], 256, 256, 16
        $region16: #{tpu_custom_call.1} parent=11 // pred_fallthru
          _
        // Predicated region
        $region17: #{tpu_custom_call.1} parent=11 // pred_check
          %p215 = pneg %p159
        $region18: #{tpu_custom_call.1} parent=11 // pred_check_branch
          %217 = sbr.rel (%p215) target = $region20
        $region19: #{tpu_custom_call.1} parent=11 // pred_region
          %s219 = ssub.s32 32768, 32768
          %220 = vsyncadd [#allocation9], %s219
          %s221 = sshll.u32 [#allocation10], 4
          %s222 = int_to_ptr.vmem [resolvable:$true] %s221
          %227 = dma.hbm_to_vmem [thread:$0]  %s4, 32768, %s222, [#allocation9], 256, 256, 16
        $region20: #{tpu_custom_call.1} parent=11 // pred_fallthru
          _
      $region12: #{tpu_custom_call.1} parent=5 // pred_fallthru
        _
      %p228 = scmp.lt.s32.totalorder %s21, 2
      // Predicated region
      $region21: #{tpu_custom_call.1} parent=5 // pred_check
        %p229 = pneg %p228
      $region22: #{tpu_custom_call.1} parent=5 // pred_check_branch
        %231 = sbr.rel (%p229) target = $region24
      $region23: #{tpu_custom_call.1} parent=5 // pred_region
        // Predicated region
        $region25: #{tpu_custom_call.1} parent=23 // pred_check
          %p232 = pneg %p55
        $region26: #{tpu_custom_call.1} parent=23 // pred_check_branch
          %234 = sbr.rel (%p232) target = $region28
        $region27: #{tpu_custom_call.1} parent=23 // pred_region
          %s235 = sand.u32 %s45, 1
          %s236 = scalar_lea.sflag [#allocation3], %s235
          %s237 = sand.u32 %s45, 1
          %s238 = smul.addr %s237, 4
          %s239 = scalar_lea.vmem [#allocation2], %s238
          %s241 = ssub.s32 64, 64
          %242 = vsyncadd %s236, %s241
          %s243 = sadd.s32 %s29, %s28
          %s244 = smul.addr %s243, 64
          %s245 = scalar_lea.hbm %s0, %s244
          %s247 = sshll.u32 %s239, 4
          %s248 = int_to_ptr.vmem [resolvable:$true] %s247
          %250 = dma.hbm_to_vmem [thread:$0]  %s245, 64, %s248, %s236
        $region28: #{tpu_custom_call.1} parent=23 // pred_fallthru
          _
        // Predicated region
        $region29: #{tpu_custom_call.1} parent=23 // pred_check
          %p251 = pneg %p83
        $region30: #{tpu_custom_call.1} parent=23 // pred_check_branch
          %253 = sbr.rel (%p251) target = $region32
        $region31: #{tpu_custom_call.1} parent=23 // pred_region
          %s254 = sand.u32 %s21, 1
          %s255 = scalar_lea.sflag [#allocation6], %s254
          %s256 = sand.u32 %s73, 1
          %s257 = smul.addr %s256, 8
          %s258 = scalar_lea.vmem [#allocation5], %s257
          %s260 = ssub.s32 128, 128
          %261 = vsyncadd %s255, %s260
          %s262 = smul.addr %s29, 2
          %s263 = smul.addr %s28, 2
          %s264 = sadd.s32 %s262, %s263
          %s265 = smul.addr %s264, 64
          %s266 = scalar_lea.hbm %s1, %s265
          %s268 = sshll.u32 %s258, 4
          %s269 = int_to_ptr.vmem [resolvable:$true] %s268
          %271 = dma.hbm_to_vmem [thread:$0]  %s266, 128, %s269, %s255
        $region32: #{tpu_custom_call.1} parent=23 // pred_fallthru
          _
        // Predicated region
        $region33: #{tpu_custom_call.1} parent=23 // pred_check
          %p272 = pneg %p111
        $region34: #{tpu_custom_call.1} parent=23 // pred_check_branch
          %274 = sbr.rel (%p272) target = $region36
        $region35: #{tpu_custom_call.1} parent=23 // pred_region
          %s275 = sand.u32 %s21, 1
          %s276 = scalar_lea.sflag [#allocation6], %s275
          %s277 = sand.u32 %s101, 1
          %s278 = smul.addr %s277, 32
          %s279 = scalar_lea.vmem [#allocation7], %s278
          %s281 = ssub.s32 512, 512
          %282 = vsyncadd %s276, %s281
          %s283 = smul.addr %s29, 8
          %s284 = smul.addr %s28, 8
          %s285 = sadd.s32 %s283, %s284
          %s286 = smul.addr %s285, 64
          %s287 = scalar_lea.hbm %s2, %s286
          %s289 = sshll.u32 %s279, 4
          %s290 = int_to_ptr.vmem [resolvable:$true] %s289
          %292 = dma.hbm_to_vmem [thread:$0]  %s287, 512, %s290, %s276
        $region36: #{tpu_custom_call.1} parent=23 // pred_fallthru
          _
      $region24: #{tpu_custom_call.1} parent=5 // pred_fallthru
        _
      %p293 = scmp.le.s32.totalorder 1, %s21
      %p294 = scmp.lt.s32.totalorder %s21, 3
      %p295 = pnand %p293, %p294
      %p296 = pneg %p295
      // Predicated region
      $region37: #{tpu_custom_call.1} parent=5 // pred_check
        _
      $region38: #{tpu_custom_call.1} parent=5 // pred_check_branch
        %298 = sbr.rel (%p295) target = $region40
      $region39: #{tpu_custom_call.1} parent=5 // pred_region
        %s299 = ssub.s32 %s21, 1
        %s300 = sand.u32 %s48, 1
        %s301 = scalar_lea.sflag [#allocation3], %s300
        %s302 = sand.u32 %s48, 1
        %s303 = smul.addr %s302, 4
        %s304 = scalar_lea.vmem [#allocation2], %s303
        // Predicated region
        $region41: #{tpu_custom_call.1} parent=39 // pred_check
          %p305 = pneg %p61
        $region42: #{tpu_custom_call.1} parent=39 // pred_check_branch
          %307 = sbr.rel (%p305) target = $region44
        $region43: #{tpu_custom_call.1} parent=39 // pred_region
          %308 = dma.done %s301, 64
        $region44: #{tpu_custom_call.1} parent=39 // pred_fallthru
          _
        %s309 = sand.u32 %s26, 1
        %s310 = scalar_lea.sflag [#allocation6], %s309
        %s311 = sand.u32 %s76, 1
        %s312 = smul.addr %s311, 8
        %s313 = scalar_lea.vmem [#allocation5], %s312
        // Predicated region
        $region45: #{tpu_custom_call.1} parent=39 // pred_check
          %p314 = pneg %p89
        $region46: #{tpu_custom_call.1} parent=39 // pred_check_branch
          %316 = sbr.rel (%p314) target = $region48
        $region47: #{tpu_custom_call.1} parent=39 // pred_region
          %317 = dma.done %s310, 128
        $region48: #{tpu_custom_call.1} parent=39 // pred_fallthru
          _
        %s318 = sand.u32 %s26, 1
        %s319 = scalar_lea.sflag [#allocation6], %s318
        %s320 = sand.u32 %s104, 1
        %s321 = smul.addr %s320, 32
        %s322 = scalar_lea.vmem [#allocation7], %s321
        // Predicated region
        $region49: #{tpu_custom_call.1} parent=39 // pred_check
          %p323 = pneg %p117
        $region50: #{tpu_custom_call.1} parent=39 // pred_check_branch
          %325 = sbr.rel (%p323) target = $region52
        $region51: #{tpu_custom_call.1} parent=39 // pred_region
          %326 = dma.done %s319, 512
        $region52: #{tpu_custom_call.1} parent=39 // pred_fallthru
          _
        // Predicated region
        $region53: #{tpu_custom_call.1} parent=39 // pred_check
          %p327 = pneg %p138
        $region54: #{tpu_custom_call.1} parent=39 // pred_check_branch
          %329 = sbr.rel (%p327) target = $region56
        $region55: #{tpu_custom_call.1} parent=39 // pred_region
          %330 = dma.done [#allocation9], 2048
        $region56: #{tpu_custom_call.1} parent=39 // pred_fallthru
          _
        // Predicated region
        $region57: #{tpu_custom_call.1} parent=39 // pred_check
          %p331 = pneg %p159
        $region58: #{tpu_custom_call.1} parent=39 // pred_check_branch
          %333 = sbr.rel (%p331) target = $region60
        $region59: #{tpu_custom_call.1} parent=39 // pred_region
          %334 = dma.done [#allocation9], 32768
        $region60: #{tpu_custom_call.1} parent=39 // pred_fallthru
          _
        %s335 = sand.u32 %s48, 1
        %s336 = scalar_lea.sflag [#allocation3], %s335
        %s337 = sand.u32 %s48, 1
        %s338 = smul.addr %s337, 4
        %s339 = scalar_lea.vmem [#allocation2], %s338
        %p340 = pneg %p61
        %p341 = pneg %p58
        %s342 = sand.u32 %s26, 1
        %s343 = scalar_lea.sflag [#allocation6], %s342
        %s344 = sand.u32 %s76, 1
        %s345 = smul.addr %s344, 8
        %s346 = scalar_lea.vmem [#allocation5], %s345
        %p347 = pneg %p89
        %p348 = pneg %p86
        %s349 = sand.u32 %s26, 1
        %s350 = scalar_lea.sflag [#allocation6], %s349
        %s351 = sand.u32 %s104, 1
        %s352 = smul.addr %s351, 32
        %s353 = scalar_lea.vmem [#allocation7], %s352
        %p354 = pneg %p117
        %p355 = pneg %p114
        %p356 = pneg %p138
        %p357 = pneg %p135
        %p358 = pneg %p159
        %p359 = pneg %p156
        %p360 = pneg %p187
        %p361 = pneg %p184
        %s362 = sand.u32 %s174, 1
        %s363 = scalar_lea.sflag [#allocation4], %s362
        %s364 = sand.u32 %s174, 1
        %s365 = smul.addr %s364, 8
        %s366 = scalar_lea.vmem [#allocation11], %s365
        %v367 = vld [vmem:[#allocation8] sm:$0xff]
        %v368 = vld [vmem:[#allocation8 + $0x8] sm:$0xff]
        %v369 = vld [vmem:[#allocation8 + $0x10] sm:$0xff]
        %v370 = vld [vmem:[#allocation8 + $0x18] sm:$0xff]
        %v371 = vld [vmem:[#allocation8 + $0x20] sm:$0xff]
        %v372 = vld [vmem:[#allocation8 + $0x28] sm:$0xff]
        %v373 = vld [vmem:[#allocation8 + $0x30] sm:$0xff]
        %v374 = vld [vmem:[#allocation8 + $0x38] sm:$0xff]
        %v375 = vld [vmem:[#allocation8 + $0x40] sm:$0xff]
        %v376 = vld [vmem:[#allocation8 + $0x48] sm:$0xff]
        %v377 = vld [vmem:[#allocation8 + $0x50] sm:$0xff]
        %v378 = vld [vmem:[#allocation8 + $0x58] sm:$0xff]
        %v379 = vld [vmem:[#allocation8 + $0x60] sm:$0xff]
        %v380 = vld [vmem:[#allocation8 + $0x68] sm:$0xff]
        %v381 = vld [vmem:[#allocation8 + $0x70] sm:$0xff]
        %v382 = vld [vmem:[#allocation8 + $0x78] sm:$0xff]
        %v383 = vld [vmem:[#allocation10] sm:$0xff]
        %v384 = vld [vmem:[#allocation10 + $0x8] sm:$0xff]
        %v385 = vld [vmem:[#allocation10 + $0x10] sm:$0xff]
        %v386 = vld [vmem:[#allocation10 + $0x18] sm:$0xff]
        %v387 = vld [vmem:[#allocation10 + $0x20] sm:$0xff]
        %v388 = vld [vmem:[#allocation10 + $0x28] sm:$0xff]
        %v389 = vld [vmem:[#allocation10 + $0x30] sm:$0xff]
        %v390 = vld [vmem:[#allocation10 + $0x38] sm:$0xff]
        %v391 = vld [vmem:[#allocation10 + $0x40] sm:$0xff]
        %v392 = vld [vmem:[#allocation10 + $0x48] sm:$0xff]
        %v393 = vld [vmem:[#allocation10 + $0x50] sm:$0xff]
        %v394 = vld [vmem:[#allocation10 + $0x58] sm:$0xff]
        %v395 = vld [vmem:[#allocation10 + $0x60] sm:$0xff]
        %v396 = vld [vmem:[#allocation10 + $0x68] sm:$0xff]
        %v397 = vld [vmem:[#allocation10 + $0x70] sm:$0xff]
        %v398 = vld [vmem:[#allocation10 + $0x78] sm:$0xff]
        %v399 = vld [vmem:[#allocation10 + $0x80] sm:$0xff]
        %v400 = vld [vmem:[#allocation10 + $0x88] sm:$0xff]
        %v401 = vld [vmem:[#allocation10 + $0x90] sm:$0xff]
        %v402 = vld [vmem:[#allocation10 + $0x98] sm:$0xff]
        %v403 = vld [vmem:[#allocation10 + $0xa0] sm:$0xff]
        %v404 = vld [vmem:[#allocation10 + $0xa8] sm:$0xff]
        %v405 = vld [vmem:[#allocation10 + $0xb0] sm:$0xff]
        %v406 = vld [vmem:[#allocation10 + $0xb8] sm:$0xff]
        %v407 = vld [vmem:[#allocation10 + $0xc0] sm:$0xff]
        %v408 = vld [vmem:[#allocation10 + $0xc8] sm:$0xff]
        %v409 = vld [vmem:[#allocation10 + $0xd0] sm:$0xff]
        %v410 = vld [vmem:[#allocation10 + $0xd8] sm:$0xff]
        %v411 = vld [vmem:[#allocation10 + $0xe0] sm:$0xff]
        %v412 = vld [vmem:[#allocation10 + $0xe8] sm:$0xff]
        %v413 = vld [vmem:[#allocation10 + $0xf0] sm:$0xff]
        %v414 = vld [vmem:[#allocation10 + $0xf8] sm:$0xff]
        %v415 = vld [vmem:[#allocation10 + $0x100] sm:$0xff]
        %v416 = vld [vmem:[#allocation10 + $0x108] sm:$0xff]
        %v417 = vld [vmem:[#allocation10 + $0x110] sm:$0xff]
        %v418 = vld [vmem:[#allocation10 + $0x118] sm:$0xff]
        %v419 = vld [vmem:[#allocation10 + $0x120] sm:$0xff]
        %v420 = vld [vmem:[#allocation10 + $0x128] sm:$0xff]
        %v421 = vld [vmem:[#allocation10 + $0x130] sm:$0xff]
        %v422 = vld [vmem:[#allocation10 + $0x138] sm:$0xff]
        %v423 = vld [vmem:[#allocation10 + $0x140] sm:$0xff]
        %v424 = vld [vmem:[#allocation10 + $0x148] sm:$0xff]
        %v425 = vld [vmem:[#allocation10 + $0x150] sm:$0xff]
        %v426 = vld [vmem:[#allocation10 + $0x158] sm:$0xff]
        %v427 = vld [vmem:[#allocation10 + $0x160] sm:$0xff]
        %v428 = vld [vmem:[#allocation10 + $0x168] sm:$0xff]
        %v429 = vld [vmem:[#allocation10 + $0x170] sm:$0xff]
        %v430 = vld [vmem:[#allocation10 + $0x178] sm:$0xff]
        %v431 = vld [vmem:[#allocation10 + $0x180] sm:$0xff]
        %v432 = vld [vmem:[#allocation10 + $0x188] sm:$0xff]
        %v433 = vld [vmem:[#allocation10 + $0x190] sm:$0xff]
        %v434 = vld [vmem:[#allocation10 + $0x198] sm:$0xff]
        %v435 = vld [vmem:[#allocation10 + $0x1a0] sm:$0xff]
        %v436 = vld [vmem:[#allocation10 + $0x1a8] sm:$0xff]
        %v437 = vld [vmem:[#allocation10 + $0x1b0] sm:$0xff]
        %v438 = vld [vmem:[#allocation10 + $0x1b8] sm:$0xff]
        %v439 = vld [vmem:[#allocation10 + $0x1c0] sm:$0xff]
        %v440 = vld [vmem:[#allocation10 + $0x1c8] sm:$0xff]
        %v441 = vld [vmem:[#allocation10 + $0x1d0] sm:$0xff]
        %v442 = vld [vmem:[#allocation10 + $0x1d8] sm:$0xff]
        %v443 = vld [vmem:[#allocation10 + $0x1e0] sm:$0xff]
        %v444 = vld [vmem:[#allocation10 + $0x1e8] sm:$0xff]
        %v445 = vld [vmem:[#allocation10 + $0x1f0] sm:$0xff]
        %v446 = vld [vmem:[#allocation10 + $0x1f8] sm:$0xff]
        %v447 = vld [vmem:[#allocation10 + $0x200] sm:$0xff]
        %v448 = vld [vmem:[#allocation10 + $0x208] sm:$0xff]
        %v449 = vld [vmem:[#allocation10 + $0x210] sm:$0xff]
        %v450 = vld [vmem:[#allocation10 + $0x218] sm:$0xff]
        %v451 = vld [vmem:[#allocation10 + $0x220] sm:$0xff]
        %v452 = vld [vmem:[#allocation10 + $0x228] sm:$0xff]
        %v453 = vld [vmem:[#allocation10 + $0x230] sm:$0xff]
        %v454 = vld [vmem:[#allocation10 + $0x238] sm:$0xff]
        %v455 = vld [vmem:[#allocation10 + $0x240] sm:$0xff]
        %v456 = vld [vmem:[#allocation10 + $0x248] sm:$0xff]
        %v457 = vld [vmem:[#allocation10 + $0x250] sm:$0xff]
        %v458 = vld [vmem:[#allocation10 + $0x258] sm:$0xff]
        %v459 = vld [vmem:[#allocation10 + $0x260] sm:$0xff]
        %v460 = vld [vmem:[#allocation10 + $0x268] sm:$0xff]
        %v461 = vld [vmem:[#allocation10 + $0x270] sm:$0xff]
        %v462 = vld [vmem:[#allocation10 + $0x278] sm:$0xff]
        %v463 = vld [vmem:[#allocation10 + $0x280] sm:$0xff]
        %v464 = vld [vmem:[#allocation10 + $0x288] sm:$0xff]
        %v465 = vld [vmem:[#allocation10 + $0x290] sm:$0xff]
        %v466 = vld [vmem:[#allocation10 + $0x298] sm:$0xff]
        %v467 = vld [vmem:[#allocation10 + $0x2a0] sm:$0xff]
        %v468 = vld [vmem:[#allocation10 + $0x2a8] sm:$0xff]
        %v469 = vld [vmem:[#allocation10 + $0x2b0] sm:$0xff]
        %v470 = vld [vmem:[#allocation10 + $0x2b8] sm:$0xff]
        %v471 = vld [vmem:[#allocation10 + $0x2c0] sm:$0xff]
        %v472 = vld [vmem:[#allocation10 + $0x2c8] sm:$0xff]
        %v473 = vld [vmem:[#allocation10 + $0x2d0] sm:$0xff]
        %v474 = vld [vmem:[#allocation10 + $0x2d8] sm:$0xff]
        %v475 = vld [vmem:[#allocation10 + $0x2e0] sm:$0xff]
        %v476 = vld [vmem:[#allocation10 + $0x2e8] sm:$0xff]
        %v477 = vld [vmem:[#allocation10 + $0x2f0] sm:$0xff]
        %v478 = vld [vmem:[#allocation10 + $0x2f8] sm:$0xff]
        %v479 = vld [vmem:[#allocation10 + $0x300] sm:$0xff]
        %v480 = vld [vmem:[#allocation10 + $0x308] sm:$0xff]
        %v481 = vld [vmem:[#allocation10 + $0x310] sm:$0xff]
        %v482 = vld [vmem:[#allocation10 + $0x318] sm:$0xff]
        %v483 = vld [vmem:[#allocation10 + $0x320] sm:$0xff]
        %v484 = vld [vmem:[#allocation10 + $0x328] sm:$0xff]
        %v485 = vld [vmem:[#allocation10 + $0x330] sm:$0xff]
        %v486 = vld [vmem:[#allocation10 + $0x338] sm:$0xff]
        %v487 = vld [vmem:[#allocation10 + $0x340] sm:$0xff]
        %v488 = vld [vmem:[#allocation10 + $0x348] sm:$0xff]
        %v489 = vld [vmem:[#allocation10 + $0x350] sm:$0xff]
        %v490 = vld [vmem:[#allocation10 + $0x358] sm:$0xff]
        %v491 = vld [vmem:[#allocation10 + $0x360] sm:$0xff]
        %v492 = vld [vmem:[#allocation10 + $0x368] sm:$0xff]
        %v493 = vld [vmem:[#allocation10 + $0x370] sm:$0xff]
        %v494 = vld [vmem:[#allocation10 + $0x378] sm:$0xff]
        %v495 = vld [vmem:[#allocation10 + $0x380] sm:$0xff]
        %v496 = vld [vmem:[#allocation10 + $0x388] sm:$0xff]
        %v497 = vld [vmem:[#allocation10 + $0x390] sm:$0xff]
        %v498 = vld [vmem:[#allocation10 + $0x398] sm:$0xff]
        %v499 = vld [vmem:[#allocation10 + $0x3a0] sm:$0xff]
        %v500 = vld [vmem:[#allocation10 + $0x3a8] sm:$0xff]
        %v501 = vld [vmem:[#allocation10 + $0x3b0] sm:$0xff]
        %v502 = vld [vmem:[#allocation10 + $0x3b8] sm:$0xff]
        %v503 = vld [vmem:[#allocation10 + $0x3c0] sm:$0xff]
        %v504 = vld [vmem:[#allocation10 + $0x3c8] sm:$0xff]
        %v505 = vld [vmem:[#allocation10 + $0x3d0] sm:$0xff]
        %v506 = vld [vmem:[#allocation10 + $0x3d8] sm:$0xff]
        %v507 = vld [vmem:[#allocation10 + $0x3e0] sm:$0xff]
        %v508 = vld [vmem:[#allocation10 + $0x3e8] sm:$0xff]
        %v509 = vld [vmem:[#allocation10 + $0x3f0] sm:$0xff]
        %v510 = vld [vmem:[#allocation10 + $0x3f8] sm:$0xff]
        %v511 = vld [vmem:[#allocation10 + $0x400] sm:$0xff]
        %v512 = vld [vmem:[#allocation10 + $0x408] sm:$0xff]
        %v513 = vld [vmem:[#allocation10 + $0x410] sm:$0xff]
        %v514 = vld [vmem:[#allocation10 + $0x418] sm:$0xff]
        %v515 = vld [vmem:[#allocation10 + $0x420] sm:$0xff]
        %v516 = vld [vmem:[#allocation10 + $0x428] sm:$0xff]
        %v517 = vld [vmem:[#allocation10 + $0x430] sm:$0xff]
        %v518 = vld [vmem:[#allocation10 + $0x438] sm:$0xff]
        %v519 = vld [vmem:[#allocation10 + $0x440] sm:$0xff]
        %v520 = vld [vmem:[#allocation10 + $0x448] sm:$0xff]
        %v521 = vld [vmem:[#allocation10 + $0x450] sm:$0xff]
        %v522 = vld [vmem:[#allocation10 + $0x458] sm:$0xff]
        %v523 = vld [vmem:[#allocation10 + $0x460] sm:$0xff]
        %v524 = vld [vmem:[#allocation10 + $0x468] sm:$0xff]
        %v525 = vld [vmem:[#allocation10 + $0x470] sm:$0xff]
        %v526 = vld [vmem:[#allocation10 + $0x478] sm:$0xff]
        %v527 = vld [vmem:[#allocation10 + $0x480] sm:$0xff]
        %v528 = vld [vmem:[#allocation10 + $0x488] sm:$0xff]
        %v529 = vld [vmem:[#allocation10 + $0x490] sm:$0xff]
        %v530 = vld [vmem:[#allocation10 + $0x498] sm:$0xff]
        %v531 = vld [vmem:[#allocation10 + $0x4a0] sm:$0xff]
        %v532 = vld [vmem:[#allocation10 + $0x4a8] sm:$0xff]
        %v533 = vld [vmem:[#allocation10 + $0x4b0] sm:$0xff]
        %v534 = vld [vmem:[#allocation10 + $0x4b8] sm:$0xff]
        %v535 = vld [vmem:[#allocation10 + $0x4c0] sm:$0xff]
        %v536 = vld [vmem:[#allocation10 + $0x4c8] sm:$0xff]
        %v537 = vld [vmem:[#allocation10 + $0x4d0] sm:$0xff]
        %v538 = vld [vmem:[#allocation10 + $0x4d8] sm:$0xff]
        %v539 = vld [vmem:[#allocation10 + $0x4e0] sm:$0xff]
        %v540 = vld [vmem:[#allocation10 + $0x4e8] sm:$0xff]
        %v541 = vld [vmem:[#allocation10 + $0x4f0] sm:$0xff]
        %v542 = vld [vmem:[#allocation10 + $0x4f8] sm:$0xff]
        %v543 = vld [vmem:[#allocation10 + $0x500] sm:$0xff]
        %v544 = vld [vmem:[#allocation10 + $0x508] sm:$0xff]
        %v545 = vld [vmem:[#allocation10 + $0x510] sm:$0xff]
        %v546 = vld [vmem:[#allocation10 + $0x518] sm:$0xff]
        %v547 = vld [vmem:[#allocation10 + $0x520] sm:$0xff]
        %v548 = vld [vmem:[#allocation10 + $0x528] sm:$0xff]
        %v549 = vld [vmem:[#allocation10 + $0x530] sm:$0xff]
        %v550 = vld [vmem:[#allocation10 + $0x538] sm:$0xff]
        %v551 = vld [vmem:[#allocation10 + $0x540] sm:$0xff]
        %v552 = vld [vmem:[#allocation10 + $0x548] sm:$0xff]
        %v553 = vld [vmem:[#allocation10 + $0x550] sm:$0xff]
        %v554 = vld [vmem:[#allocation10 + $0x558] sm:$0xff]
        %v555 = vld [vmem:[#allocation10 + $0x560] sm:$0xff]
        %v556 = vld [vmem:[#allocation10 + $0x568] sm:$0xff]
        %v557 = vld [vmem:[#allocation10 + $0x570] sm:$0xff]
        %v558 = vld [vmem:[#allocation10 + $0x578] sm:$0xff]
        %v559 = vld [vmem:[#allocation10 + $0x580] sm:$0xff]
        %v560 = vld [vmem:[#allocation10 + $0x588] sm:$0xff]
        %v561 = vld [vmem:[#allocation10 + $0x590] sm:$0xff]
        %v562 = vld [vmem:[#allocation10 + $0x598] sm:$0xff]
        %v563 = vld [vmem:[#allocation10 + $0x5a0] sm:$0xff]
        %v564 = vld [vmem:[#allocation10 + $0x5a8] sm:$0xff]
        %v565 = vld [vmem:[#allocation10 + $0x5b0] sm:$0xff]
        %v566 = vld [vmem:[#allocation10 + $0x5b8] sm:$0xff]
        %v567 = vld [vmem:[#allocation10 + $0x5c0] sm:$0xff]
        %v568 = vld [vmem:[#allocation10 + $0x5c8] sm:$0xff]
        %v569 = vld [vmem:[#allocation10 + $0x5d0] sm:$0xff]
        %v570 = vld [vmem:[#allocation10 + $0x5d8] sm:$0xff]
        %v571 = vld [vmem:[#allocation10 + $0x5e0] sm:$0xff]
        %v572 = vld [vmem:[#allocation10 + $0x5e8] sm:$0xff]
        %v573 = vld [vmem:[#allocation10 + $0x5f0] sm:$0xff]
        %v574 = vld [vmem:[#allocation10 + $0x5f8] sm:$0xff]
        %v575 = vld [vmem:[#allocation10 + $0x600] sm:$0xff]
        %v576 = vld [vmem:[#allocation10 + $0x608] sm:$0xff]
        %v577 = vld [vmem:[#allocation10 + $0x610] sm:$0xff]
        %v578 = vld [vmem:[#allocation10 + $0x618] sm:$0xff]
        %v579 = vld [vmem:[#allocation10 + $0x620] sm:$0xff]
        %v580 = vld [vmem:[#allocation10 + $0x628] sm:$0xff]
        %v581 = vld [vmem:[#allocation10 + $0x630] sm:$0xff]
        %v582 = vld [vmem:[#allocation10 + $0x638] sm:$0xff]
        %v583 = vld [vmem:[#allocation10 + $0x640] sm:$0xff]
        %v584 = vld [vmem:[#allocation10 + $0x648] sm:$0xff]
        %v585 = vld [vmem:[#allocation10 + $0x650] sm:$0xff]
        %v586 = vld [vmem:[#allocation10 + $0x658] sm:$0xff]
        %v587 = vld [vmem:[#allocation10 + $0x660] sm:$0xff]
        %v588 = vld [vmem:[#allocation10 + $0x668] sm:$0xff]
        %v589 = vld [vmem:[#allocation10 + $0x670] sm:$0xff]
        %v590 = vld [vmem:[#allocation10 + $0x678] sm:$0xff]
        %v591 = vld [vmem:[#allocation10 + $0x680] sm:$0xff]
        %v592 = vld [vmem:[#allocation10 + $0x688] sm:$0xff]
        %v593 = vld [vmem:[#allocation10 + $0x690] sm:$0xff]
        %v594 = vld [vmem:[#allocation10 + $0x698] sm:$0xff]
        %v595 = vld [vmem:[#allocation10 + $0x6a0] sm:$0xff]
        %v596 = vld [vmem:[#allocation10 + $0x6a8] sm:$0xff]
        %v597 = vld [vmem:[#allocation10 + $0x6b0] sm:$0xff]
        %v598 = vld [vmem:[#allocation10 + $0x6b8] sm:$0xff]
        %v599 = vld [vmem:[#allocation10 + $0x6c0] sm:$0xff]
        %v600 = vld [vmem:[#allocation10 + $0x6c8] sm:$0xff]
        %v601 = vld [vmem:[#allocation10 + $0x6d0] sm:$0xff]
        %v602 = vld [vmem:[#allocation10 + $0x6d8] sm:$0xff]
        %v603 = vld [vmem:[#allocation10 + $0x6e0] sm:$0xff]
        %v604 = vld [vmem:[#allocation10 + $0x6e8] sm:$0xff]
        %v605 = vld [vmem:[#allocation10 + $0x6f0] sm:$0xff]
        %v606 = vld [vmem:[#allocation10 + $0x6f8] sm:$0xff]
        %v607 = vld [vmem:[#allocation10 + $0x700] sm:$0xff]
        %v608 = vld [vmem:[#allocation10 + $0x708] sm:$0xff]
        %v609 = vld [vmem:[#allocation10 + $0x710] sm:$0xff]
        %v610 = vld [vmem:[#allocation10 + $0x718] sm:$0xff]
        %v611 = vld [vmem:[#allocation10 + $0x720] sm:$0xff]
        %v612 = vld [vmem:[#allocation10 + $0x728] sm:$0xff]
        %v613 = vld [vmem:[#allocation10 + $0x730] sm:$0xff]
        %v614 = vld [vmem:[#allocation10 + $0x738] sm:$0xff]
        %v615 = vld [vmem:[#allocation10 + $0x740] sm:$0xff]
        %v616 = vld [vmem:[#allocation10 + $0x748] sm:$0xff]
        %v617 = vld [vmem:[#allocation10 + $0x750] sm:$0xff]
        %v618 = vld [vmem:[#allocation10 + $0x758] sm:$0xff]
        %v619 = vld [vmem:[#allocation10 + $0x760] sm:$0xff]
        %v620 = vld [vmem:[#allocation10 + $0x768] sm:$0xff]
        %v621 = vld [vmem:[#allocation10 + $0x770] sm:$0xff]
        %v622 = vld [vmem:[#allocation10 + $0x778] sm:$0xff]
        %v623 = vld [vmem:[#allocation10 + $0x780] sm:$0xff]
        %v624 = vld [vmem:[#allocation10 + $0x788] sm:$0xff]
        %v625 = vld [vmem:[#allocation10 + $0x790] sm:$0xff]
        %v626 = vld [vmem:[#allocation10 + $0x798] sm:$0xff]
        %v627 = vld [vmem:[#allocation10 + $0x7a0] sm:$0xff]
        %v628 = vld [vmem:[#allocation10 + $0x7a8] sm:$0xff]
        %v629 = vld [vmem:[#allocation10 + $0x7b0] sm:$0xff]
        %v630 = vld [vmem:[#allocation10 + $0x7b8] sm:$0xff]
        %v631 = vld [vmem:[#allocation10 + $0x7c0] sm:$0xff]
        %v632 = vld [vmem:[#allocation10 + $0x7c8] sm:$0xff]
        %v633 = vld [vmem:[#allocation10 + $0x7d0] sm:$0xff]
        %v634 = vld [vmem:[#allocation10 + $0x7d8] sm:$0xff]
        %v635 = vld [vmem:[#allocation10 + $0x7e0] sm:$0xff]
        %v636 = vld [vmem:[#allocation10 + $0x7e8] sm:$0xff]
        %v637 = vld [vmem:[#allocation10 + $0x7f0] sm:$0xff]
        %v638 = vld [vmem:[#allocation10 + $0x7f8] sm:$0xff]
        %v639 = vld [vmem:[%s304] sm:$0xf]
        %vm640 = vcmask 519168
        %v641 = vsel %vm640, %v639, 0.0
        %642 = vadd.xlane.f32.xlu0 %v641
        %v643 = vpop.xlane.xlu0 %642
        %v644 = vrcp.pop 64.0
        %v645 = vmul.f32 %v643, %v644
        %v646 = vxor.u32 %v645, 2147483648
        %v647 = vmul.f32 %v646, 1.442695
        %v648 = vpow.pop %v647
        %v649 = vadd.f32 %v648, 1.0
        %v650 = vrcp.pop %v649
        %v651 = vmul.f32 1.0, %v650
        %v652 = vld [vmem:[%s313] sm:$0xff]
        %v653 = vld [vmem:[%s322] sm:$0xff]
        %v654 = vld [vmem:[%s322 + $0x8] sm:$0xff]
        %v655 = vld [vmem:[%s322 + $0x10] sm:$0xff]
        %v656 = vld [vmem:[%s322 + $0x18] sm:$0xff]
        %v661 = vcombine.high %v653, %v653
        %v662 = vcombine.high %v654, %v654
        %v663 = vcombine.high %v655, %v655
        %v664 = vcombine.high %v656, %v656
        %v669 = vand.u32 %v384, 4294901760
        %670 = vmatprep.subr.mxu0 %v669
        %v671 = vand.u32 %v383, 4294901760
        %672 = vmatpush1.msra.mxu0 %v671
        %v673 = vand.u32 %v386, 4294901760
        %674 = vmatprep.subr.mxu0 %v673
        %v675 = vand.u32 %v385, 4294901760
        %676 = vmatpush1.msra.mxu0 %v675
        %v677 = vand.u32 %v388, 4294901760
        %678 = vmatprep.subr.mxu0 %v677
        %v679 = vand.u32 %v387, 4294901760
        %680 = vmatpush1.msra.mxu0 %v679
        %v681 = vand.u32 %v390, 4294901760
        %682 = vmatprep.subr.mxu0 %v681
        %v683 = vand.u32 %v389, 4294901760
        %684 = vmatpush1.msra.mxu0 %v683
        %v685 = vand.u32 %v392, 4294901760
        %686 = vmatprep.subr.mxu0 %v685
        %v687 = vand.u32 %v391, 4294901760
        %688 = vmatpush1.msra.mxu0 %v687
        %v689 = vand.u32 %v394, 4294901760
        %690 = vmatprep.subr.mxu0 %v689
        %v691 = vand.u32 %v393, 4294901760
        %692 = vmatpush1.msra.mxu0 %v691
        %v693 = vand.u32 %v396, 4294901760
        %694 = vmatprep.subr.mxu0 %v693
        %v695 = vand.u32 %v395, 4294901760
        %696 = vmatpush1.msra.mxu0 %v695
        %v697 = vand.u32 %v398, 4294901760
        %698 = vmatprep.subr.mxu0 %v697
        %v699 = vand.u32 %v397, 4294901760
        %700 = vmatpush1.msra.mxu0 %v699
        %v701 = vand.u32 %v400, 4294901760
        %702 = vmatprep.subr.mxu0 %v701
        %v703 = vand.u32 %v399, 4294901760
        %704 = vmatpush1.msra.mxu0 %v703
        %v705 = vand.u32 %v402, 4294901760
        %706 = vmatprep.subr.mxu0 %v705
        %v707 = vand.u32 %v401, 4294901760
        %708 = vmatpush1.msra.mxu0 %v707
        %v709 = vand.u32 %v404, 4294901760
        %710 = vmatprep.subr.mxu0 %v709
        %v711 = vand.u32 %v403, 4294901760
        %712 = vmatpush1.msra.mxu0 %v711
        %v713 = vand.u32 %v406, 4294901760
        %714 = vmatprep.subr.mxu0 %v713
        %v715 = vand.u32 %v405, 4294901760
        %716 = vmatpush1.msra.mxu0 %v715
        %v717 = vand.u32 %v408, 4294901760
        %718 = vmatprep.subr.mxu0 %v717
        %v719 = vand.u32 %v407, 4294901760
        %720 = vmatpush1.msra.mxu0 %v719
        %v721 = vand.u32 %v410, 4294901760
        %722 = vmatprep.subr.mxu0 %v721
        %v723 = vand.u32 %v409, 4294901760
        %724 = vmatpush1.msra.mxu0 %v723
        %v725 = vand.u32 %v412, 4294901760
        %726 = vmatprep.subr.mxu0 %v725
        %v727 = vand.u32 %v411, 4294901760
        %728 = vmatpush1.msra.mxu0 %v727
        %v729 = vand.u32 %v414, 4294901760
        %730 = vmatprep.subr.mxu0 %v729
        %v731 = vand.u32 %v413, 4294901760
        %732 = vmatpush1.msra.mxu0 %v731
        %v733 = vand.u32 %v416, 4294901760
        %734 = vmatprep.subr.mxu0 %v733
        %v735 = vand.u32 %v415, 4294901760
        %736 = vmatpush1.msra.mxu0 %v735
        %v737 = vand.u32 %v418, 4294901760
        %738 = vmatprep.subr.mxu0 %v737
        %v739 = vand.u32 %v417, 4294901760
        %740 = vmatpush1.msra.mxu0 %v739
        %v741 = vand.u32 %v420, 4294901760
        %742 = vmatprep.subr.mxu0 %v741
        %v743 = vand.u32 %v419, 4294901760
        %744 = vmatpush1.msra.mxu0 %v743
        %v745 = vand.u32 %v422, 4294901760
        %746 = vmatprep.subr.mxu0 %v745
        %v747 = vand.u32 %v421, 4294901760
        %748 = vmatpush1.msra.mxu0 %v747
        %v749 = vand.u32 %v424, 4294901760
        %750 = vmatprep.subr.mxu0 %v749
        %v751 = vand.u32 %v423, 4294901760
        %752 = vmatpush1.msra.mxu0 %v751
        %v753 = vand.u32 %v426, 4294901760
        %754 = vmatprep.subr.mxu0 %v753
        %v755 = vand.u32 %v425, 4294901760
        %756 = vmatpush1.msra.mxu0 %v755
        %v757 = vand.u32 %v428, 4294901760
        %758 = vmatprep.subr.mxu0 %v757
        %v759 = vand.u32 %v427, 4294901760
        %760 = vmatpush1.msra.mxu0 %v759
        %v761 = vand.u32 %v430, 4294901760
        %762 = vmatprep.subr.mxu0 %v761
        %v763 = vand.u32 %v429, 4294901760
        %764 = vmatpush1.msra.mxu0 %v763
        %v765 = vand.u32 %v432, 4294901760
        %766 = vmatprep.subr.mxu0 %v765
        %v767 = vand.u32 %v431, 4294901760
        %768 = vmatpush1.msra.mxu0 %v767
        %v769 = vand.u32 %v434, 4294901760
        %770 = vmatprep.subr.mxu0 %v769
        %v771 = vand.u32 %v433, 4294901760
        %772 = vmatpush1.msra.mxu0 %v771
        %v773 = vand.u32 %v436, 4294901760
        %774 = vmatprep.subr.mxu0 %v773
        %v775 = vand.u32 %v435, 4294901760
        %776 = vmatpush1.msra.mxu0 %v775
        %v777 = vand.u32 %v438, 4294901760
        %778 = vmatprep.subr.mxu0 %v777
        %v779 = vand.u32 %v437, 4294901760
        %780 = vmatpush1.msra.mxu0 %v779
        %v781 = vand.u32 %v440, 4294901760
        %782 = vmatprep.subr.mxu0 %v781
        %v783 = vand.u32 %v439, 4294901760
        %784 = vmatpush1.msra.mxu0 %v783
        %v785 = vand.u32 %v442, 4294901760
        %786 = vmatprep.subr.mxu0 %v785
        %v787 = vand.u32 %v441, 4294901760
        %788 = vmatpush1.msra.mxu0 %v787
        %v789 = vand.u32 %v444, 4294901760
        %790 = vmatprep.subr.mxu0 %v789
        %v791 = vand.u32 %v443, 4294901760
        %792 = vmatpush1.msra.mxu0 %v791
        %v793 = vand.u32 %v446, 4294901760
        %794 = vmatprep.subr.mxu0 %v793
        %v795 = vand.u32 %v445, 4294901760
        %796 = vmatpush1.msra.mxu0 %v795
        %v797 = vand.u32 %v661, 4294901760
        %v798 = vsub.f32 %v661, %v797
        %v799 = vand.u32 %v798, 4294901760
        %v800 = vsub.f32 %v798, %v799
        %v801 = vand.u32 %v800, 4294901760
        %802 = vmatprep.mubr.f32.mxu0 %v801
        %v803 = vand.u32 %v653, 4294901760
        %v804 = vsub.f32 %v653, %v803
        %v805 = vand.u32 %v804, 4294901760
        %v806 = vsub.f32 %v804, %v805
        %v807 = vand.u32 %v806, 4294901760
        %808 = vmatmul.mubr.f32.gmra.mrb[0].mxu0 %v807
        %v809 = vpop.f32.mrb[0].mxu0
        %v810 = vadd.f32 0.0, %v809
        %v811 = vpop.f32.mrb[0].mxu0
        %v812 = vadd.f32 0.0, %v811
        %813 = vdwg.mxu0
        %v814 = vand.u32 %v384, 4294901760
        %v815 = vsub.f32 %v384, %v814
        %v816 = vand.u32 %v815, 4294901760
        %v817 = vsub.f32 %v815, %v816
        %v818 = vand.u32 %v817, 4294901760
        %819 = vmatprep.subr.mxu0 %v818
        %v820 = vand.u32 %v383, 4294901760
        %v821 = vsub.f32 %v383, %v820
        %v822 = vand.u32 %v821, 4294901760
        %v823 = vsub.f32 %v821, %v822
        %v824 = vand.u32 %v823, 4294901760
        %825 = vmatpush1.msra.mxu0 %v824
        %v826 = vand.u32 %v386, 4294901760
        %v827 = vsub.f32 %v386, %v826
        %v828 = vand.u32 %v827, 4294901760
        %v829 = vsub.f32 %v827, %v828
        %v830 = vand.u32 %v829, 4294901760
        %831 = vmatprep.subr.mxu0 %v830
        %v832 = vand.u32 %v385, 4294901760
        %v833 = vsub.f32 %v385, %v832
        %v834 = vand.u32 %v833, 4294901760
        %v835 = vsub.f32 %v833, %v834
        %v836 = vand.u32 %v835, 4294901760
        %837 = vmatpush1.msra.mxu0 %v836
        %v838 = vand.u32 %v388, 4294901760
        %v839 = vsub.f32 %v388, %v838
        %v840 = vand.u32 %v839, 4294901760
        %v841 = vsub.f32 %v839, %v840
        %v842 = vand.u32 %v841, 4294901760
        %843 = vmatprep.subr.mxu0 %v842
        %v844 = vand.u32 %v387, 4294901760
        %v845 = vsub.f32 %v387, %v844
        %v846 = vand.u32 %v845, 4294901760
        %v847 = vsub.f32 %v845, %v846
        %v848 = vand.u32 %v847, 4294901760
        %849 = vmatpush1.msra.mxu0 %v848
        %v850 = vand.u32 %v390, 4294901760
        %v851 = vsub.f32 %v390, %v850
        %v852 = vand.u32 %v851, 4294901760
        %v853 = vsub.f32 %v851, %v852
        %v854 = vand.u32 %v853, 4294901760
        %855 = vmatprep.subr.mxu0 %v854
        %v856 = vand.u32 %v389, 4294901760
        %v857 = vsub.f32 %v389, %v856
        %v858 = vand.u32 %v857, 4294901760
        %v859 = vsub.f32 %v857, %v858
        %v860 = vand.u32 %v859, 4294901760
        %861 = vmatpush1.msra.mxu0 %v860
        %v862 = vand.u32 %v392, 4294901760
        %v863 = vsub.f32 %v392, %v862
        %v864 = vand.u32 %v863, 4294901760
        %v865 = vsub.f32 %v863, %v864
        %v866 = vand.u32 %v865, 4294901760
        %867 = vmatprep.subr.mxu0 %v866
        %v868 = vand.u32 %v391, 4294901760
        %v869 = vsub.f32 %v391, %v868
        %v870 = vand.u32 %v869, 4294901760
        %v871 = vsub.f32 %v869, %v870
        %v872 = vand.u32 %v871, 4294901760
        %873 = vmatpush1.msra.mxu0 %v872
        %v874 = vand.u32 %v394, 4294901760
        %v875 = vsub.f32 %v394, %v874
        %v876 = vand.u32 %v875, 4294901760
        %v877 = vsub.f32 %v875, %v876
        %v878 = vand.u32 %v877, 4294901760
        %879 = vmatprep.subr.mxu0 %v878
        %v880 = vand.u32 %v393, 4294901760
        %v881 = vsub.f32 %v393, %v880
        %v882 = vand.u32 %v881, 4294901760
        %v883 = vsub.f32 %v881, %v882
        %v884 = vand.u32 %v883, 4294901760
        %885 = vmatpush1.msra.mxu0 %v884
        %v886 = vand.u32 %v396, 4294901760
        %v887 = vsub.f32 %v396, %v886
        %v888 = vand.u32 %v887, 4294901760
        %v889 = vsub.f32 %v887, %v888
        %v890 = vand.u32 %v889, 4294901760
        %891 = vmatprep.subr.mxu0 %v890
        %v892 = vand.u32 %v395, 4294901760
        %v893 = vsub.f32 %v395, %v892
        %v894 = vand.u32 %v893, 4294901760
        %v895 = vsub.f32 %v893, %v894
        %v896 = vand.u32 %v895, 4294901760
        %897 = vmatpush1.msra.mxu0 %v896
        %v898 = vand.u32 %v398, 4294901760
        %v899 = vsub.f32 %v398, %v898
        %v900 = vand.u32 %v899, 4294901760
        %v901 = vsub.f32 %v899, %v900
        %v902 = vand.u32 %v901, 4294901760
        %903 = vmatprep.subr.mxu0 %v902
        %v904 = vand.u32 %v397, 4294901760
        %v905 = vsub.f32 %v397, %v904
        %v906 = vand.u32 %v905, 4294901760
        %v907 = vsub.f32 %v905, %v906
        %v908 = vand.u32 %v907, 4294901760
        %909 = vmatpush1.msra.mxu0 %v908
        %v910 = vand.u32 %v400, 4294901760
        %v911 = vsub.f32 %v400, %v910
        %v912 = vand.u32 %v911, 4294901760
        %v913 = vsub.f32 %v911, %v912
        %v914 = vand.u32 %v913, 4294901760
        %915 = vmatprep.subr.mxu0 %v914
        %v916 = vand.u32 %v399, 4294901760
        %v917 = vsub.f32 %v399, %v916
        %v918 = vand.u32 %v917, 4294901760
        %v919 = vsub.f32 %v917, %v918
        %v920 = vand.u32 %v919, 4294901760
        %921 = vmatpush1.msra.mxu0 %v920
        %v922 = vand.u32 %v402, 4294901760
        %v923 = vsub.f32 %v402, %v922
        %v924 = vand.u32 %v923, 4294901760
        %v925 = vsub.f32 %v923, %v924
        %v926 = vand.u32 %v925, 4294901760
        %927 = vmatprep.subr.mxu0 %v926
        %v928 = vand.u32 %v401, 4294901760
        %v929 = vsub.f32 %v401, %v928
        %v930 = vand.u32 %v929, 4294901760
        %v931 = vsub.f32 %v929, %v930
        %v932 = vand.u32 %v931, 4294901760
        %933 = vmatpush1.msra.mxu0 %v932
        %v934 = vand.u32 %v404, 4294901760
        %v935 = vsub.f32 %v404, %v934
        %v936 = vand.u32 %v935, 4294901760
        %v937 = vsub.f32 %v935, %v936
        %v938 = vand.u32 %v937, 4294901760
        %939 = vmatprep.subr.mxu0 %v938
        %v940 = vand.u32 %v403, 4294901760
        %v941 = vsub.f32 %v403, %v940
        %v942 = vand.u32 %v941, 4294901760
        %v943 = vsub.f32 %v941, %v942
        %v944 = vand.u32 %v943, 4294901760
        %945 = vmatpush1.msra.mxu0 %v944
        %v946 = vand.u32 %v406, 4294901760
        %v947 = vsub.f32 %v406, %v946
        %v948 = vand.u32 %v947, 4294901760
        %v949 = vsub.f32 %v947, %v948
        %v950 = vand.u32 %v949, 4294901760
        %951 = vmatprep.subr.mxu0 %v950
        %v952 = vand.u32 %v405, 4294901760
        %v953 = vsub.f32 %v405, %v952
        %v954 = vand.u32 %v953, 4294901760
        %v955 = vsub.f32 %v953, %v954
        %v956 = vand.u32 %v955, 4294901760
        %957 = vmatpush1.msra.mxu0 %v956
        %v958 = vand.u32 %v408, 4294901760
        %v959 = vsub.f32 %v408, %v958
        %v960 = vand.u32 %v959, 4294901760
        %v961 = vsub.f32 %v959, %v960
        %v962 = vand.u32 %v961, 4294901760
        %963 = vmatprep.subr.mxu0 %v962
        %v964 = vand.u32 %v407, 4294901760
        %v965 = vsub.f32 %v407, %v964
        %v966 = vand.u32 %v965, 4294901760
        %v967 = vsub.f32 %v965, %v966
        %v968 = vand.u32 %v967, 4294901760
        %969 = vmatpush1.msra.mxu0 %v968
        %v970 = vand.u32 %v410, 4294901760
        %v971 = vsub.f32 %v410, %v970
        %v972 = vand.u32 %v971, 4294901760
        %v973 = vsub.f32 %v971, %v972
        %v974 = vand.u32 %v973, 4294901760
        %975 = vmatprep.subr.mxu0 %v974
        %v976 = vand.u32 %v409, 4294901760
        %v977 = vsub.f32 %v409, %v976
        %v978 = vand.u32 %v977, 4294901760
        %v979 = vsub.f32 %v977, %v978
        %v980 = vand.u32 %v979, 4294901760
        %981 = vmatpush1.msra.mxu0 %v980
        %v982 = vand.u32 %v412, 4294901760
        %v983 = vsub.f32 %v412, %v982
        %v984 = vand.u32 %v983, 4294901760
        %v985 = vsub.f32 %v983, %v984
        %v986 = vand.u32 %v985, 4294901760
        %987 = vmatprep.subr.mxu0 %v986
        %v988 = vand.u32 %v411, 4294901760
        %v989 = vsub.f32 %v411, %v988
        %v990 = vand.u32 %v989, 4294901760
        %v991 = vsub.f32 %v989, %v990
        %v992 = vand.u32 %v991, 4294901760
        %993 = vmatpush1.msra.mxu0 %v992
        %v994 = vand.u32 %v414, 4294901760
        %v995 = vsub.f32 %v414, %v994
        %v996 = vand.u32 %v995, 4294901760
        %v997 = vsub.f32 %v995, %v996
        %v998 = vand.u32 %v997, 4294901760
        %999 = vmatprep.subr.mxu0 %v998
        %v1000 = vand.u32 %v413, 4294901760
        %v1001 = vsub.f32 %v413, %v1000
        %v1002 = vand.u32 %v1001, 4294901760
        %v1003 = vsub.f32 %v1001, %v1002
        %v1004 = vand.u32 %v1003, 4294901760
        %1005 = vmatpush1.msra.mxu0 %v1004
        %v1006 = vand.u32 %v416, 4294901760
        %v1007 = vsub.f32 %v416, %v1006
        %v1008 = vand.u32 %v1007, 4294901760
        %v1009 = vsub.f32 %v1007, %v1008
        %v1010 = vand.u32 %v1009, 4294901760
        %1011 = vmatprep.subr.mxu0 %v1010
        %v1012 = vand.u32 %v415, 4294901760
        %v1013 = vsub.f32 %v415, %v1012
        %v1014 = vand.u32 %v1013, 4294901760
        %v1015 = vsub.f32 %v1013, %v1014
        %v1016 = vand.u32 %v1015, 4294901760
        %1017 = vmatpush1.msra.mxu0 %v1016
        %v1018 = vand.u32 %v418, 4294901760
        %v1019 = vsub.f32 %v418, %v1018
        %v1020 = vand.u32 %v1019, 4294901760
        %v1021 = vsub.f32 %v1019, %v1020
        %v1022 = vand.u32 %v1021, 4294901760
        %1023 = vmatprep.subr.mxu0 %v1022
        %v1024 = vand.u32 %v417, 4294901760
        %v1025 = vsub.f32 %v417, %v1024
        %v1026 = vand.u32 %v1025, 4294901760
        %v1027 = vsub.f32 %v1025, %v1026
        %v1028 = vand.u32 %v1027, 4294901760
        %1029 = vmatpush1.msra.mxu0 %v1028
        %v1030 = vand.u32 %v420, 4294901760
        %v1031 = vsub.f32 %v420, %v1030
        %v1032 = vand.u32 %v1031, 4294901760
        %v1033 = vsub.f32 %v1031, %v1032
        %v1034 = vand.u32 %v1033, 4294901760
        %1035 = vmatprep.subr.mxu0 %v1034
        %v1036 = vand.u32 %v419, 4294901760
        %v1037 = vsub.f32 %v419, %v1036
        %v1038 = vand.u32 %v1037, 4294901760
        %v1039 = vsub.f32 %v1037, %v1038
        %v1040 = vand.u32 %v1039, 4294901760
        %1041 = vmatpush1.msra.mxu0 %v1040
        %v1042 = vand.u32 %v422, 4294901760
        %v1043 = vsub.f32 %v422, %v1042
        %v1044 = vand.u32 %v1043, 4294901760
        %v1045 = vsub.f32 %v1043, %v1044
        %v1046 = vand.u32 %v1045, 4294901760
        %1047 = vmatprep.subr.mxu0 %v1046
        %v1048 = vand.u32 %v421, 4294901760
        %v1049 = vsub.f32 %v421, %v1048
        %v1050 = vand.u32 %v1049, 4294901760
        %v1051 = vsub.f32 %v1049, %v1050
        %v1052 = vand.u32 %v1051, 4294901760
        %1053 = vmatpush1.msra.mxu0 %v1052
        %v1054 = vand.u32 %v424, 4294901760
        %v1055 = vsub.f32 %v424, %v1054
        %v1056 = vand.u32 %v1055, 4294901760
        %v1057 = vsub.f32 %v1055, %v1056
        %v1058 = vand.u32 %v1057, 4294901760
        %1059 = vmatprep.subr.mxu0 %v1058
        %v1060 = vand.u32 %v423, 4294901760
        %v1061 = vsub.f32 %v423, %v1060
        %v1062 = vand.u32 %v1061, 4294901760
        %v1063 = vsub.f32 %v1061, %v1062
        %v1064 = vand.u32 %v1063, 4294901760
        %1065 = vmatpush1.msra.mxu0 %v1064
        %v1066 = vand.u32 %v426, 4294901760
        %v1067 = vsub.f32 %v426, %v1066
        %v1068 = vand.u32 %v1067, 4294901760
        %v1069 = vsub.f32 %v1067, %v1068
        %v1070 = vand.u32 %v1069, 4294901760
        %1071 = vmatprep.subr.mxu0 %v1070
        %v1072 = vand.u32 %v425, 4294901760
        %v1073 = vsub.f32 %v425, %v1072
        %v1074 = vand.u32 %v1073, 4294901760
        %v1075 = vsub.f32 %v1073, %v1074
        %v1076 = vand.u32 %v1075, 4294901760
        %1077 = vmatpush1.msra.mxu0 %v1076
        %v1078 = vand.u32 %v428, 4294901760
        %v1079 = vsub.f32 %v428, %v1078
        %v1080 = vand.u32 %v1079, 4294901760
        %v1081 = vsub.f32 %v1079, %v1080
        %v1082 = vand.u32 %v1081, 4294901760
        %1083 = vmatprep.subr.mxu0 %v1082
        %v1084 = vand.u32 %v427, 4294901760
        %v1085 = vsub.f32 %v427, %v1084
        %v1086 = vand.u32 %v1085, 4294901760
        %v1087 = vsub.f32 %v1085, %v1086
        %v1088 = vand.u32 %v1087, 4294901760
        %1089 = vmatpush1.msra.mxu0 %v1088
        %v1090 = vand.u32 %v430, 4294901760
        %v1091 = vsub.f32 %v430, %v1090
        %v1092 = vand.u32 %v1091, 4294901760
        %v1093 = vsub.f32 %v1091, %v1092
        %v1094 = vand.u32 %v1093, 4294901760
        %1095 = vmatprep.subr.mxu0 %v1094
        %v1096 = vand.u32 %v429, 4294901760
        %v1097 = vsub.f32 %v429, %v1096
        %v1098 = vand.u32 %v1097, 4294901760
        %v1099 = vsub.f32 %v1097, %v1098
        %v1100 = vand.u32 %v1099, 4294901760
        %1101 = vmatpush1.msra.mxu0 %v1100
        %v1102 = vand.u32 %v432, 4294901760
        %v1103 = vsub.f32 %v432, %v1102
        %v1104 = vand.u32 %v1103, 4294901760
        %v1105 = vsub.f32 %v1103, %v1104
        %v1106 = vand.u32 %v1105, 4294901760
        %1107 = vmatprep.subr.mxu0 %v1106
        %v1108 = vand.u32 %v431, 4294901760
        %v1109 = vsub.f32 %v431, %v1108
        %v1110 = vand.u32 %v1109, 4294901760
        %v1111 = vsub.f32 %v1109, %v1110
        %v1112 = vand.u32 %v1111, 4294901760
        %1113 = vmatpush1.msra.mxu0 %v1112
        %v1114 = vand.u32 %v434, 4294901760
        %v1115 = vsub.f32 %v434, %v1114
        %v1116 = vand.u32 %v1115, 4294901760
        %v1117 = vsub.f32 %v1115, %v1116
        %v1118 = vand.u32 %v1117, 4294901760
        %1119 = vmatprep.subr.mxu0 %v1118
        %v1120 = vand.u32 %v433, 4294901760
        %v1121 = vsub.f32 %v433, %v1120
        %v1122 = vand.u32 %v1121, 4294901760
        %v1123 = vsub.f32 %v1121, %v1122
        %v1124 = vand.u32 %v1123, 4294901760
        %1125 = vmatpush1.msra.mxu0 %v1124
        %v1126 = vand.u32 %v436, 4294901760
        %v1127 = vsub.f32 %v436, %v1126
        %v1128 = vand.u32 %v1127, 4294901760
        %v1129 = vsub.f32 %v1127, %v1128
        %v1130 = vand.u32 %v1129, 4294901760
        %1131 = vmatprep.subr.mxu0 %v1130
        %v1132 = vand.u32 %v435, 4294901760
        %v1133 = vsub.f32 %v435, %v1132
        %v1134 = vand.u32 %v1133, 4294901760
        %v1135 = vsub.f32 %v1133, %v1134
        %v1136 = vand.u32 %v1135, 4294901760
        %1137 = vmatpush1.msra.mxu0 %v1136
        %v1138 = vand.u32 %v438, 4294901760
        %v1139 = vsub.f32 %v438, %v1138
        %v1140 = vand.u32 %v1139, 4294901760
        %v1141 = vsub.f32 %v1139, %v1140
        %v1142 = vand.u32 %v1141, 4294901760
        %1143 = vmatprep.subr.mxu0 %v1142
        %v1144 = vand.u32 %v437, 4294901760
        %v1145 = vsub.f32 %v437, %v1144
        %v1146 = vand.u32 %v1145, 4294901760
        %v1147 = vsub.f32 %v1145, %v1146
        %v1148 = vand.u32 %v1147, 4294901760
        %1149 = vmatpush1.msra.mxu0 %v1148
        %v1150 = vand.u32 %v440, 4294901760
        %v1151 = vsub.f32 %v440, %v1150
        %v1152 = vand.u32 %v1151, 4294901760
        %v1153 = vsub.f32 %v1151, %v1152
        %v1154 = vand.u32 %v1153, 4294901760
        %1155 = vmatprep.subr.mxu0 %v1154
        %v1156 = vand.u32 %v439, 4294901760
        %v1157 = vsub.f32 %v439, %v1156
        %v1158 = vand.u32 %v1157, 4294901760
        %v1159 = vsub.f32 %v1157, %v1158
        %v1160 = vand.u32 %v1159, 4294901760
        %1161 = vmatpush1.msra.mxu0 %v1160
        %v1162 = vand.u32 %v442, 4294901760
        %v1163 = vsub.f32 %v442, %v1162
        %v1164 = vand.u32 %v1163, 4294901760
        %v1165 = vsub.f32 %v1163, %v1164
        %v1166 = vand.u32 %v1165, 4294901760
        %1167 = vmatprep.subr.mxu0 %v1166
        %v1168 = vand.u32 %v441, 4294901760
        %v1169 = vsub.f32 %v441, %v1168
        %v1170 = vand.u32 %v1169, 4294901760
        %v1171 = vsub.f32 %v1169, %v1170
        %v1172 = vand.u32 %v1171, 4294901760
        %1173 = vmatpush1.msra.mxu0 %v1172
        %v1174 = vand.u32 %v444, 4294901760
        %v1175 = vsub.f32 %v444, %v1174
        %v1176 = vand.u32 %v1175, 4294901760
        %v1177 = vsub.f32 %v1175, %v1176
        %v1178 = vand.u32 %v1177, 4294901760
        %1179 = vmatprep.subr.mxu0 %v1178
        %v1180 = vand.u32 %v443, 4294901760
        %v1181 = vsub.f32 %v443, %v1180
        %v1182 = vand.u32 %v1181, 4294901760
        %v1183 = vsub.f32 %v1181, %v1182
        %v1184 = vand.u32 %v1183, 4294901760
        %1185 = vmatpush1.msra.mxu0 %v1184
        %v1186 = vand.u32 %v446, 4294901760
        %v1187 = vsub.f32 %v446, %v1186
        %v1188 = vand.u32 %v1187, 4294901760
        %v1189 = vsub.f32 %v1187, %v1188
        %v1190 = vand.u32 %v1189, 4294901760
        %1191 = vmatprep.subr.mxu0 %v1190
        %v1192 = vand.u32 %v445, 4294901760
        %v1193 = vsub.f32 %v445, %v1192
        %v1194 = vand.u32 %v1193, 4294901760
        %v1195 = vsub.f32 %v1193, %v1194
        %v1196 = vand.u32 %v1195, 4294901760
        %1197 = vmatpush1.msra.mxu0 %v1196
        %v1198 = vand.u32 %v661, 4294901760
        %1199 = vmatprep.mubr.f32.mxu0 %v1198
        %v1200 = vand.u32 %v653, 4294901760
        %1201 = vmatmul.mubr.f32.gmra.mrb[0].mxu0 %v1200
        %v1202 = vpop.f32.mrb[0].mxu0
        %v1203 = vadd.f32 %v810, %v1202
        %v1204 = vpop.f32.mrb[0].mxu0
        %v1205 = vadd.f32 %v812, %v1204
        %1206 = vdwg.mxu0
        %v1207 = vand.u32 %v384, 4294901760
        %v1208 = vsub.f32 %v384, %v1207
        %1209 = vmatprep.subr.mxu0 %v1208
        %v1210 = vand.u32 %v383, 4294901760
        %v1211 = vsub.f32 %v383, %v1210
        %1212 = vmatpush1.msra.mxu0 %v1211
        %v1213 = vand.u32 %v386, 4294901760
        %v1214 = vsub.f32 %v386, %v1213
        %1215 = vmatprep.subr.mxu0 %v1214
        %v1216 = vand.u32 %v385, 4294901760
        %v1217 = vsub.f32 %v385, %v1216
        %1218 = vmatpush1.msra.mxu0 %v1217
        %v1219 = vand.u32 %v388, 4294901760
        %v1220 = vsub.f32 %v388, %v1219
        %1221 = vmatprep.subr.mxu0 %v1220
        %v1222 = vand.u32 %v387, 4294901760
        %v1223 = vsub.f32 %v387, %v1222
        %1224 = vmatpush1.msra.mxu0 %v1223
        %v1225 = vand.u32 %v390, 4294901760
        %v1226 = vsub.f32 %v390, %v1225
        %1227 = vmatprep.subr.mxu0 %v1226
        %v1228 = vand.u32 %v389, 4294901760
        %v1229 = vsub.f32 %v389, %v1228
        %1230 = vmatpush1.msra.mxu0 %v1229
        %v1231 = vand.u32 %v392, 4294901760
        %v1232 = vsub.f32 %v392, %v1231
        %1233 = vmatprep.subr.mxu0 %v1232
        %v1234 = vand.u32 %v391, 4294901760
        %v1235 = vsub.f32 %v391, %v1234
        %1236 = vmatpush1.msra.mxu0 %v1235
        %v1237 = vand.u32 %v394, 4294901760
        %v1238 = vsub.f32 %v394, %v1237
        %1239 = vmatprep.subr.mxu0 %v1238
        %v1240 = vand.u32 %v393, 4294901760
        %v1241 = vsub.f32 %v393, %v1240
        %1242 = vmatpush1.msra.mxu0 %v1241
        %v1243 = vand.u32 %v396, 4294901760
        %v1244 = vsub.f32 %v396, %v1243
        %1245 = vmatprep.subr.mxu0 %v1244
        %v1246 = vand.u32 %v395, 4294901760
        %v1247 = vsub.f32 %v395, %v1246
        %1248 = vmatpush1.msra.mxu0 %v1247
        %v1249 = vand.u32 %v398, 4294901760
        %v1250 = vsub.f32 %v398, %v1249
        %1251 = vmatprep.subr.mxu0 %v1250
        %v1252 = vand.u32 %v397, 4294901760
        %v1253 = vsub.f32 %v397, %v1252
        %1254 = vmatpush1.msra.mxu0 %v1253
        %v1255 = vand.u32 %v400, 4294901760
        %v1256 = vsub.f32 %v400, %v1255
        %1257 = vmatprep.subr.mxu0 %v1256
        %v1258 = vand.u32 %v399, 4294901760
        %v1259 = vsub.f32 %v399, %v1258
        %1260 = vmatpush1.msra.mxu0 %v1259
        %v1261 = vand.u32 %v402, 4294901760
        %v1262 = vsub.f32 %v402, %v1261
        %1263 = vmatprep.subr.mxu0 %v1262
        %v1264 = vand.u32 %v401, 4294901760
        %v1265 = vsub.f32 %v401, %v1264
        %1266 = vmatpush1.msra.mxu0 %v1265
        %v1267 = vand.u32 %v404, 4294901760
        %v1268 = vsub.f32 %v404, %v1267
        %1269 = vmatprep.subr.mxu0 %v1268
        %v1270 = vand.u32 %v403, 4294901760
        %v1271 = vsub.f32 %v403, %v1270
        %1272 = vmatpush1.msra.mxu0 %v1271
        %v1273 = vand.u32 %v406, 4294901760
        %v1274 = vsub.f32 %v406, %v1273
        %1275 = vmatprep.subr.mxu0 %v1274
        %v1276 = vand.u32 %v405, 4294901760
        %v1277 = vsub.f32 %v405, %v1276
        %1278 = vmatpush1.msra.mxu0 %v1277
        %v1279 = vand.u32 %v408, 4294901760
        %v1280 = vsub.f32 %v408, %v1279
        %1281 = vmatprep.subr.mxu0 %v1280
        %v1282 = vand.u32 %v407, 4294901760
        %v1283 = vsub.f32 %v407, %v1282
        %1284 = vmatpush1.msra.mxu0 %v1283
        %v1285 = vand.u32 %v410, 4294901760
        %v1286 = vsub.f32 %v410, %v1285
        %1287 = vmatprep.subr.mxu0 %v1286
        %v1288 = vand.u32 %v409, 4294901760
        %v1289 = vsub.f32 %v409, %v1288
        %1290 = vmatpush1.msra.mxu0 %v1289
        %v1291 = vand.u32 %v412, 4294901760
        %v1292 = vsub.f32 %v412, %v1291
        %1293 = vmatprep.subr.mxu0 %v1292
        %v1294 = vand.u32 %v411, 4294901760
        %v1295 = vsub.f32 %v411, %v1294
        %1296 = vmatpush1.msra.mxu0 %v1295
        %v1297 = vand.u32 %v414, 4294901760
        %v1298 = vsub.f32 %v414, %v1297
        %1299 = vmatprep.subr.mxu0 %v1298
        %v1300 = vand.u32 %v413, 4294901760
        %v1301 = vsub.f32 %v413, %v1300
        %1302 = vmatpush1.msra.mxu0 %v1301
        %v1303 = vand.u32 %v416, 4294901760
        %v1304 = vsub.f32 %v416, %v1303
        %1305 = vmatprep.subr.mxu0 %v1304
        %v1306 = vand.u32 %v415, 4294901760
        %v1307 = vsub.f32 %v415, %v1306
        %1308 = vmatpush1.msra.mxu0 %v1307
        %v1309 = vand.u32 %v418, 4294901760
        %v1310 = vsub.f32 %v418, %v1309
        %1311 = vmatprep.subr.mxu0 %v1310
        %v1312 = vand.u32 %v417, 4294901760
        %v1313 = vsub.f32 %v417, %v1312
        %1314 = vmatpush1.msra.mxu0 %v1313
        %v1315 = vand.u32 %v420, 4294901760
        %v1316 = vsub.f32 %v420, %v1315
        %1317 = vmatprep.subr.mxu0 %v1316
        %v1318 = vand.u32 %v419, 4294901760
        %v1319 = vsub.f32 %v419, %v1318
        %1320 = vmatpush1.msra.mxu0 %v1319
        %v1321 = vand.u32 %v422, 4294901760
        %v1322 = vsub.f32 %v422, %v1321
        %1323 = vmatprep.subr.mxu0 %v1322
        %v1324 = vand.u32 %v421, 4294901760
        %v1325 = vsub.f32 %v421, %v1324
        %1326 = vmatpush1.msra.mxu0 %v1325
        %v1327 = vand.u32 %v424, 4294901760
        %v1328 = vsub.f32 %v424, %v1327
        %1329 = vmatprep.subr.mxu0 %v1328
        %v1330 = vand.u32 %v423, 4294901760
        %v1331 = vsub.f32 %v423, %v1330
        %1332 = vmatpush1.msra.mxu0 %v1331
        %v1333 = vand.u32 %v426, 4294901760
        %v1334 = vsub.f32 %v426, %v1333
        %1335 = vmatprep.subr.mxu0 %v1334
        %v1336 = vand.u32 %v425, 4294901760
        %v1337 = vsub.f32 %v425, %v1336
        %1338 = vmatpush1.msra.mxu0 %v1337
        %v1339 = vand.u32 %v428, 4294901760
        %v1340 = vsub.f32 %v428, %v1339
        %1341 = vmatprep.subr.mxu0 %v1340
        %v1342 = vand.u32 %v427, 4294901760
        %v1343 = vsub.f32 %v427, %v1342
        %1344 = vmatpush1.msra.mxu0 %v1343
        %v1345 = vand.u32 %v430, 4294901760
        %v1346 = vsub.f32 %v430, %v1345
        %1347 = vmatprep.subr.mxu0 %v1346
        %v1348 = vand.u32 %v429, 4294901760
        %v1349 = vsub.f32 %v429, %v1348
        %1350 = vmatpush1.msra.mxu0 %v1349
        %v1351 = vand.u32 %v432, 4294901760
        %v1352 = vsub.f32 %v432, %v1351
        %1353 = vmatprep.subr.mxu0 %v1352
        %v1354 = vand.u32 %v431, 4294901760
        %v1355 = vsub.f32 %v431, %v1354
        %1356 = vmatpush1.msra.mxu0 %v1355
        %v1357 = vand.u32 %v434, 4294901760
        %v1358 = vsub.f32 %v434, %v1357
        %1359 = vmatprep.subr.mxu0 %v1358
        %v1360 = vand.u32 %v433, 4294901760
        %v1361 = vsub.f32 %v433, %v1360
        %1362 = vmatpush1.msra.mxu0 %v1361
        %v1363 = vand.u32 %v436, 4294901760
        %v1364 = vsub.f32 %v436, %v1363
        %1365 = vmatprep.subr.mxu0 %v1364
        %v1366 = vand.u32 %v435, 4294901760
        %v1367 = vsub.f32 %v435, %v1366
        %1368 = vmatpush1.msra.mxu0 %v1367
        %v1369 = vand.u32 %v438, 4294901760
        %v1370 = vsub.f32 %v438, %v1369
        %1371 = vmatprep.subr.mxu0 %v1370
        %v1372 = vand.u32 %v437, 4294901760
        %v1373 = vsub.f32 %v437, %v1372
        %1374 = vmatpush1.msra.mxu0 %v1373
        %v1375 = vand.u32 %v440, 4294901760
        %v1376 = vsub.f32 %v440, %v1375
        %1377 = vmatprep.subr.mxu0 %v1376
        %v1378 = vand.u32 %v439, 4294901760
        %v1379 = vsub.f32 %v439, %v1378
        %1380 = vmatpush1.msra.mxu0 %v1379
        %v1381 = vand.u32 %v442, 4294901760
        %v1382 = vsub.f32 %v442, %v1381
        %1383 = vmatprep.subr.mxu0 %v1382
        %v1384 = vand.u32 %v441, 4294901760
        %v1385 = vsub.f32 %v441, %v1384
        %1386 = vmatpush1.msra.mxu0 %v1385
        %v1387 = vand.u32 %v444, 4294901760
        %v1388 = vsub.f32 %v444, %v1387
        %1389 = vmatprep.subr.mxu0 %v1388
        %v1390 = vand.u32 %v443, 4294901760
        %v1391 = vsub.f32 %v443, %v1390
        %1392 = vmatpush1.msra.mxu0 %v1391
        %v1393 = vand.u32 %v446, 4294901760
        %v1394 = vsub.f32 %v446, %v1393
        %1395 = vmatprep.subr.mxu0 %v1394
        %v1396 = vand.u32 %v445, 4294901760
        %v1397 = vsub.f32 %v445, %v1396
        %1398 = vmatpush1.msra.mxu0 %v1397
        %v1399 = vand.u32 %v661, 4294901760
        %v1400 = vsub.f32 %v661, %v1399
        %1401 = vmatprep.mubr.f32.mxu0 %v1400
        %v1402 = vand.u32 %v653, 4294901760
        %v1403 = vsub.f32 %v653, %v1402
        %1404 = vmatmul.mubr.f32.gmra.mrb[0].mxu0 %v1403
        %v1405 = vpop.f32.mrb[0].mxu0
        %v1406 = vadd.f32 %v1203, %v1405
        %v1407 = vpop.f32.mrb[0].mxu0
        %v1408 = vadd.f32 %v1205, %v1407
        %1409 = vdwg.mxu0
        %v1410 = vand.u32 %v384, 4294901760
        %1411 = vmatprep.subr.mxu0 %v1410
        %v1412 = vand.u32 %v383, 4294901760
        %1413 = vmatpush1.msra.mxu0 %v1412
        %v1414 = vand.u32 %v386, 4294901760
        %1415 = vmatprep.subr.mxu0 %v1414
        %v1416 = vand.u32 %v385, 4294901760
        %1417 = vmatpush1.msra.mxu0 %v1416
        %v1418 = vand.u32 %v388, 4294901760
        %1419 = vmatprep.subr.mxu0 %v1418
        %v1420 = vand.u32 %v387, 4294901760
        %1421 = vmatpush1.msra.mxu0 %v1420
        %v1422 = vand.u32 %v390, 4294901760
        %1423 = vmatprep.subr.mxu0 %v1422
        %v1424 = vand.u32 %v389, 4294901760
        %1425 = vmatpush1.msra.mxu0 %v1424
        %v1426 = vand.u32 %v392, 4294901760
        %1427 = vmatprep.subr.mxu0 %v1426
        %v1428 = vand.u32 %v391, 4294901760
        %1429 = vmatpush1.msra.mxu0 %v1428
        %v1430 = vand.u32 %v394, 4294901760
        %1431 = vmatprep.subr.mxu0 %v1430
        %v1432 = vand.u32 %v393, 4294901760
        %1433 = vmatpush1.msra.mxu0 %v1432
        %v1434 = vand.u32 %v396, 4294901760
        %1435 = vmatprep.subr.mxu0 %v1434
        %v1436 = vand.u32 %v395, 4294901760
        %1437 = vmatpush1.msra.mxu0 %v1436
        %v1438 = vand.u32 %v398, 4294901760
        %1439 = vmatprep.subr.mxu0 %v1438
        %v1440 = vand.u32 %v397, 4294901760
        %1441 = vmatpush1.msra.mxu0 %v1440
        %v1442 = vand.u32 %v400, 4294901760
        %1443 = vmatprep.subr.mxu0 %v1442
        %v1444 = vand.u32 %v399, 4294901760
        %1445 = vmatpush1.msra.mxu0 %v1444
        %v1446 = vand.u32 %v402, 4294901760
        %1447 = vmatprep.subr.mxu0 %v1446
        %v1448 = vand.u32 %v401, 4294901760
        %1449 = vmatpush1.msra.mxu0 %v1448
        %v1450 = vand.u32 %v404, 4294901760
        %1451 = vmatprep.subr.mxu0 %v1450
        %v1452 = vand.u32 %v403, 4294901760
        %1453 = vmatpush1.msra.mxu0 %v1452
        %v1454 = vand.u32 %v406, 4294901760
        %1455 = vmatprep.subr.mxu0 %v1454
        %v1456 = vand.u32 %v405, 4294901760
        %1457 = vmatpush1.msra.mxu0 %v1456
        %v1458 = vand.u32 %v408, 4294901760
        %1459 = vmatprep.subr.mxu0 %v1458
        %v1460 = vand.u32 %v407, 4294901760
        %1461 = vmatpush1.msra.mxu0 %v1460
        %v1462 = vand.u32 %v410, 4294901760
        %1463 = vmatprep.subr.mxu0 %v1462
        %v1464 = vand.u32 %v409, 4294901760
        %1465 = vmatpush1.msra.mxu0 %v1464
        %v1466 = vand.u32 %v412, 4294901760
        %1467 = vmatprep.subr.mxu0 %v1466
        %v1468 = vand.u32 %v411, 4294901760
        %1469 = vmatpush1.msra.mxu0 %v1468
        %v1470 = vand.u32 %v414, 4294901760
        %1471 = vmatprep.subr.mxu0 %v1470
        %v1472 = vand.u32 %v413, 4294901760
        %1473 = vmatpush1.msra.mxu0 %v1472
        %v1474 = vand.u32 %v416, 4294901760
        %1475 = vmatprep.subr.mxu0 %v1474
        %v1476 = vand.u32 %v415, 4294901760
        %1477 = vmatpush1.msra.mxu0 %v1476
        %v1478 = vand.u32 %v418, 4294901760
        %1479 = vmatprep.subr.mxu0 %v1478
        %v1480 = vand.u32 %v417, 4294901760
        %1481 = vmatpush1.msra.mxu0 %v1480
        %v1482 = vand.u32 %v420, 4294901760
        %1483 = vmatprep.subr.mxu0 %v1482
        %v1484 = vand.u32 %v419, 4294901760
        %1485 = vmatpush1.msra.mxu0 %v1484
        %v1486 = vand.u32 %v422, 4294901760
        %1487 = vmatprep.subr.mxu0 %v1486
        %v1488 = vand.u32 %v421, 4294901760
        %1489 = vmatpush1.msra.mxu0 %v1488
        %v1490 = vand.u32 %v424, 4294901760
        %1491 = vmatprep.subr.mxu0 %v1490
        %v1492 = vand.u32 %v423, 4294901760
        %1493 = vmatpush1.msra.mxu0 %v1492
        %v1494 = vand.u32 %v426, 4294901760
        %1495 = vmatprep.subr.mxu0 %v1494
        %v1496 = vand.u32 %v425, 4294901760
        %1497 = vmatpush1.msra.mxu0 %v1496
        %v1498 = vand.u32 %v428, 4294901760
        %1499 = vmatprep.subr.mxu0 %v1498
        %v1500 = vand.u32 %v427, 4294901760
        %1501 = vmatpush1.msra.mxu0 %v1500
        %v1502 = vand.u32 %v430, 4294901760
        %1503 = vmatprep.subr.mxu0 %v1502
        %v1504 = vand.u32 %v429, 4294901760
        %1505 = vmatpush1.msra.mxu0 %v1504
        %v1506 = vand.u32 %v432, 4294901760
        %1507 = vmatprep.subr.mxu0 %v1506
        %v1508 = vand.u32 %v431, 4294901760
        %1509 = vmatpush1.msra.mxu0 %v1508
        %v1510 = vand.u32 %v434, 4294901760
        %1511 = vmatprep.subr.mxu0 %v1510
        %v1512 = vand.u32 %v433, 4294901760
        %1513 = vmatpush1.msra.mxu0 %v1512
        %v1514 = vand.u32 %v436, 4294901760
        %1515 = vmatprep.subr.mxu0 %v1514
        %v1516 = vand.u32 %v435, 4294901760
        %1517 = vmatpush1.msra.mxu0 %v1516
        %v1518 = vand.u32 %v438, 4294901760
        %1519 = vmatprep.subr.mxu0 %v1518
        %v1520 = vand.u32 %v437, 4294901760
        %1521 = vmatpush1.msra.mxu0 %v1520
        %v1522 = vand.u32 %v440, 4294901760
        %1523 = vmatprep.subr.mxu0 %v1522
        %v1524 = vand.u32 %v439, 4294901760
        %1525 = vmatpush1.msra.mxu0 %v1524
        %v1526 = vand.u32 %v442, 4294901760
        %1527 = vmatprep.subr.mxu0 %v1526
        %v1528 = vand.u32 %v441, 4294901760
        %1529 = vmatpush1.msra.mxu0 %v1528
        %v1530 = vand.u32 %v444, 4294901760
        %1531 = vmatprep.subr.mxu0 %v1530
        %v1532 = vand.u32 %v443, 4294901760
        %1533 = vmatpush1.msra.mxu0 %v1532
        %v1534 = vand.u32 %v446, 4294901760
        %1535 = vmatprep.subr.mxu0 %v1534
        %v1536 = vand.u32 %v445, 4294901760
        %1537 = vmatpush1.msra.mxu0 %v1536
        %v1538 = vand.u32 %v661, 4294901760
        %v1539 = vsub.f32 %v661, %v1538
        %v1540 = vand.u32 %v1539, 4294901760
        %1541 = vmatprep.mubr.f32.mxu0 %v1540
        %v1542 = vand.u32 %v653, 4294901760
        %v1543 = vsub.f32 %v653, %v1542
        %v1544 = vand.u32 %v1543, 4294901760
        %1545 = vmatmul.mubr.f32.gmra.mrb[0].mxu0 %v1544
        %v1546 = vpop.f32.mrb[0].mxu0
        %v1547 = vadd.f32 %v1406, %v1546
        %v1548 = vpop.f32.mrb[0].mxu0
        %v1549 = vadd.f32 %v1408, %v1548
        %1550 = vdwg.mxu0
        %v1551 = vand.u32 %v384, 4294901760
        %v1552 = vsub.f32 %v384, %v1551
        %v1553 = vand.u32 %v1552, 4294901760
        %1554 = vmatprep.subr.mxu0 %v1553
        %v1555 = vand.u32 %v383, 4294901760
        %v1556 = vsub.f32 %v383, %v1555
        %v1557 = vand.u32 %v1556, 4294901760
        %1558 = vmatpush1.msra.mxu0 %v1557
        %v1559 = vand.u32 %v386, 4294901760
        %v1560 = vsub.f32 %v386, %v1559
        %v1561 = vand.u32 %v1560, 4294901760
        %1562 = vmatprep.subr.mxu0 %v1561
        %v1563 = vand.u32 %v385, 4294901760
        %v1564 = vsub.f32 %v385, %v1563
        %v1565 = vand.u32 %v1564, 4294901760
        %1566 = vmatpush1.msra.mxu0 %v1565
        %v1567 = vand.u32 %v388, 4294901760
        %v1568 = vsub.f32 %v388, %v1567
        %v1569 = vand.u32 %v1568, 4294901760
        %1570 = vmatprep.subr.mxu0 %v1569
        %v1571 = vand.u32 %v387, 4294901760
        %v1572 = vsub.f32 %v387, %v1571
        %v1573 = vand.u32 %v1572, 4294901760
        %1574 = vmatpush1.msra.mxu0 %v1573
        %v1575 = vand.u32 %v390, 4294901760
        %v1576 = vsub.f32 %v390, %v1575
        %v1577 = vand.u32 %v1576, 4294901760
        %1578 = vmatprep.subr.mxu0 %v1577
        %v1579 = vand.u32 %v389, 4294901760
        %v1580 = vsub.f32 %v389, %v1579
        %v1581 = vand.u32 %v1580, 4294901760
        %1582 = vmatpush1.msra.mxu0 %v1581
        %v1583 = vand.u32 %v392, 4294901760
        %v1584 = vsub.f32 %v392, %v1583
        %v1585 = vand.u32 %v1584, 4294901760
        %1586 = vmatprep.subr.mxu0 %v1585
        %v1587 = vand.u32 %v391, 4294901760
        %v1588 = vsub.f32 %v391, %v1587
        %v1589 = vand.u32 %v1588, 4294901760
        %1590 = vmatpush1.msra.mxu0 %v1589
        %v1591 = vand.u32 %v394, 4294901760
        %v1592 = vsub.f32 %v394, %v1591
        %v1593 = vand.u32 %v1592, 4294901760
        %1594 = vmatprep.subr.mxu0 %v1593
        %v1595 = vand.u32 %v393, 4294901760
        %v1596 = vsub.f32 %v393, %v1595
        %v1597 = vand.u32 %v1596, 4294901760
        %1598 = vmatpush1.msra.mxu0 %v1597
        %v1599 = vand.u32 %v396, 4294901760
        %v1600 = vsub.f32 %v396, %v1599
        %v1601 = vand.u32 %v1600, 4294901760
        %1602 = vmatprep.subr.mxu0 %v1601
        %v1603 = vand.u32 %v395, 4294901760
        %v1604 = vsub.f32 %v395, %v1603
        %v1605 = vand.u32 %v1604, 4294901760
        %1606 = vmatpush1.msra.mxu0 %v1605
        %v1607 = vand.u32 %v398, 4294901760
        %v1608 = vsub.f32 %v398, %v1607
        %v1609 = vand.u32 %v1608, 4294901760
        %1610 = vmatprep.subr.mxu0 %v1609
        %v1611 = vand.u32 %v397, 4294901760
        %v1612 = vsub.f32 %v397, %v1611
        %v1613 = vand.u32 %v1612, 4294901760
        %1614 = vmatpush1.msra.mxu0 %v1613
        %v1615 = vand.u32 %v400, 4294901760
        %v1616 = vsub.f32 %v400, %v1615
        %v1617 = vand.u32 %v1616, 4294901760
        %1618 = vmatprep.subr.mxu0 %v1617
        %v1619 = vand.u32 %v399, 4294901760
        %v1620 = vsub.f32 %v399, %v1619
        %v1621 = vand.u32 %v1620, 4294901760
        %1622 = vmatpush1.msra.mxu0 %v1621
        %v1623 = vand.u32 %v402, 4294901760
        %v1624 = vsub.f32 %v402, %v1623
        %v1625 = vand.u32 %v1624, 4294901760
        %1626 = vmatprep.subr.mxu0 %v1625
        %v1627 = vand.u32 %v401, 4294901760
        %v1628 = vsub.f32 %v401, %v1627
        %v1629 = vand.u32 %v1628, 4294901760
        %1630 = vmatpush1.msra.mxu0 %v1629
        %v1631 = vand.u32 %v404, 4294901760
        %v1632 = vsub.f32 %v404, %v1631
        %v1633 = vand.u32 %v1632, 4294901760
        %1634 = vmatprep.subr.mxu0 %v1633
        %v1635 = vand.u32 %v403, 4294901760
        %v1636 = vsub.f32 %v403, %v1635
        %v1637 = vand.u32 %v1636, 4294901760
        %1638 = vmatpush1.msra.mxu0 %v1637
        %v1639 = vand.u32 %v406, 4294901760
        %v1640 = vsub.f32 %v406, %v1639
        %v1641 = vand.u32 %v1640, 4294901760
        %1642 = vmatprep.subr.mxu0 %v1641
        %v1643 = vand.u32 %v405, 4294901760
        %v1644 = vsub.f32 %v405, %v1643
        %v1645 = vand.u32 %v1644, 4294901760
        %1646 = vmatpush1.msra.mxu0 %v1645
        %v1647 = vand.u32 %v408, 4294901760
        %v1648 = vsub.f32 %v408, %v1647
        %v1649 = vand.u32 %v1648, 4294901760
        %1650 = vmatprep.subr.mxu0 %v1649
        %v1651 = vand.u32 %v407, 4294901760
        %v1652 = vsub.f32 %v407, %v1651
        %v1653 = vand.u32 %v1652, 4294901760
        %1654 = vmatpush1.msra.mxu0 %v1653
        %v1655 = vand.u32 %v410, 4294901760
        %v1656 = vsub.f32 %v410, %v1655
        %v1657 = vand.u32 %v1656, 4294901760
        %1658 = vmatprep.subr.mxu0 %v1657
        %v1659 = vand.u32 %v409, 4294901760
        %v1660 = vsub.f32 %v409, %v1659
        %v1661 = vand.u32 %v1660, 4294901760
        %1662 = vmatpush1.msra.mxu0 %v1661
        %v1663 = vand.u32 %v412, 4294901760
        %v1664 = vsub.f32 %v412, %v1663
        %v1665 = vand.u32 %v1664, 4294901760
        %1666 = vmatprep.subr.mxu0 %v1665
        %v1667 = vand.u32 %v411, 4294901760
        %v1668 = vsub.f32 %v411, %v1667
        %v1669 = vand.u32 %v1668, 4294901760
        %1670 = vmatpush1.msra.mxu0 %v1669
        %v1671 = vand.u32 %v414, 4294901760
        %v1672 = vsub.f32 %v414, %v1671
        %v1673 = vand.u32 %v1672, 4294901760
        %1674 = vmatprep.subr.mxu0 %v1673
        %v1675 = vand.u32 %v413, 4294901760
        %v1676 = vsub.f32 %v413, %v1675
        %v1677 = vand.u32 %v1676, 4294901760
        %1678 = vmatpush1.msra.mxu0 %v1677
        %v1679 = vand.u32 %v416, 4294901760
        %v1680 = vsub.f32 %v416, %v1679
        %v1681 = vand.u32 %v1680, 4294901760
        %1682 = vmatprep.subr.mxu0 %v1681
        %v1683 = vand.u32 %v415, 4294901760
        %v1684 = vsub.f32 %v415, %v1683
        %v1685 = vand.u32 %v1684, 4294901760
        %1686 = vmatpush1.msra.mxu0 %v1685
        %v1687 = vand.u32 %v418, 4294901760
        %v1688 = vsub.f32 %v418, %v1687
        %v1689 = vand.u32 %v1688, 4294901760
        %1690 = vmatprep.subr.mxu0 %v1689
        %v1691 = vand.u32 %v417, 4294901760
        %v1692 = vsub.f32 %v417, %v1691
        %v1693 = vand.u32 %v1692, 4294901760
        %1694 = vmatpush1.msra.mxu0 %v1693
        %v1695 = vand.u32 %v420, 4294901760
        %v1696 = vsub.f32 %v420, %v1695
        %v1697 = vand.u32 %v1696, 4294901760
        %1698 = vmatprep.subr.mxu0 %v1697
        %v1699 = vand.u32 %v419, 4294901760
        %v1700 = vsub.f32 %v419, %v1699
        %v1701 = vand.u32 %v1700, 4294901760
        %1702 = vmatpush1.msra.mxu0 %v1701
        %v1703 = vand.u32 %v422, 4294901760
        %v1704 = vsub.f32 %v422, %v1703
        %v1705 = vand.u32 %v1704, 4294901760
        %1706 = vmatprep.subr.mxu0 %v1705
        %v1707 = vand.u32 %v421, 4294901760
        %v1708 = vsub.f32 %v421, %v1707
        %v1709 = vand.u32 %v1708, 4294901760
        %1710 = vmatpush1.msra.mxu0 %v1709
        %v1711 = vand.u32 %v424, 4294901760
        %v1712 = vsub.f32 %v424, %v1711
        %v1713 = vand.u32 %v1712, 4294901760
        %1714 = vmatprep.subr.mxu0 %v1713
        %v1715 = vand.u32 %v423, 4294901760
        %v1716 = vsub.f32 %v423, %v1715
        %v1717 = vand.u32 %v1716, 4294901760
        %1718 = vmatpush1.msra.mxu0 %v1717
        %v1719 = vand.u32 %v426, 4294901760
        %v1720 = vsub.f32 %v426, %v1719
        %v1721 = vand.u32 %v1720, 4294901760
        %1722 = vmatprep.subr.mxu0 %v1721
        %v1723 = vand.u32 %v425, 4294901760
        %v1724 = vsub.f32 %v425, %v1723
        %v1725 = vand.u32 %v1724, 4294901760
        %1726 = vmatpush1.msra.mxu0 %v1725
        %v1727 = vand.u32 %v428, 4294901760
        %v1728 = vsub.f32 %v428, %v1727
        %v1729 = vand.u32 %v1728, 4294901760
        %1730 = vmatprep.subr.mxu0 %v1729
        %v1731 = vand.u32 %v427, 4294901760
        %v1732 = vsub.f32 %v427, %v1731
        %v1733 = vand.u32 %v1732, 4294901760
        %1734 = vmatpush1.msra.mxu0 %v1733
        %v1735 = vand.u32 %v430, 4294901760
        %v1736 = vsub.f32 %v430, %v1735
        %v1737 = vand.u32 %v1736, 4294901760
        %1738 = vmatprep.subr.mxu0 %v1737
        %v1739 = vand.u32 %v429, 4294901760
        %v1740 = vsub.f32 %v429, %v1739
        %v1741 = vand.u32 %v1740, 4294901760
        %1742 = vmatpush1.msra.mxu0 %v1741
        %v1743 = vand.u32 %v432, 4294901760
        %v1744 = vsub.f32 %v432, %v1743
        %v1745 = vand.u32 %v1744, 4294901760
        %1746 = vmatprep.subr.mxu0 %v1745
        %v1747 = vand.u32 %v431, 4294901760
        %v1748 = vsub.f32 %v431, %v1747
        %v1749 = vand.u32 %v1748, 4294901760
        %1750 = vmatpush1.msra.mxu0 %v1749
        %v1751 = vand.u32 %v434, 4294901760
        %v1752 = vsub.f32 %v434, %v1751
        %v1753 = vand.u32 %v1752, 4294901760
        %1754 = vmatprep.subr.mxu0 %v1753
        %v1755 = vand.u32 %v433, 4294901760
        %v1756 = vsub.f32 %v433, %v1755
        %v1757 = vand.u32 %v1756, 4294901760
        %1758 = vmatpush1.msra.mxu0 %v1757
        %v1759 = vand.u32 %v436, 4294901760
        %v1760 = vsub.f32 %v436, %v1759
        %v1761 = vand.u32 %v1760, 4294901760
        %1762 = vmatprep.subr.mxu0 %v1761
        %v1763 = vand.u32 %v435, 4294901760
        %v1764 = vsub.f32 %v435, %v1763
        %v1765 = vand.u32 %v1764, 4294901760
        %1766 = vmatpush1.msra.mxu0 %v1765
        %v1767 = vand.u32 %v438, 4294901760
        %v1768 = vsub.f32 %v438, %v1767
        %v1769 = vand.u32 %v1768, 4294901760
        %1770 = vmatprep.subr.mxu0 %v1769
        %v1771 = vand.u32 %v437, 4294901760
        %v1772 = vsub.f32 %v437, %v1771
        %v1773 = vand.u32 %v1772, 4294901760
        %1774 = vmatpush1.msra.mxu0 %v1773
        %v1775 = vand.u32 %v440, 4294901760
        %v1776 = vsub.f32 %v440, %v1775
        %v1777 = vand.u32 %v1776, 4294901760
        %1778 = vmatprep.subr.mxu0 %v1777
        %v1779 = vand.u32 %v439, 4294901760
        %v1780 = vsub.f32 %v439, %v1779
        %v1781 = vand.u32 %v1780, 4294901760
        %1782 = vmatpush1.msra.mxu0 %v1781
        %v1783 = vand.u32 %v442, 4294901760
        %v1784 = vsub.f32 %v442, %v1783
        %v1785 = vand.u32 %v1784, 4294901760
        %1786 = vmatprep.subr.mxu0 %v1785
        %v1787 = vand.u32 %v441, 4294901760
        %v1788 = vsub.f32 %v441, %v1787
        %v1789 = vand.u32 %v1788, 4294901760
        %1790 = vmatpush1.msra.mxu0 %v1789
        %v1791 = vand.u32 %v444, 4294901760
        %v1792 = vsub.f32 %v444, %v1791
        %v1793 = vand.u32 %v1792, 4294901760
        %1794 = vmatprep.subr.mxu0 %v1793
        %v1795 = vand.u32 %v443, 4294901760
        %v1796 = vsub.f32 %v443, %v1795
        %v1797 = vand.u32 %v1796, 4294901760
        %1798 = vmatpush1.msra.mxu0 %v1797
        %v1799 = vand.u32 %v446, 4294901760
        %v1800 = vsub.f32 %v446, %v1799
        %v1801 = vand.u32 %v1800, 4294901760
        %1802 = vmatprep.subr.mxu0 %v1801
        %v1803 = vand.u32 %v445, 4294901760
        %v1804 = vsub.f32 %v445, %v1803
        %v1805 = vand.u32 %v1804, 4294901760
        %1806 = vmatpush1.msra.mxu0 %v1805
        %v1807 = vand.u32 %v661, 4294901760
        %1808 = vmatprep.mubr.f32.mxu0 %v1807
        %v1809 = vand.u32 %v653, 4294901760
        %1810 = vmatmul.mubr.f32.gmra.mrb[0].mxu0 %v1809
        %v1811 = vpop.f32.mrb[0].mxu0
        %v1812 = vadd.f32 %v1547, %v1811
        %v1813 = vpop.f32.mrb[0].mxu0
        %v1814 = vadd.f32 %v1549, %v1813
        %1815 = vdwg.mxu0
        %v1816 = vand.u32 %v384, 4294901760
        %1817 = vmatprep.subr.mxu0 %v1816
        %v1818 = vand.u32 %v383, 4294901760
        %1819 = vmatpush1.msra.mxu0 %v1818
        %v1820 = vand.u32 %v386, 4294901760
        %1821 = vmatprep.subr.mxu0 %v1820
        %v1822 = vand.u32 %v385, 4294901760
        %1823 = vmatpush1.msra.mxu0 %v1822
        %v1824 = vand.u32 %v388, 4294901760
        %1825 = vmatprep.subr.mxu0 %v1824
        %v1826 = vand.u32 %v387, 4294901760
        %1827 = vmatpush1.msra.mxu0 %v1826
        %v1828 = vand.u32 %v390, 4294901760
        %1829 = vmatprep.subr.mxu0 %v1828
        %v1830 = vand.u32 %v389, 4294901760
        %1831 = vmatpush1.msra.mxu0 %v1830
        %v1832 = vand.u32 %v392, 4294901760
        %1833 = vmatprep.subr.mxu0 %v1832
        %v1834 = vand.u32 %v391, 4294901760
        %1835 = vmatpush1.msra.mxu0 %v1834
        %v1836 = vand.u32 %v394, 4294901760
        %1837 = vmatprep.subr.mxu0 %v1836
        %v1838 = vand.u32 %v393, 4294901760
        %1839 = vmatpush1.msra.mxu0 %v1838
        %v1840 = vand.u32 %v396, 4294901760
        %1841 = vmatprep.subr.mxu0 %v1840
        %v1842 = vand.u32 %v395, 4294901760
        %1843 = vmatpush1.msra.mxu0 %v1842
        %v1844 = vand.u32 %v398, 4294901760
        %1845 = vmatprep.subr.mxu0 %v1844
        %v1846 = vand.u32 %v397, 4294901760
        %1847 = vmatpush1.msra.mxu0 %v1846
        %v1848 = vand.u32 %v400, 4294901760
        %1849 = vmatprep.subr.mxu0 %v1848
        %v1850 = vand.u32 %v399, 4294901760
        %1851 = vmatpush1.msra.mxu0 %v1850
        %v1852 = vand.u32 %v402, 4294901760
        %1853 = vmatprep.subr.mxu0 %v1852
        %v1854 = vand.u32 %v401, 4294901760
        %1855 = vmatpush1.msra.mxu0 %v1854
        %v1856 = vand.u32 %v404, 4294901760
        %1857 = vmatprep.subr.mxu0 %v1856
        %v1858 = vand.u32 %v403, 4294901760
        %1859 = vmatpush1.msra.mxu0 %v1858
        %v1860 = vand.u32 %v406, 4294901760
        %1861 = vmatprep.subr.mxu0 %v1860
        %v1862 = vand.u32 %v405, 4294901760
        %1863 = vmatpush1.msra.mxu0 %v1862
        %v1864 = vand.u32 %v408, 4294901760
        %1865 = vmatprep.subr.mxu0 %v1864
        %v1866 = vand.u32 %v407, 4294901760
        %1867 = vmatpush1.msra.mxu0 %v1866
        %v1868 = vand.u32 %v410, 4294901760
        %1869 = vmatprep.subr.mxu0 %v1868
        %v1870 = vand.u32 %v409, 4294901760
        %1871 = vmatpush1.msra.mxu0 %v1870
        %v1872 = vand.u32 %v412, 4294901760
        %1873 = vmatprep.subr.mxu0 %v1872
        %v1874 = vand.u32 %v411, 4294901760
        %1875 = vmatpush1.msra.mxu0 %v1874
        %v1876 = vand.u32 %v414, 4294901760
        %1877 = vmatprep.subr.mxu0 %v1876
        %v1878 = vand.u32 %v413, 4294901760
        %1879 = vmatpush1.msra.mxu0 %v1878
        %v1880 = vand.u32 %v416, 4294901760
        %1881 = vmatprep.subr.mxu0 %v1880
        %v1882 = vand.u32 %v415, 4294901760
        %1883 = vmatpush1.msra.mxu0 %v1882
        %v1884 = vand.u32 %v418, 4294901760
        %1885 = vmatprep.subr.mxu0 %v1884
        %v1886 = vand.u32 %v417, 4294901760
        %1887 = vmatpush1.msra.mxu0 %v1886
        %v1888 = vand.u32 %v420, 4294901760
        %1889 = vmatprep.subr.mxu0 %v1888
        %v1890 = vand.u32 %v419, 4294901760
        %1891 = vmatpush1.msra.mxu0 %v1890
        %v1892 = vand.u32 %v422, 4294901760
        %1893 = vmatprep.subr.mxu0 %v1892
        %v1894 = vand.u32 %v421, 4294901760
        %1895 = vmatpush1.msra.mxu0 %v1894
        %v1896 = vand.u32 %v424, 4294901760
        %1897 = vmatprep.subr.mxu0 %v1896
        %v1898 = vand.u32 %v423, 4294901760
        %1899 = vmatpush1.msra.mxu0 %v1898
        %v1900 = vand.u32 %v426, 4294901760
        %1901 = vmatprep.subr.mxu0 %v1900
        %v1902 = vand.u32 %v425, 4294901760
        %1903 = vmatpush1.msra.mxu0 %v1902
        %v1904 = vand.u32 %v428, 4294901760
        %1905 = vmatprep.subr.mxu0 %v1904
        %v1906 = vand.u32 %v427, 4294901760
        %1907 = vmatpush1.msra.mxu0 %v1906
        %v1908 = vand.u32 %v430, 4294901760
        %1909 = vmatprep.subr.mxu0 %v1908
        %v1910 = vand.u32 %v429, 4294901760
        %1911 = vmatpush1.msra.mxu0 %v1910
        %v1912 = vand.u32 %v432, 4294901760
        %1913 = vmatprep.subr.mxu0 %v1912
        %v1914 = vand.u32 %v431, 4294901760
        %1915 = vmatpush1.msra.mxu0 %v1914
        %v1916 = vand.u32 %v434, 4294901760
        %1917 = vmatprep.subr.mxu0 %v1916
        %v1918 = vand.u32 %v433, 4294901760
        %1919 = vmatpush1.msra.mxu0 %v1918
        %v1920 = vand.u32 %v436, 4294901760
        %1921 = vmatprep.subr.mxu0 %v1920
        %v1922 = vand.u32 %v435, 4294901760
        %1923 = vmatpush1.msra.mxu0 %v1922
        %v1924 = vand.u32 %v438, 4294901760
        %1925 = vmatprep.subr.mxu0 %v1924
        %v1926 = vand.u32 %v437, 4294901760
        %1927 = vmatpush1.msra.mxu0 %v1926
        %v1928 = vand.u32 %v440, 4294901760
        %1929 = vmatprep.subr.mxu0 %v1928
        %v1930 = vand.u32 %v439, 4294901760
        %1931 = vmatpush1.msra.mxu0 %v1930
        %v1932 = vand.u32 %v442, 4294901760
        %1933 = vmatprep.subr.mxu0 %v1932
        %v1934 = vand.u32 %v441, 4294901760
        %1935 = vmatpush1.msra.mxu0 %v1934
        %v1936 = vand.u32 %v444, 4294901760
        %1937 = vmatprep.subr.mxu0 %v1936
        %v1938 = vand.u32 %v443, 4294901760
        %1939 = vmatpush1.msra.mxu0 %v1938
        %v1940 = vand.u32 %v446, 4294901760
        %1941 = vmatprep.subr.mxu0 %v1940
        %v1942 = vand.u32 %v445, 4294901760
        %1943 = vmatpush1.msra.mxu0 %v1942
        %v1944 = vand.u32 %v661, 4294901760
        %1945 = vmatprep.mubr.f32.mxu0 %v1944
        %v1946 = vand.u32 %v653, 4294901760
        %1947 = vmatmul.mubr.f32.gmra.mrb[0].mxu0 %v1946
        %v1948 = vpop.f32.mrb[0].mxu0
        %v1949 = vadd.f32 %v1812, %v1948
        %v1950 = vpop.f32.mrb[0].mxu0
        %v1951 = vadd.f32 %v1814, %v1950
        %1952 = vdwg.mxu0
        %v1953 = vand.u32 %v448, 4294901760
        %1954 = vmatprep.subr.mxu0 %v1953
        %v1955 = vand.u32 %v447, 4294901760
        %1956 = vmatpush1.msra.mxu0 %v1955
        %v1957 = vand.u32 %v450, 4294901760
        %1958 = vmatprep.subr.mxu0 %v1957
        %v1959 = vand.u32 %v449, 4294901760
        %1960 = vmatpush1.msra.mxu0 %v1959
        %v1961 = vand.u32 %v452, 4294901760
        %1962 = vmatprep.subr.mxu0 %v1961
        %v1963 = vand.u32 %v451, 4294901760
        %1964 = vmatpush1.msra.mxu0 %v1963
        %v1965 = vand.u32 %v454, 4294901760
        %1966 = vmatprep.subr.mxu0 %v1965
        %v1967 = vand.u32 %v453, 4294901760
        %1968 = vmatpush1.msra.mxu0 %v1967
        %v1969 = vand.u32 %v456, 4294901760
        %1970 = vmatprep.subr.mxu0 %v1969
        %v1971 = vand.u32 %v455, 4294901760
        %1972 = vmatpush1.msra.mxu0 %v1971
        %v1973 = vand.u32 %v458, 4294901760
        %1974 = vmatprep.subr.mxu0 %v1973
        %v1975 = vand.u32 %v457, 4294901760
        %1976 = vmatpush1.msra.mxu0 %v1975
        %v1977 = vand.u32 %v460, 4294901760
        %1978 = vmatprep.subr.mxu0 %v1977
        %v1979 = vand.u32 %v459, 4294901760
        %1980 = vmatpush1.msra.mxu0 %v1979
        %v1981 = vand.u32 %v462, 4294901760
        %1982 = vmatprep.subr.mxu0 %v1981
        %v1983 = vand.u32 %v461, 4294901760
        %1984 = vmatpush1.msra.mxu0 %v1983
        %v1985 = vand.u32 %v464, 4294901760
        %1986 = vmatprep.subr.mxu0 %v1985
        %v1987 = vand.u32 %v463, 4294901760
        %1988 = vmatpush1.msra.mxu0 %v1987
        %v1989 = vand.u32 %v466, 4294901760
        %1990 = vmatprep.subr.mxu0 %v1989
        %v1991 = vand.u32 %v465, 4294901760
        %1992 = vmatpush1.msra.mxu0 %v1991
        %v1993 = vand.u32 %v468, 4294901760
        %1994 = vmatprep.subr.mxu0 %v1993
        %v1995 = vand.u32 %v467, 4294901760
        %1996 = vmatpush1.msra.mxu0 %v1995
        %v1997 = vand.u32 %v470, 4294901760
        %1998 = vmatprep.subr.mxu0 %v1997
        %v1999 = vand.u32 %v469, 4294901760
        %2000 = vmatpush1.msra.mxu0 %v1999
        %v2001 = vand.u32 %v472, 4294901760
        %2002 = vmatprep.subr.mxu0 %v2001
        %v2003 = vand.u32 %v471, 4294901760
        %2004 = vmatpush1.msra.mxu0 %v2003
        %v2005 = vand.u32 %v474, 4294901760
        %2006 = vmatprep.subr.mxu0 %v2005
        %v2007 = vand.u32 %v473, 4294901760
        %2008 = vmatpush1.msra.mxu0 %v2007
        %v2009 = vand.u32 %v476, 4294901760
        %2010 = vmatprep.subr.mxu0 %v2009
        %v2011 = vand.u32 %v475, 4294901760
        %2012 = vmatpush1.msra.mxu0 %v2011
        %v2013 = vand.u32 %v478, 4294901760
        %2014 = vmatprep.subr.mxu0 %v2013
        %v2015 = vand.u32 %v477, 4294901760
        %2016 = vmatpush1.msra.mxu0 %v2015
        %v2017 = vand.u32 %v480, 4294901760
        %2018 = vmatprep.subr.mxu0 %v2017
        %v2019 = vand.u32 %v479, 4294901760
        %2020 = vmatpush1.msra.mxu0 %v2019
        %v2021 = vand.u32 %v482, 4294901760
        %2022 = vmatprep.subr.mxu0 %v2021
        %v2023 = vand.u32 %v481, 4294901760
        %2024 = vmatpush1.msra.mxu0 %v2023
        %v2025 = vand.u32 %v484, 4294901760
        %2026 = vmatprep.subr.mxu0 %v2025
        %v2027 = vand.u32 %v483, 4294901760
        %2028 = vmatpush1.msra.mxu0 %v2027
        %v2029 = vand.u32 %v486, 4294901760
        %2030 = vmatprep.subr.mxu0 %v2029
        %v2031 = vand.u32 %v485, 4294901760
        %2032 = vmatpush1.msra.mxu0 %v2031
        %v2033 = vand.u32 %v488, 4294901760
        %2034 = vmatprep.subr.mxu0 %v2033
        %v2035 = vand.u32 %v487, 4294901760
        %2036 = vmatpush1.msra.mxu0 %v2035
        %v2037 = vand.u32 %v490, 4294901760
        %2038 = vmatprep.subr.mxu0 %v2037
        %v2039 = vand.u32 %v489, 4294901760
        %2040 = vmatpush1.msra.mxu0 %v2039
        %v2041 = vand.u32 %v492, 4294901760
        %2042 = vmatprep.subr.mxu0 %v2041
        %v2043 = vand.u32 %v491, 4294901760
        %2044 = vmatpush1.msra.mxu0 %v2043
        %v2045 = vand.u32 %v494, 4294901760
        %2046 = vmatprep.subr.mxu0 %v2045
        %v2047 = vand.u32 %v493, 4294901760
        %2048 = vmatpush1.msra.mxu0 %v2047
        %v2049 = vand.u32 %v496, 4294901760
        %2050 = vmatprep.subr.mxu0 %v2049
        %v2051 = vand.u32 %v495, 4294901760
        %2052 = vmatpush1.msra.mxu0 %v2051
        %v2053 = vand.u32 %v498, 4294901760
        %2054 = vmatprep.subr.mxu0 %v2053
        %v2055 = vand.u32 %v497, 4294901760
        %2056 = vmatpush1.msra.mxu0 %v2055
        %v2057 = vand.u32 %v500, 4294901760
        %2058 = vmatprep.subr.mxu0 %v2057
        %v2059 = vand.u32 %v499, 4294901760
        %2060 = vmatpush1.msra.mxu0 %v2059
        %v2061 = vand.u32 %v502, 4294901760
        %2062 = vmatprep.subr.mxu0 %v2061
        %v2063 = vand.u32 %v501, 4294901760
        %2064 = vmatpush1.msra.mxu0 %v2063
        %v2065 = vand.u32 %v504, 4294901760
        %2066 = vmatprep.subr.mxu0 %v2065
        %v2067 = vand.u32 %v503, 4294901760
        %2068 = vmatpush1.msra.mxu0 %v2067
        %v2069 = vand.u32 %v506, 4294901760
        %2070 = vmatprep.subr.mxu0 %v2069
        %v2071 = vand.u32 %v505, 4294901760
        %2072 = vmatpush1.msra.mxu0 %v2071
        %v2073 = vand.u32 %v508, 4294901760
        %2074 = vmatprep.subr.mxu0 %v2073
        %v2075 = vand.u32 %v507, 4294901760
        %2076 = vmatpush1.msra.mxu0 %v2075
        %v2077 = vand.u32 %v510, 4294901760
        %2078 = vmatprep.subr.mxu0 %v2077
        %v2079 = vand.u32 %v509, 4294901760
        %2080 = vmatpush1.msra.mxu0 %v2079
        %v2081 = vand.u32 %v662, 4294901760
        %v2082 = vsub.f32 %v662, %v2081
        %v2083 = vand.u32 %v2082, 4294901760
        %v2084 = vsub.f32 %v2082, %v2083
        %v2085 = vand.u32 %v2084, 4294901760
        %2086 = vmatprep.mubr.f32.mxu0 %v2085
        %v2087 = vand.u32 %v654, 4294901760
        %v2088 = vsub.f32 %v654, %v2087
        %v2089 = vand.u32 %v2088, 4294901760
        %v2090 = vsub.f32 %v2088, %v2089
        %v2091 = vand.u32 %v2090, 4294901760
        %2092 = vmatmul.mubr.f32.gmra.mrb[0].mxu0 %v2091
        %v2093 = vpop.f32.mrb[0].mxu0
        %v2094 = vadd.f32 %v1949, %v2093
        %v2095 = vpop.f32.mrb[0].mxu0
        %v2096 = vadd.f32 %v1951, %v2095
        %2097 = vdwg.mxu0
        %v2098 = vand.u32 %v448, 4294901760
        %v2099 = vsub.f32 %v448, %v2098
        %v2100 = vand.u32 %v2099, 4294901760
        %v2101 = vsub.f32 %v2099, %v2100
        %v2102 = vand.u32 %v2101, 4294901760
        %2103 = vmatprep.subr.mxu0 %v2102
        %v2104 = vand.u32 %v447, 4294901760
        %v2105 = vsub.f32 %v447, %v2104
        %v2106 = vand.u32 %v2105, 4294901760
        %v2107 = vsub.f32 %v2105, %v2106
        %v2108 = vand.u32 %v2107, 4294901760
        %2109 = vmatpush1.msra.mxu0 %v2108
        %v2110 = vand.u32 %v450, 4294901760
        %v2111 = vsub.f32 %v450, %v2110
        %v2112 = vand.u32 %v2111, 4294901760
        %v2113 = vsub.f32 %v2111, %v2112
        %v2114 = vand.u32 %v2113, 4294901760
        %2115 = vmatprep.subr.mxu0 %v2114
        %v2116 = vand.u32 %v449, 4294901760
        %v2117 = vsub.f32 %v449, %v2116
        %v2118 = vand.u32 %v2117, 4294901760
        %v2119 = vsub.f32 %v2117, %v2118
        %v2120 = vand.u32 %v2119, 4294901760
        %2121 = vmatpush1.msra.mxu0 %v2120
        %v2122 = vand.u32 %v452, 4294901760
        %v2123 = vsub.f32 %v452, %v2122
        %v2124 = vand.u32 %v2123, 4294901760
        %v2125 = vsub.f32 %v2123, %v2124
        %v2126 = vand.u32 %v2125, 4294901760
        %2127 = vmatprep.subr.mxu0 %v2126
        %v2128 = vand.u32 %v451, 4294901760
        %v2129 = vsub.f32 %v451, %v2128
        %v2130 = vand.u32 %v2129, 4294901760
        %v2131 = vsub.f32 %v2129, %v2130
        %v2132 = vand.u32 %v2131, 4294901760
        %2133 = vmatpush1.msra.mxu0 %v2132
        %v2134 = vand.u32 %v454, 4294901760
        %v2135 = vsub.f32 %v454, %v2134
        %v2136 = vand.u32 %v2135, 4294901760
        %v2137 = vsub.f32 %v2135, %v2136
        %v2138 = vand.u32 %v2137, 4294901760
        %2139 = vmatprep.subr.mxu0 %v2138
        %v2140 = vand.u32 %v453, 4294901760
        %v2141 = vsub.f32 %v453, %v2140
        %v2142 = vand.u32 %v2141, 4294901760
        %v2143 = vsub.f32 %v2141, %v2142
        %v2144 = vand.u32 %v2143, 4294901760
        %2145 = vmatpush1.msra.mxu0 %v2144
        %v2146 = vand.u32 %v456, 4294901760
        %v2147 = vsub.f32 %v456, %v2146
        %v2148 = vand.u32 %v2147, 4294901760
        %v2149 = vsub.f32 %v2147, %v2148
        %v2150 = vand.u32 %v2149, 4294901760
        %2151 = vmatprep.subr.mxu0 %v2150
        %v2152 = vand.u32 %v455, 4294901760
        %v2153 = vsub.f32 %v455, %v2152
        %v2154 = vand.u32 %v2153, 4294901760
        %v2155 = vsub.f32 %v2153, %v2154
        %v2156 = vand.u32 %v2155, 4294901760
        %2157 = vmatpush1.msra.mxu0 %v2156
        %v2158 = vand.u32 %v458, 4294901760
        %v2159 = vsub.f32 %v458, %v2158
        %v2160 = vand.u32 %v2159, 4294901760
        %v2161 = vsub.f32 %v2159, %v2160
        %v2162 = vand.u32 %v2161, 4294901760
        %2163 = vmatprep.subr.mxu0 %v2162
        %v2164 = vand.u32 %v457, 4294901760
        %v2165 = vsub.f32 %v457, %v2164
        %v2166 = vand.u32 %v2165, 4294901760
        %v2167 = vsub.f32 %v2165, %v2166
        %v2168 = vand.u32 %v2167, 4294901760
        %2169 = vmatpush1.msra.mxu0 %v2168
        %v2170 = vand.u32 %v460, 4294901760
        %v2171 = vsub.f32 %v460, %v2170
        %v2172 = vand.u32 %v2171, 4294901760
        %v2173 = vsub.f32 %v2171, %v2172
        %v2174 = vand.u32 %v2173, 4294901760
        %2175 = vmatprep.subr.mxu0 %v2174
        %v2176 = vand.u32 %v459, 4294901760
        %v2177 = vsub.f32 %v459, %v2176
        %v2178 = vand.u32 %v2177, 4294901760
        %v2179 = vsub.f32 %v2177, %v2178
        %v2180 = vand.u32 %v2179, 4294901760
        %2181 = vmatpush1.msra.mxu0 %v2180
        %v2182 = vand.u32 %v462, 4294901760
        %v2183 = vsub.f32 %v462, %v2182
        %v2184 = vand.u32 %v2183, 4294901760
        %v2185 = vsub.f32 %v2183, %v2184
        %v2186 = vand.u32 %v2185, 4294901760
        %2187 = vmatprep.subr.mxu0 %v2186
        %v2188 = vand.u32 %v461, 4294901760
        %v2189 = vsub.f32 %v461, %v2188
        %v2190 = vand.u32 %v2189, 4294901760
        %v2191 = vsub.f32 %v2189, %v2190
        %v2192 = vand.u32 %v2191, 4294901760
        %2193 = vmatpush1.msra.mxu0 %v2192
        %v2194 = vand.u32 %v464, 4294901760
        %v2195 = vsub.f32 %v464, %v2194
        %v2196 = vand.u32 %v2195, 4294901760
        %v2197 = vsub.f32 %v2195, %v2196
        %v2198 = vand.u32 %v2197, 4294901760
        %2199 = vmatprep.subr.mxu0 %v2198
        %v2200 = vand.u32 %v463, 4294901760
        %v2201 = vsub.f32 %v463, %v2200
        %v2202 = vand.u32 %v2201, 4294901760
        %v2203 = vsub.f32 %v2201, %v2202
        %v2204 = vand.u32 %v2203, 4294901760
        %2205 = vmatpush1.msra.mxu0 %v2204
        %v2206 = vand.u32 %v466, 4294901760
        %v2207 = vsub.f32 %v466, %v2206
        %v2208 = vand.u32 %v2207, 4294901760
        %v2209 = vsub.f32 %v2207, %v2208
        %v2210 = vand.u32 %v2209, 4294901760
        %2211 = vmatprep.subr.mxu0 %v2210
        %v2212 = vand.u32 %v465, 4294901760
        %v2213 = vsub.f32 %v465, %v2212
        %v2214 = vand.u32 %v2213, 4294901760
        %v2215 = vsub.f32 %v2213, %v2214
        %v2216 = vand.u32 %v2215, 4294901760
        %2217 = vmatpush1.msra.mxu0 %v2216
        %v2218 = vand.u32 %v468, 4294901760
        %v2219 = vsub.f32 %v468, %v2218
        %v2220 = vand.u32 %v2219, 4294901760
        %v2221 = vsub.f32 %v2219, %v2220
        %v2222 = vand.u32 %v2221, 4294901760
        %2223 = vmatprep.subr.mxu0 %v2222
        %v2224 = vand.u32 %v467, 4294901760
        %v2225 = vsub.f32 %v467, %v2224
        %v2226 = vand.u32 %v2225, 4294901760
        %v2227 = vsub.f32 %v2225, %v2226
        %v2228 = vand.u32 %v2227, 4294901760
        %2229 = vmatpush1.msra.mxu0 %v2228
        %v2230 = vand.u32 %v470, 4294901760
        %v2231 = vsub.f32 %v470, %v2230
        %v2232 = vand.u32 %v2231, 4294901760
        %v2233 = vsub.f32 %v2231, %v2232
        %v2234 = vand.u32 %v2233, 4294901760
        %2235 = vmatprep.subr.mxu0 %v2234
        %v2236 = vand.u32 %v469, 4294901760
        %v2237 = vsub.f32 %v469, %v2236
        %v2238 = vand.u32 %v2237, 4294901760
        %v2239 = vsub.f32 %v2237, %v2238
        %v2240 = vand.u32 %v2239, 4294901760
        %2241 = vmatpush1.msra.mxu0 %v2240
        %v2242 = vand.u32 %v472, 4294901760
        %v2243 = vsub.f32 %v472, %v2242
        %v2244 = vand.u32 %v2243, 4294901760
        %v2245 = vsub.f32 %v2243, %v2244
        %v2246 = vand.u32 %v2245, 4294901760
        %2247 = vmatprep.subr.mxu0 %v2246
        %v2248 = vand.u32 %v471, 4294901760
        %v2249 = vsub.f32 %v471, %v2248
        %v2250 = vand.u32 %v2249, 4294901760
        %v2251 = vsub.f32 %v2249, %v2250
        %v2252 = vand.u32 %v2251, 4294901760
        %2253 = vmatpush1.msra.mxu0 %v2252
        %v2254 = vand.u32 %v474, 4294901760
        %v2255 = vsub.f32 %v474, %v2254
        %v2256 = vand.u32 %v2255, 4294901760
        %v2257 = vsub.f32 %v2255, %v2256
        %v2258 = vand.u32 %v2257, 4294901760
        %2259 = vmatprep.subr.mxu0 %v2258
        %v2260 = vand.u32 %v473, 4294901760
        %v2261 = vsub.f32 %v473, %v2260
        %v2262 = vand.u32 %v2261, 4294901760
        %v2263 = vsub.f32 %v2261, %v2262
        %v2264 = vand.u32 %v2263, 4294901760
        %2265 = vmatpush1.msra.mxu0 %v2264
        %v2266 = vand.u32 %v476, 4294901760
        %v2267 = vsub.f32 %v476, %v2266
        %v2268 = vand.u32 %v2267, 4294901760
        %v2269 = vsub.f32 %v2267, %v2268
        %v2270 = vand.u32 %v2269, 4294901760
        %2271 = vmatprep.subr.mxu0 %v2270
        %v2272 = vand.u32 %v475, 4294901760
        %v2273 = vsub.f32 %v475, %v2272
        %v2274 = vand.u32 %v2273, 4294901760
        %v2275 = vsub.f32 %v2273, %v2274
        %v2276 = vand.u32 %v2275, 4294901760
        %2277 = vmatpush1.msra.mxu0 %v2276
        %v2278 = vand.u32 %v478, 4294901760
        %v2279 = vsub.f32 %v478, %v2278
        %v2280 = vand.u32 %v2279, 4294901760
        %v2281 = vsub.f32 %v2279, %v2280
        %v2282 = vand.u32 %v2281, 4294901760
        %2283 = vmatprep.subr.mxu0 %v2282
        %v2284 = vand.u32 %v477, 4294901760
        %v2285 = vsub.f32 %v477, %v2284
        %v2286 = vand.u32 %v2285, 4294901760
        %v2287 = vsub.f32 %v2285, %v2286
        %v2288 = vand.u32 %v2287, 4294901760
        %2289 = vmatpush1.msra.mxu0 %v2288
        %v2290 = vand.u32 %v480, 4294901760
        %v2291 = vsub.f32 %v480, %v2290
        %v2292 = vand.u32 %v2291, 4294901760
        %v2293 = vsub.f32 %v2291, %v2292
        %v2294 = vand.u32 %v2293, 4294901760
        %2295 = vmatprep.subr.mxu0 %v2294
        %v2296 = vand.u32 %v479, 4294901760
        %v2297 = vsub.f32 %v479, %v2296
        %v2298 = vand.u32 %v2297, 4294901760
        %v2299 = vsub.f32 %v2297, %v2298
        %v2300 = vand.u32 %v2299, 4294901760
        %2301 = vmatpush1.msra.mxu0 %v2300
        %v2302 = vand.u32 %v482, 4294901760
        %v2303 = vsub.f32 %v482, %v2302
        %v2304 = vand.u32 %v2303, 4294901760
        %v2305 = vsub.f32 %v2303, %v2304
        %v2306 = vand.u32 %v2305, 4294901760
        %2307 = vmatprep.subr.mxu0 %v2306
        %v2308 = vand.u32 %v481, 4294901760
        %v2309 = vsub.f32 %v481, %v2308
        %v2310 = vand.u32 %v2309, 4294901760
        %v2311 = vsub.f32 %v2309, %v2310
        %v2312 = vand.u32 %v2311, 4294901760
        %2313 = vmatpush1.msra.mxu0 %v2312
        %v2314 = vand.u32 %v484, 4294901760
        %v2315 = vsub.f32 %v484, %v2314
        %v2316 = vand.u32 %v2315, 4294901760
        %v2317 = vsub.f32 %v2315, %v2316
        %v2318 = vand.u32 %v2317, 4294901760
        %2319 = vmatprep.subr.mxu0 %v2318
        %v2320 = vand.u32 %v483, 4294901760
        %v2321 = vsub.f32 %v483, %v2320
        %v2322 = vand.u32 %v2321, 4294901760
        %v2323 = vsub.f32 %v2321, %v2322
        %v2324 = vand.u32 %v2323, 4294901760
        %2325 = vmatpush1.msra.mxu0 %v2324
        %v2326 = vand.u32 %v486, 4294901760
        %v2327 = vsub.f32 %v486, %v2326
        %v2328 = vand.u32 %v2327, 4294901760
        %v2329 = vsub.f32 %v2327, %v2328
        %v2330 = vand.u32 %v2329, 4294901760
        %2331 = vmatprep.subr.mxu0 %v2330
        %v2332 = vand.u32 %v485, 4294901760
        %v2333 = vsub.f32 %v485, %v2332
        %v2334 = vand.u32 %v2333, 4294901760
        %v2335 = vsub.f32 %v2333, %v2334
        %v2336 = vand.u32 %v2335, 4294901760
        %2337 = vmatpush1.msra.mxu0 %v2336
        %v2338 = vand.u32 %v488, 4294901760
        %v2339 = vsub.f32 %v488, %v2338
        %v2340 = vand.u32 %v2339, 4294901760
        %v2341 = vsub.f32 %v2339, %v2340
        %v2342 = vand.u32 %v2341, 4294901760
        %2343 = vmatprep.subr.mxu0 %v2342
        %v2344 = vand.u32 %v487, 4294901760
        %v2345 = vsub.f32 %v487, %v2344
        %v2346 = vand.u32 %v2345, 4294901760
        %v2347 = vsub.f32 %v2345, %v2346
        %v2348 = vand.u32 %v2347, 4294901760
        %2349 = vmatpush1.msra.mxu0 %v2348
        %v2350 = vand.u32 %v490, 4294901760
        %v2351 = vsub.f32 %v490, %v2350
        %v2352 = vand.u32 %v2351, 4294901760
        %v2353 = vsub.f32 %v2351, %v2352
        %v2354 = vand.u32 %v2353, 4294901760
        %2355 = vmatprep.subr.mxu0 %v2354
        %v2356 = vand.u32 %v489, 4294901760
        %v2357 = vsub.f32 %v489, %v2356
        %v2358 = vand.u32 %v2357, 4294901760
        %v2359 = vsub.f32 %v2357, %v2358
        %v2360 = vand.u32 %v2359, 4294901760
        %2361 = vmatpush1.msra.mxu0 %v2360
        %v2362 = vand.u32 %v492, 4294901760
        %v2363 = vsub.f32 %v492, %v2362
        %v2364 = vand.u32 %v2363, 4294901760
        %v2365 = vsub.f32 %v2363, %v2364
        %v2366 = vand.u32 %v2365, 4294901760
        %2367 = vmatprep.subr.mxu0 %v2366
        %v2368 = vand.u32 %v491, 4294901760
        %v2369 = vsub.f32 %v491, %v2368
        %v2370 = vand.u32 %v2369, 4294901760
        %v2371 = vsub.f32 %v2369, %v2370
        %v2372 = vand.u32 %v2371, 4294901760
        %2373 = vmatpush1.msra.mxu0 %v2372
        %v2374 = vand.u32 %v494, 4294901760
        %v2375 = vsub.f32 %v494, %v2374
        %v2376 = vand.u32 %v2375, 4294901760
        %v2377 = vsub.f32 %v2375, %v2376
        %v2378 = vand.u32 %v2377, 4294901760
        %2379 = vmatprep.subr.mxu0 %v2378
        %v2380 = vand.u32 %v493, 4294901760
        %v2381 = vsub.f32 %v493, %v2380
        %v2382 = vand.u32 %v2381, 4294901760
        %v2383 = vsub.f32 %v2381, %v2382
        %v2384 = vand.u32 %v2383, 4294901760
        %2385 = vmatpush1.msra.mxu0 %v2384
        %v2386 = vand.u32 %v496, 4294901760
        %v2387 = vsub.f32 %v496, %v2386
        %v2388 = vand.u32 %v2387, 4294901760
        %v2389 = vsub.f32 %v2387, %v2388
        %v2390 = vand.u32 %v2389, 4294901760
        %2391 = vmatprep.subr.mxu0 %v2390
        %v2392 = vand.u32 %v495, 4294901760
        %v2393 = vsub.f32 %v495, %v2392
        %v2394 = vand.u32 %v2393, 4294901760
        %v2395 = vsub.f32 %v2393, %v2394
        %v2396 = vand.u32 %v2395, 4294901760
        %2397 = vmatpush1.msra.mxu0 %v2396
        %v2398 = vand.u32 %v498, 4294901760
        %v2399 = vsub.f32 %v498, %v2398
        %v2400 = vand.u32 %v2399, 4294901760
        %v2401 = vsub.f32 %v2399, %v2400
        %v2402 = vand.u32 %v2401, 4294901760
        %2403 = vmatprep.subr.mxu0 %v2402
        %v2404 = vand.u32 %v497, 4294901760
        %v2405 = vsub.f32 %v497, %v2404
        %v2406 = vand.u32 %v2405, 4294901760
        %v2407 = vsub.f32 %v2405, %v2406
        %v2408 = vand.u32 %v2407, 4294901760
        %2409 = vmatpush1.msra.mxu0 %v2408
        %v2410 = vand.u32 %v500, 4294901760
        %v2411 = vsub.f32 %v500, %v2410
        %v2412 = vand.u32 %v2411, 4294901760
        %v2413 = vsub.f32 %v2411, %v2412
        %v2414 = vand.u32 %v2413, 4294901760
        %2415 = vmatprep.subr.mxu0 %v2414
        %v2416 = vand.u32 %v499, 4294901760
        %v2417 = vsub.f32 %v499, %v2416
        %v2418 = vand.u32 %v2417, 4294901760
        %v2419 = vsub.f32 %v2417, %v2418
        %v2420 = vand.u32 %v2419, 4294901760
        %2421 = vmatpush1.msra.mxu0 %v2420
        %v2422 = vand.u32 %v502, 4294901760
        %v2423 = vsub.f32 %v502, %v2422
        %v2424 = vand.u32 %v2423, 4294901760
        %v2425 = vsub.f32 %v2423, %v2424
        %v2426 = vand.u32 %v2425, 4294901760
        %2427 = vmatprep.subr.mxu0 %v2426
        %v2428 = vand.u32 %v501, 4294901760
        %v2429 = vsub.f32 %v501, %v2428
        %v2430 = vand.u32 %v2429, 4294901760
        %v2431 = vsub.f32 %v2429, %v2430
        %v2432 = vand.u32 %v2431, 4294901760
        %2433 = vmatpush1.msra.mxu0 %v2432
        %v2434 = vand.u32 %v504, 4294901760
        %v2435 = vsub.f32 %v504, %v2434
        %v2436 = vand.u32 %v2435, 4294901760
        %v2437 = vsub.f32 %v2435, %v2436
        %v2438 = vand.u32 %v2437, 4294901760
        %2439 = vmatprep.subr.mxu0 %v2438
        %v2440 = vand.u32 %v503, 4294901760
        %v2441 = vsub.f32 %v503, %v2440
        %v2442 = vand.u32 %v2441, 4294901760
        %v2443 = vsub.f32 %v2441, %v2442
        %v2444 = vand.u32 %v2443, 4294901760
        %2445 = vmatpush1.msra.mxu0 %v2444
        %v2446 = vand.u32 %v506, 4294901760
        %v2447 = vsub.f32 %v506, %v2446
        %v2448 = vand.u32 %v2447, 4294901760
        %v2449 = vsub.f32 %v2447, %v2448
        %v2450 = vand.u32 %v2449, 4294901760
        %2451 = vmatprep.subr.mxu0 %v2450
        %v2452 = vand.u32 %v505, 4294901760
        %v2453 = vsub.f32 %v505, %v2452
        %v2454 = vand.u32 %v2453, 4294901760
        %v2455 = vsub.f32 %v2453, %v2454
        %v2456 = vand.u32 %v2455, 4294901760
        %2457 = vmatpush1.msra.mxu0 %v2456
        %v2458 = vand.u32 %v508, 4294901760
        %v2459 = vsub.f32 %v508, %v2458
        %v2460 = vand.u32 %v2459, 4294901760
        %v2461 = vsub.f32 %v2459, %v2460
        %v2462 = vand.u32 %v2461, 4294901760
        %2463 = vmatprep.subr.mxu0 %v2462
        %v2464 = vand.u32 %v507, 4294901760
        %v2465 = vsub.f32 %v507, %v2464
        %v2466 = vand.u32 %v2465, 4294901760
        %v2467 = vsub.f32 %v2465, %v2466
        %v2468 = vand.u32 %v2467, 4294901760
        %2469 = vmatpush1.msra.mxu0 %v2468
        %v2470 = vand.u32 %v510, 4294901760
        %v2471 = vsub.f32 %v510, %v2470
        %v2472 = vand.u32 %v2471, 4294901760
        %v2473 = vsub.f32 %v2471, %v2472
        %v2474 = vand.u32 %v2473, 4294901760
        %2475 = vmatprep.subr.mxu0 %v2474
        %v2476 = vand.u32 %v509, 4294901760
        %v2477 = vsub.f32 %v509, %v2476
        %v2478 = vand.u32 %v2477, 4294901760
        %v2479 = vsub.f32 %v2477, %v2478
        %v2480 = vand.u32 %v2479, 4294901760
        %2481 = vmatpush1.msra.mxu0 %v2480
        %v2482 = vand.u32 %v662, 4294901760
        %2483 = vmatprep.mubr.f32.mxu0 %v2482
        %v2484 = vand.u32 %v654, 4294901760
        %2485 = vmatmul.mubr.f32.gmra.mrb[0].mxu0 %v2484
        %v2486 = vpop.f32.mrb[0].mxu0
        %v2487 = vadd.f32 %v2094, %v2486
        %v2488 = vpop.f32.mrb[0].mxu0
        %v2489 = vadd.f32 %v2096, %v2488
        %2490 = vdwg.mxu0
        %v2491 = vand.u32 %v448, 4294901760
        %v2492 = vsub.f32 %v448, %v2491
        %2493 = vmatprep.subr.mxu0 %v2492
        %v2494 = vand.u32 %v447, 4294901760
        %v2495 = vsub.f32 %v447, %v2494
        %2496 = vmatpush1.msra.mxu0 %v2495
        %v2497 = vand.u32 %v450, 4294901760
        %v2498 = vsub.f32 %v450, %v2497
        %2499 = vmatprep.subr.mxu0 %v2498
        %v2500 = vand.u32 %v449, 4294901760
        %v2501 = vsub.f32 %v449, %v2500
        %2502 = vmatpush1.msra.mxu0 %v2501
        %v2503 = vand.u32 %v452, 4294901760
        %v2504 = vsub.f32 %v452, %v2503
        %2505 = vmatprep.subr.mxu0 %v2504
        %v2506 = vand.u32 %v451, 4294901760
        %v2507 = vsub.f32 %v451, %v2506
        %2508 = vmatpush1.msra.mxu0 %v2507
        %v2509 = vand.u32 %v454, 4294901760
        %v2510 = vsub.f32 %v454, %v2509
        %2511 = vmatprep.subr.mxu0 %v2510
        %v2512 = vand.u32 %v453, 4294901760
        %v2513 = vsub.f32 %v453, %v2512
        %2514 = vmatpush1.msra.mxu0 %v2513
        %v2515 = vand.u32 %v456, 4294901760
        %v2516 = vsub.f32 %v456, %v2515
        %2517 = vmatprep.subr.mxu0 %v2516
        %v2518 = vand.u32 %v455, 4294901760
        %v2519 = vsub.f32 %v455, %v2518
        %2520 = vmatpush1.msra.mxu0 %v2519
        %v2521 = vand.u32 %v458, 4294901760
        %v2522 = vsub.f32 %v458, %v2521
        %2523 = vmatprep.subr.mxu0 %v2522
        %v2524 = vand.u32 %v457, 4294901760
        %v2525 = vsub.f32 %v457, %v2524
        %2526 = vmatpush1.msra.mxu0 %v2525
        %v2527 = vand.u32 %v460, 4294901760
        %v2528 = vsub.f32 %v460, %v2527
        %2529 = vmatprep.subr.mxu0 %v2528
        %v2530 = vand.u32 %v459, 4294901760
        %v2531 = vsub.f32 %v459, %v2530
        %2532 = vmatpush1.msra.mxu0 %v2531
        %v2533 = vand.u32 %v462, 4294901760
        %v2534 = vsub.f32 %v462, %v2533
        %2535 = vmatprep.subr.mxu0 %v2534
        %v2536 = vand.u32 %v461, 4294901760
        %v2537 = vsub.f32 %v461, %v2536
        %2538 = vmatpush1.msra.mxu0 %v2537
        %v2539 = vand.u32 %v464, 4294901760
        %v2540 = vsub.f32 %v464, %v2539
        %2541 = vmatprep.subr.mxu0 %v2540
        %v2542 = vand.u32 %v463, 4294901760
        %v2543 = vsub.f32 %v463, %v2542
        %2544 = vmatpush1.msra.mxu0 %v2543
        %v2545 = vand.u32 %v466, 4294901760
        %v2546 = vsub.f32 %v466, %v2545
        %2547 = vmatprep.subr.mxu0 %v2546
        %v2548 = vand.u32 %v465, 4294901760
        %v2549 = vsub.f32 %v465, %v2548
        %2550 = vmatpush1.msra.mxu0 %v2549
        %v2551 = vand.u32 %v468, 4294901760
        %v2552 = vsub.f32 %v468, %v2551
        %2553 = vmatprep.subr.mxu0 %v2552
        %v2554 = vand.u32 %v467, 4294901760
        %v2555 = vsub.f32 %v467, %v2554
        %2556 = vmatpush1.msra.mxu0 %v2555
        %v2557 = vand.u32 %v470, 4294901760
        %v2558 = vsub.f32 %v470, %v2557
        %2559 = vmatprep.subr.mxu0 %v2558
        %v2560 = vand.u32 %v469, 4294901760
        %v2561 = vsub.f32 %v469, %v2560
        %2562 = vmatpush1.msra.mxu0 %v2561
        %v2563 = vand.u32 %v472, 4294901760
        %v2564 = vsub.f32 %v472, %v2563
        %2565 = vmatprep.subr.mxu0 %v2564
        %v2566 = vand.u32 %v471, 4294901760
        %v2567 = vsub.f32 %v471, %v2566
        %2568 = vmatpush1.msra.mxu0 %v2567
        %v2569 = vand.u32 %v474, 4294901760
        %v2570 = vsub.f32 %v474, %v2569
        %2571 = vmatprep.subr.mxu0 %v2570
        %v2572 = vand.u32 %v473, 4294901760
        %v2573 = vsub.f32 %v473, %v2572
        %2574 = vmatpush1.msra.mxu0 %v2573
        %v2575 = vand.u32 %v476, 4294901760
        %v2576 = vsub.f32 %v476, %v2575
        %2577 = vmatprep.subr.mxu0 %v2576
        %v2578 = vand.u32 %v475, 4294901760
        %v2579 = vsub.f32 %v475, %v2578
        %2580 = vmatpush1.msra.mxu0 %v2579
        %v2581 = vand.u32 %v478, 4294901760
        %v2582 = vsub.f32 %v478, %v2581
        %2583 = vmatprep.subr.mxu0 %v2582
        %v2584 = vand.u32 %v477, 4294901760
        %v2585 = vsub.f32 %v477, %v2584
        %2586 = vmatpush1.msra.mxu0 %v2585
        %v2587 = vand.u32 %v480, 4294901760
        %v2588 = vsub.f32 %v480, %v2587
        %2589 = vmatprep.subr.mxu0 %v2588
        %v2590 = vand.u32 %v479, 4294901760
        %v2591 = vsub.f32 %v479, %v2590
        %2592 = vmatpush1.msra.mxu0 %v2591
        %v2593 = vand.u32 %v482, 4294901760
        %v2594 = vsub.f32 %v482, %v2593
        %2595 = vmatprep.subr.mxu0 %v2594
        %v2596 = vand.u32 %v481, 4294901760
        %v2597 = vsub.f32 %v481, %v2596
        %2598 = vmatpush1.msra.mxu0 %v2597
        %v2599 = vand.u32 %v484, 4294901760
        %v2600 = vsub.f32 %v484, %v2599
        %2601 = vmatprep.subr.mxu0 %v2600
        %v2602 = vand.u32 %v483, 4294901760
        %v2603 = vsub.f32 %v483, %v2602
        %2604 = vmatpush1.msra.mxu0 %v2603
        %v2605 = vand.u32 %v486, 4294901760
        %v2606 = vsub.f32 %v486, %v2605
        %2607 = vmatprep.subr.mxu0 %v2606
        %v2608 = vand.u32 %v485, 4294901760
        %v2609 = vsub.f32 %v485, %v2608
        %2610 = vmatpush1.msra.mxu0 %v2609
        %v2611 = vand.u32 %v488, 4294901760
        %v2612 = vsub.f32 %v488, %v2611
        %2613 = vmatprep.subr.mxu0 %v2612
        %v2614 = vand.u32 %v487, 4294901760
        %v2615 = vsub.f32 %v487, %v2614
        %2616 = vmatpush1.msra.mxu0 %v2615
        %v2617 = vand.u32 %v490, 4294901760
        %v2618 = vsub.f32 %v490, %v2617
        %2619 = vmatprep.subr.mxu0 %v2618
        %v2620 = vand.u32 %v489, 4294901760
        %v2621 = vsub.f32 %v489, %v2620
        %2622 = vmatpush1.msra.mxu0 %v2621
        %v2623 = vand.u32 %v492, 4294901760
        %v2624 = vsub.f32 %v492, %v2623
        %2625 = vmatprep.subr.mxu0 %v2624
        %v2626 = vand.u32 %v491, 4294901760
        %v2627 = vsub.f32 %v491, %v2626
        %2628 = vmatpush1.msra.mxu0 %v2627
        %v2629 = vand.u32 %v494, 4294901760
        %v2630 = vsub.f32 %v494, %v2629
        %2631 = vmatprep.subr.mxu0 %v2630
        %v2632 = vand.u32 %v493, 4294901760
        %v2633 = vsub.f32 %v493, %v2632
        %2634 = vmatpush1.msra.mxu0 %v2633
        %v2635 = vand.u32 %v496, 4294901760
        %v2636 = vsub.f32 %v496, %v2635
        %2637 = vmatprep.subr.mxu0 %v2636
        %v2638 = vand.u32 %v495, 4294901760
        %v2639 = vsub.f32 %v495, %v2638
        %2640 = vmatpush1.msra.mxu0 %v2639
        %v2641 = vand.u32 %v498, 4294901760
        %v2642 = vsub.f32 %v498, %v2641
        %2643 = vmatprep.subr.mxu0 %v2642
        %v2644 = vand.u32 %v497, 4294901760
        %v2645 = vsub.f32 %v497, %v2644
        %2646 = vmatpush1.msra.mxu0 %v2645
        %v2647 = vand.u32 %v500, 4294901760
        %v2648 = vsub.f32 %v500, %v2647
        %2649 = vmatprep.subr.mxu0 %v2648
        %v2650 = vand.u32 %v499, 4294901760
        %v2651 = vsub.f32 %v499, %v2650
        %2652 = vmatpush1.msra.mxu0 %v2651
        %v2653 = vand.u32 %v502, 4294901760
        %v2654 = vsub.f32 %v502, %v2653
        %2655 = vmatprep.subr.mxu0 %v2654
        %v2656 = vand.u32 %v501, 4294901760
        %v2657 = vsub.f32 %v501, %v2656
        %2658 = vmatpush1.msra.mxu0 %v2657
        %v2659 = vand.u32 %v504, 4294901760
        %v2660 = vsub.f32 %v504, %v2659
        %2661 = vmatprep.subr.mxu0 %v2660
        %v2662 = vand.u32 %v503, 4294901760
        %v2663 = vsub.f32 %v503, %v2662
        %2664 = vmatpush1.msra.mxu0 %v2663
        %v2665 = vand.u32 %v506, 4294901760
        %v2666 = vsub.f32 %v506, %v2665
        %2667 = vmatprep.subr.mxu0 %v2666
        %v2668 = vand.u32 %v505, 4294901760
        %v2669 = vsub.f32 %v505, %v2668
        %2670 = vmatpush1.msra.mxu0 %v2669
        %v2671 = vand.u32 %v508, 4294901760
        %v2672 = vsub.f32 %v508, %v2671
        %2673 = vmatprep.subr.mxu0 %v2672
        %v2674 = vand.u32 %v507, 4294901760
        %v2675 = vsub.f32 %v507, %v2674
        %2676 = vmatpush1.msra.mxu0 %v2675
        %v2677 = vand.u32 %v510, 4294901760
        %v2678 = vsub.f32 %v510, %v2677
        %2679 = vmatprep.subr.mxu0 %v2678
        %v2680 = vand.u32 %v509, 4294901760
        %v2681 = vsub.f32 %v509, %v2680
        %2682 = vmatpush1.msra.mxu0 %v2681
        %v2683 = vand.u32 %v662, 4294901760
        %v2684 = vsub.f32 %v662, %v2683
        %2685 = vmatprep.mubr.f32.mxu0 %v2684
        %v2686 = vand.u32 %v654, 4294901760
        %v2687 = vsub.f32 %v654, %v2686
        %2688 = vmatmul.mubr.f32.gmra.mrb[0].mxu0 %v2687
        %v2689 = vpop.f32.mrb[0].mxu0
        %v2690 = vadd.f32 %v2487, %v2689
        %v2691 = vpop.f32.mrb[0].mxu0
        %v2692 = vadd.f32 %v2489, %v2691
        %2693 = vdwg.mxu0
        %v2694 = vand.u32 %v448, 4294901760
        %2695 = vmatprep.subr.mxu0 %v2694
        %v2696 = vand.u32 %v447, 4294901760
        %2697 = vmatpush1.msra.mxu0 %v2696
        %v2698 = vand.u32 %v450, 4294901760
        %2699 = vmatprep.subr.mxu0 %v2698
        %v2700 = vand.u32 %v449, 4294901760
        %2701 = vmatpush1.msra.mxu0 %v2700
        %v2702 = vand.u32 %v452, 4294901760
        %2703 = vmatprep.subr.mxu0 %v2702
        %v2704 = vand.u32 %v451, 4294901760
        %2705 = vmatpush1.msra.mxu0 %v2704
        %v2706 = vand.u32 %v454, 4294901760
        %2707 = vmatprep.subr.mxu0 %v2706
        %v2708 = vand.u32 %v453, 4294901760
        %2709 = vmatpush1.msra.mxu0 %v2708
        %v2710 = vand.u32 %v456, 4294901760
        %2711 = vmatprep.subr.mxu0 %v2710
        %v2712 = vand.u32 %v455, 4294901760
        %2713 = vmatpush1.msra.mxu0 %v2712
        %v2714 = vand.u32 %v458, 4294901760
        %2715 = vmatprep.subr.mxu0 %v2714
        %v2716 = vand.u32 %v457, 4294901760
        %2717 = vmatpush1.msra.mxu0 %v2716
        %v2718 = vand.u32 %v460, 4294901760
        %2719 = vmatprep.subr.mxu0 %v2718
        %v2720 = vand.u32 %v459, 4294901760
        %2721 = vmatpush1.msra.mxu0 %v2720
        %v2722 = vand.u32 %v462, 4294901760
        %2723 = vmatprep.subr.mxu0 %v2722
        %v2724 = vand.u32 %v461, 4294901760
        %2725 = vmatpush1.msra.mxu0 %v2724
        %v2726 = vand.u32 %v464, 4294901760
        %2727 = vmatprep.subr.mxu0 %v2726
        %v2728 = vand.u32 %v463, 4294901760
        %2729 = vmatpush1.msra.mxu0 %v2728
        %v2730 = vand.u32 %v466, 4294901760
        %2731 = vmatprep.subr.mxu0 %v2730
        %v2732 = vand.u32 %v465, 4294901760
        %2733 = vmatpush1.msra.mxu0 %v2732
        %v2734 = vand.u32 %v468, 4294901760
        %2735 = vmatprep.subr.mxu0 %v2734
        %v2736 = vand.u32 %v467, 4294901760
        %2737 = vmatpush1.msra.mxu0 %v2736
        %v2738 = vand.u32 %v470, 4294901760
        %2739 = vmatprep.subr.mxu0 %v2738
        %v2740 = vand.u32 %v469, 4294901760
        %2741 = vmatpush1.msra.mxu0 %v2740
        %v2742 = vand.u32 %v472, 4294901760
        %2743 = vmatprep.subr.mxu0 %v2742
        %v2744 = vand.u32 %v471, 4294901760
        %2745 = vmatpush1.msra.mxu0 %v2744
        %v2746 = vand.u32 %v474, 4294901760
        %2747 = vmatprep.subr.mxu0 %v2746
        %v2748 = vand.u32 %v473, 4294901760
        %2749 = vmatpush1.msra.mxu0 %v2748
        %v2750 = vand.u32 %v476, 4294901760
        %2751 = vmatprep.subr.mxu0 %v2750
        %v2752 = vand.u32 %v475, 4294901760
        %2753 = vmatpush1.msra.mxu0 %v2752
        %v2754 = vand.u32 %v478, 4294901760
        %2755 = vmatprep.subr.mxu0 %v2754
        %v2756 = vand.u32 %v477, 4294901760
        %2757 = vmatpush1.msra.mxu0 %v2756
        %v2758 = vand.u32 %v480, 4294901760
        %2759 = vmatprep.subr.mxu0 %v2758
        %v2760 = vand.u32 %v479, 4294901760
        %2761 = vmatpush1.msra.mxu0 %v2760
        %v2762 = vand.u32 %v482, 4294901760
        %2763 = vmatprep.subr.mxu0 %v2762
        %v2764 = vand.u32 %v481, 4294901760
        %2765 = vmatpush1.msra.mxu0 %v2764
        %v2766 = vand.u32 %v484, 4294901760
        %2767 = vmatprep.subr.mxu0 %v2766
        %v2768 = vand.u32 %v483, 4294901760
        %2769 = vmatpush1.msra.mxu0 %v2768
        %v2770 = vand.u32 %v486, 4294901760
        %2771 = vmatprep.subr.mxu0 %v2770
        %v2772 = vand.u32 %v485, 4294901760
        %2773 = vmatpush1.msra.mxu0 %v2772
        %v2774 = vand.u32 %v488, 4294901760
        %2775 = vmatprep.subr.mxu0 %v2774
        %v2776 = vand.u32 %v487, 4294901760
        %2777 = vmatpush1.msra.mxu0 %v2776
        %v2778 = vand.u32 %v490, 4294901760
        %2779 = vmatprep.subr.mxu0 %v2778
        %v2780 = vand.u32 %v489, 4294901760
        %2781 = vmatpush1.msra.mxu0 %v2780
        %v2782 = vand.u32 %v492, 4294901760
        %2783 = vmatprep.subr.mxu0 %v2782
        %v2784 = vand.u32 %v491, 4294901760
        %2785 = vmatpush1.msra.mxu0 %v2784
        %v2786 = vand.u32 %v494, 4294901760
        %2787 = vmatprep.subr.mxu0 %v2786
        %v2788 = vand.u32 %v493, 4294901760
        %2789 = vmatpush1.msra.mxu0 %v2788
        %v2790 = vand.u32 %v496, 4294901760
        %2791 = vmatprep.subr.mxu0 %v2790
        %v2792 = vand.u32 %v495, 4294901760
        %2793 = vmatpush1.msra.mxu0 %v2792
        %v2794 = vand.u32 %v498, 4294901760
        %2795 = vmatprep.subr.mxu0 %v2794
        %v2796 = vand.u32 %v497, 4294901760
        %2797 = vmatpush1.msra.mxu0 %v2796
        %v2798 = vand.u32 %v500, 4294901760
        %2799 = vmatprep.subr.mxu0 %v2798
        %v2800 = vand.u32 %v499, 4294901760
        %2801 = vmatpush1.msra.mxu0 %v2800
        %v2802 = vand.u32 %v502, 4294901760
        %2803 = vmatprep.subr.mxu0 %v2802
        %v2804 = vand.u32 %v501, 4294901760
        %2805 = vmatpush1.msra.mxu0 %v2804
        %v2806 = vand.u32 %v504, 4294901760
        %2807 = vmatprep.subr.mxu0 %v2806
        %v2808 = vand.u32 %v503, 4294901760
        %2809 = vmatpush1.msra.mxu0 %v2808
        %v2810 = vand.u32 %v506, 4294901760
        %2811 = vmatprep.subr.mxu0 %v2810
        %v2812 = vand.u32 %v505, 4294901760
        %2813 = vmatpush1.msra.mxu0 %v2812
        %v2814 = vand.u32 %v508, 4294901760
        %2815 = vmatprep.subr.mxu0 %v2814
        %v2816 = vand.u32 %v507, 4294901760
        %2817 = vmatpush1.msra.mxu0 %v2816
        %v2818 = vand.u32 %v510, 4294901760
        %2819 = vmatprep.subr.mxu0 %v2818
        %v2820 = vand.u32 %v509, 4294901760
        %2821 = vmatpush1.msra.mxu0 %v2820
        %v2822 = vand.u32 %v662, 4294901760
        %v2823 = vsub.f32 %v662, %v2822
        %v2824 = vand.u32 %v2823, 4294901760
        %2825 = vmatprep.mubr.f32.mxu0 %v2824
        %v2826 = vand.u32 %v654, 4294901760
        %v2827 = vsub.f32 %v654, %v2826
        %v2828 = vand.u32 %v2827, 4294901760
        %2829 = vmatmul.mubr.f32.gmra.mrb[0].mxu0 %v2828
        %v2830 = vpop.f32.mrb[0].mxu0
        %v2831 = vadd.f32 %v2690, %v2830
        %v2832 = vpop.f32.mrb[0].mxu0
        %v2833 = vadd.f32 %v2692, %v2832
        %2834 = vdwg.mxu0
        %v2835 = vand.u32 %v448, 4294901760
        %v2836 = vsub.f32 %v448, %v2835
        %v2837 = vand.u32 %v2836, 4294901760
        %2838 = vmatprep.subr.mxu0 %v2837
        %v2839 = vand.u32 %v447, 4294901760
        %v2840 = vsub.f32 %v447, %v2839
        %v2841 = vand.u32 %v2840, 4294901760
        %2842 = vmatpush1.msra.mxu0 %v2841
        %v2843 = vand.u32 %v450, 4294901760
        %v2844 = vsub.f32 %v450, %v2843
        %v2845 = vand.u32 %v2844, 4294901760
        %2846 = vmatprep.subr.mxu0 %v2845
        %v2847 = vand.u32 %v449, 4294901760
        %v2848 = vsub.f32 %v449, %v2847
        %v2849 = vand.u32 %v2848, 4294901760
        %2850 = vmatpush1.msra.mxu0 %v2849
        %v2851 = vand.u32 %v452, 4294901760
        %v2852 = vsub.f32 %v452, %v2851
        %v2853 = vand.u32 %v2852, 4294901760
        %2854 = vmatprep.subr.mxu0 %v2853
        %v2855 = vand.u32 %v451, 4294901760
        %v2856 = vsub.f32 %v451, %v2855
        %v2857 = vand.u32 %v2856, 4294901760
        %2858 = vmatpush1.msra.mxu0 %v2857
        %v2859 = vand.u32 %v454, 4294901760
        %v2860 = vsub.f32 %v454, %v2859
        %v2861 = vand.u32 %v2860, 4294901760
        %2862 = vmatprep.subr.mxu0 %v2861
        %v2863 = vand.u32 %v453, 4294901760
        %v2864 = vsub.f32 %v453, %v2863
        %v2865 = vand.u32 %v2864, 4294901760
        %2866 = vmatpush1.msra.mxu0 %v2865
        %v2867 = vand.u32 %v456, 4294901760
        %v2868 = vsub.f32 %v456, %v2867
        %v2869 = vand.u32 %v2868, 4294901760
        %2870 = vmatprep.subr.mxu0 %v2869
        %v2871 = vand.u32 %v455, 4294901760
        %v2872 = vsub.f32 %v455, %v2871
        %v2873 = vand.u32 %v2872, 4294901760
        %2874 = vmatpush1.msra.mxu0 %v2873
        %v2875 = vand.u32 %v458, 4294901760
        %v2876 = vsub.f32 %v458, %v2875
        %v2877 = vand.u32 %v2876, 4294901760
        %2878 = vmatprep.subr.mxu0 %v2877
        %v2879 = vand.u32 %v457, 4294901760
        %v2880 = vsub.f32 %v457, %v2879
        %v2881 = vand.u32 %v2880, 4294901760
        %2882 = vmatpush1.msra.mxu0 %v2881
        %v2883 = vand.u32 %v460, 4294901760
        %v2884 = vsub.f32 %v460, %v2883
        %v2885 = vand.u32 %v2884, 4294901760
        %2886 = vmatprep.subr.mxu0 %v2885
        %v2887 = vand.u32 %v459, 4294901760
        %v2888 = vsub.f32 %v459, %v2887
        %v2889 = vand.u32 %v2888, 4294901760
        %2890 = vmatpush1.msra.mxu0 %v2889
        %v2891 = vand.u32 %v462, 4294901760
        %v2892 = vsub.f32 %v462, %v2891
        %v2893 = vand.u32 %v2892, 4294901760
        %2894 = vmatprep.subr.mxu0 %v2893
        %v2895 = vand.u32 %v461, 4294901760
        %v2896 = vsub.f32 %v461, %v2895
        %v2897 = vand.u32 %v2896, 4294901760
        %2898 = vmatpush1.msra.mxu0 %v2897
        %v2899 = vand.u32 %v464, 4294901760
        %v2900 = vsub.f32 %v464, %v2899
        %v2901 = vand.u32 %v2900, 4294901760
        %2902 = vmatprep.subr.mxu0 %v2901
        %v2903 = vand.u32 %v463, 4294901760
        %v2904 = vsub.f32 %v463, %v2903
        %v2905 = vand.u32 %v2904, 4294901760
        %2906 = vmatpush1.msra.mxu0 %v2905
        %v2907 = vand.u32 %v466, 4294901760
        %v2908 = vsub.f32 %v466, %v2907
        %v2909 = vand.u32 %v2908, 4294901760
        %2910 = vmatprep.subr.mxu0 %v2909
        %v2911 = vand.u32 %v465, 4294901760
        %v2912 = vsub.f32 %v465, %v2911
        %v2913 = vand.u32 %v2912, 4294901760
        %2914 = vmatpush1.msra.mxu0 %v2913
        %v2915 = vand.u32 %v468, 4294901760
        %v2916 = vsub.f32 %v468, %v2915
        %v2917 = vand.u32 %v2916, 4294901760
        %2918 = vmatprep.subr.mxu0 %v2917
        %v2919 = vand.u32 %v467, 4294901760
        %v2920 = vsub.f32 %v467, %v2919
        %v2921 = vand.u32 %v2920, 4294901760
        %2922 = vmatpush1.msra.mxu0 %v2921
        %v2923 = vand.u32 %v470, 4294901760
        %v2924 = vsub.f32 %v470, %v2923
        %v2925 = vand.u32 %v2924, 4294901760
        %2926 = vmatprep.subr.mxu0 %v2925
        %v2927 = vand.u32 %v469, 4294901760
        %v2928 = vsub.f32 %v469, %v2927
        %v2929 = vand.u32 %v2928, 4294901760
        %2930 = vmatpush1.msra.mxu0 %v2929
        %v2931 = vand.u32 %v472, 4294901760
        %v2932 = vsub.f32 %v472, %v2931
        %v2933 = vand.u32 %v2932, 4294901760
        %2934 = vmatprep.subr.mxu0 %v2933
        %v2935 = vand.u32 %v471, 4294901760
        %v2936 = vsub.f32 %v471, %v2935
        %v2937 = vand.u32 %v2936, 4294901760
        %2938 = vmatpush1.msra.mxu0 %v2937
        %v2939 = vand.u32 %v474, 4294901760
        %v2940 = vsub.f32 %v474, %v2939
        %v2941 = vand.u32 %v2940, 4294901760
        %2942 = vmatprep.subr.mxu0 %v2941
        %v2943 = vand.u32 %v473, 4294901760
        %v2944 = vsub.f32 %v473, %v2943
        %v2945 = vand.u32 %v2944, 4294901760
        %2946 = vmatpush1.msra.mxu0 %v2945
        %v2947 = vand.u32 %v476, 4294901760
        %v2948 = vsub.f32 %v476, %v2947
        %v2949 = vand.u32 %v2948, 4294901760
        %2950 = vmatprep.subr.mxu0 %v2949
        %v2951 = vand.u32 %v475, 4294901760
        %v2952 = vsub.f32 %v475, %v2951
        %v2953 = vand.u32 %v2952, 4294901760
        %2954 = vmatpush1.msra.mxu0 %v2953
        %v2955 = vand.u32 %v478, 4294901760
        %v2956 = vsub.f32 %v478, %v2955
        %v2957 = vand.u32 %v2956, 4294901760
        %2958 = vmatprep.subr.mxu0 %v2957
        %v2959 = vand.u32 %v477, 4294901760
        %v2960 = vsub.f32 %v477, %v2959
        %v2961 = vand.u32 %v2960, 4294901760
        %2962 = vmatpush1.msra.mxu0 %v2961
        %v2963 = vand.u32 %v480, 4294901760
        %v2964 = vsub.f32 %v480, %v2963
        %v2965 = vand.u32 %v2964, 4294901760
        %2966 = vmatprep.subr.mxu0 %v2965
        %v2967 = vand.u32 %v479, 4294901760
        %v2968 = vsub.f32 %v479, %v2967
        %v2969 = vand.u32 %v2968, 4294901760
        %2970 = vmatpush1.msra.mxu0 %v2969
        %v2971 = vand.u32 %v482, 4294901760
        %v2972 = vsub.f32 %v482, %v2971
        %v2973 = vand.u32 %v2972, 4294901760
        %2974 = vmatprep.subr.mxu0 %v2973
        %v2975 = vand.u32 %v481, 4294901760
        %v2976 = vsub.f32 %v481, %v2975
        %v2977 = vand.u32 %v2976, 4294901760
        %2978 = vmatpush1.msra.mxu0 %v2977
        %v2979 = vand.u32 %v484, 4294901760
        %v2980 = vsub.f32 %v484, %v2979
        %v2981 = vand.u32 %v2980, 4294901760
        %2982 = vmatprep.subr.mxu0 %v2981
        %v2983 = vand.u32 %v483, 4294901760
        %v2984 = vsub.f32 %v483, %v2983
        %v2985 = vand.u32 %v2984, 4294901760
        %2986 = vmatpush1.msra.mxu0 %v2985
        %v2987 = vand.u32 %v486, 4294901760
        %v2988 = vsub.f32 %v486, %v2987
        %v2989 = vand.u32 %v2988, 4294901760
        %2990 = vmatprep.subr.mxu0 %v2989
        %v2991 = vand.u32 %v485, 4294901760
        %v2992 = vsub.f32 %v485, %v2991
        %v2993 = vand.u32 %v2992, 4294901760
        %2994 = vmatpush1.msra.mxu0 %v2993
        %v2995 = vand.u32 %v488, 4294901760
        %v2996 = vsub.f32 %v488, %v2995
        %v2997 = vand.u32 %v2996, 4294901760
        %2998 = vmatprep.subr.mxu0 %v2997
        %v2999 = vand.u32 %v487, 4294901760
        %v3000 = vsub.f32 %v487, %v2999
        %v3001 = vand.u32 %v3000, 4294901760
        %3002 = vmatpush1.msra.mxu0 %v3001
        %v3003 = vand.u32 %v490, 4294901760
        %v3004 = vsub.f32 %v490, %v3003
        %v3005 = vand.u32 %v3004, 4294901760
        %3006 = vmatprep.subr.mxu0 %v3005
        %v3007 = vand.u32 %v489, 4294901760
        %v3008 = vsub.f32 %v489, %v3007
        %v3009 = vand.u32 %v3008, 4294901760
        %3010 = vmatpush1.msra.mxu0 %v3009
        %v3011 = vand.u32 %v492, 4294901760
        %v3012 = vsub.f32 %v492, %v3011
        %v3013 = vand.u32 %v3012, 4294901760
        %3014 = vmatprep.subr.mxu0 %v3013
        %v3015 = vand.u32 %v491, 4294901760
        %v3016 = vsub.f32 %v491, %v3015
        %v3017 = vand.u32 %v3016, 4294901760
        %3018 = vmatpush1.msra.mxu0 %v3017
        %v3019 = vand.u32 %v494, 4294901760
        %v3020 = vsub.f32 %v494, %v3019
        %v3021 = vand.u32 %v3020, 4294901760
        %3022 = vmatprep.subr.mxu0 %v3021
        %v3023 = vand.u32 %v493, 4294901760
        %v3024 = vsub.f32 %v493, %v3023
        %v3025 = vand.u32 %v3024, 4294901760
        %3026 = vmatpush1.msra.mxu0 %v3025
        %v3027 = vand.u32 %v496, 4294901760
        %v3028 = vsub.f32 %v496, %v3027
        %v3029 = vand.u32 %v3028, 4294901760
        %3030 = vmatprep.subr.mxu0 %v3029
        %v3031 = vand.u32 %v495, 4294901760
        %v3032 = vsub.f32 %v495, %v3031
        %v3033 = vand.u32 %v3032, 4294901760
        %3034 = vmatpush1.msra.mxu0 %v3033
        %v3035 = vand.u32 %v498, 4294901760
        %v3036 = vsub.f32 %v498, %v3035
        %v3037 = vand.u32 %v3036, 4294901760
        %3038 = vmatprep.subr.mxu0 %v3037
        %v3039 = vand.u32 %v497, 4294901760
        %v3040 = vsub.f32 %v497, %v3039
        %v3041 = vand.u32 %v3040, 4294901760
        %3042 = vmatpush1.msra.mxu0 %v3041
        %v3043 = vand.u32 %v500, 4294901760
        %v3044 = vsub.f32 %v500, %v3043
        %v3045 = vand.u32 %v3044, 4294901760
        %3046 = vmatprep.subr.mxu0 %v3045
        %v3047 = vand.u32 %v499, 4294901760
        %v3048 = vsub.f32 %v499, %v3047
        %v3049 = vand.u32 %v3048, 4294901760
        %3050 = vmatpush1.msra.mxu0 %v3049
        %v3051 = vand.u32 %v502, 4294901760
        %v3052 = vsub.f32 %v502, %v3051
        %v3053 = vand.u32 %v3052, 4294901760
        %3054 = vmatprep.subr.mxu0 %v3053
        %v3055 = vand.u32 %v501, 4294901760
        %v3056 = vsub.f32 %v501, %v3055
        %v3057 = vand.u32 %v3056, 4294901760
        %3058 = vmatpush1.msra.mxu0 %v3057
        %v3059 = vand.u32 %v504, 4294901760
        %v3060 = vsub.f32 %v504, %v3059
        %v3061 = vand.u32 %v3060, 4294901760
        %3062 = vmatprep.subr.mxu0 %v3061
        %v3063 = vand.u32 %v503, 4294901760
        %v3064 = vsub.f32 %v503, %v3063
        %v3065 = vand.u32 %v3064, 4294901760
        %3066 = vmatpush1.msra.mxu0 %v3065
        %v3067 = vand.u32 %v506, 4294901760
        %v3068 = vsub.f32 %v506, %v3067
        %v3069 = vand.u32 %v3068, 4294901760
        %3070 = vmatprep.subr.mxu0 %v3069
        %v3071 = vand.u32 %v505, 4294901760
        %v3072 = vsub.f32 %v505, %v3071
        %v3073 = vand.u32 %v3072, 4294901760
        %3074 = vmatpush1.msra.mxu0 %v3073
        %v3075 = vand.u32 %v508, 4294901760
        %v3076 = vsub.f32 %v508, %v3075
        %v3077 = vand.u32 %v3076, 4294901760
        %3078 = vmatprep.subr.mxu0 %v3077
        %v3079 = vand.u32 %v507, 4294901760
        %v3080 = vsub.f32 %v507, %v3079
        %v3081 = vand.u32 %v3080, 4294901760
        %3082 = vmatpush1.msra.mxu0 %v3081
        %v3083 = vand.u32 %v510, 4294901760
        %v3084 = vsub.f32 %v510, %v3083
        %v3085 = vand.u32 %v3084, 4294901760
        %3086 = vmatprep.subr.mxu0 %v3085
        %v3087 = vand.u32 %v509, 4294901760
        %v3088 = vsub.f32 %v509, %v3087
        %v3089 = vand.u32 %v3088, 4294901760
        %3090 = vmatpush1.msra.mxu0 %v3089
        %v3091 = vand.u32 %v662, 4294901760
        %3092 = vmatprep.mubr.f32.mxu0 %v3091
        %v3093 = vand.u32 %v654, 4294901760
        %3094 = vmatmul.mubr.f32.gmra.mrb[0].mxu0 %v3093
        %v3095 = vpop.f32.mrb[0].mxu0
        %v3096 = vadd.f32 %v2831, %v3095
        %v3097 = vpop.f32.mrb[0].mxu0
        %v3098 = vadd.f32 %v2833, %v3097
        %3099 = vdwg.mxu0
        %v3100 = vand.u32 %v448, 4294901760
        %3101 = vmatprep.subr.mxu0 %v3100
        %v3102 = vand.u32 %v447, 4294901760
        %3103 = vmatpush1.msra.mxu0 %v3102
        %v3104 = vand.u32 %v450, 4294901760
        %3105 = vmatprep.subr.mxu0 %v3104
        %v3106 = vand.u32 %v449, 4294901760
        %3107 = vmatpush1.msra.mxu0 %v3106
        %v3108 = vand.u32 %v452, 4294901760
        %3109 = vmatprep.subr.mxu0 %v3108
        %v3110 = vand.u32 %v451, 4294901760
        %3111 = vmatpush1.msra.mxu0 %v3110
        %v3112 = vand.u32 %v454, 4294901760
        %3113 = vmatprep.subr.mxu0 %v3112
        %v3114 = vand.u32 %v453, 4294901760
        %3115 = vmatpush1.msra.mxu0 %v3114
        %v3116 = vand.u32 %v456, 4294901760
        %3117 = vmatprep.subr.mxu0 %v3116
        %v3118 = vand.u32 %v455, 4294901760
        %3119 = vmatpush1.msra.mxu0 %v3118
        %v3120 = vand.u32 %v458, 4294901760
        %3121 = vmatprep.subr.mxu0 %v3120
        %v3122 = vand.u32 %v457, 4294901760
        %3123 = vmatpush1.msra.mxu0 %v3122
        %v3124 = vand.u32 %v460, 4294901760
        %3125 = vmatprep.subr.mxu0 %v3124
        %v3126 = vand.u32 %v459, 4294901760
        %3127 = vmatpush1.msra.mxu0 %v3126
        %v3128 = vand.u32 %v462, 4294901760
        %3129 = vmatprep.subr.mxu0 %v3128
        %v3130 = vand.u32 %v461, 4294901760
        %3131 = vmatpush1.msra.mxu0 %v3130
        %v3132 = vand.u32 %v464, 4294901760
        %3133 = vmatprep.subr.mxu0 %v3132
        %v3134 = vand.u32 %v463, 4294901760
        %3135 = vmatpush1.msra.mxu0 %v3134
        %v3136 = vand.u32 %v466, 4294901760
        %3137 = vmatprep.subr.mxu0 %v3136
        %v3138 = vand.u32 %v465, 4294901760
        %3139 = vmatpush1.msra.mxu0 %v3138
        %v3140 = vand.u32 %v468, 4294901760
        %3141 = vmatprep.subr.mxu0 %v3140
        %v3142 = vand.u32 %v467, 4294901760
        %3143 = vmatpush1.msra.mxu0 %v3142
        %v3144 = vand.u32 %v470, 4294901760
        %3145 = vmatprep.subr.mxu0 %v3144
        %v3146 = vand.u32 %v469, 4294901760
        %3147 = vmatpush1.msra.mxu0 %v3146
        %v3148 = vand.u32 %v472, 4294901760
        %3149 = vmatprep.subr.mxu0 %v3148
        %v3150 = vand.u32 %v471, 4294901760
        %3151 = vmatpush1.msra.mxu0 %v3150
        %v3152 = vand.u32 %v474, 4294901760
        %3153 = vmatprep.subr.mxu0 %v3152
        %v3154 = vand.u32 %v473, 4294901760
        %3155 = vmatpush1.msra.mxu0 %v3154
        %v3156 = vand.u32 %v476, 4294901760
        %3157 = vmatprep.subr.mxu0 %v3156
        %v3158 = vand.u32 %v475, 4294901760
        %3159 = vmatpush1.msra.mxu0 %v3158
        %v3160 = vand.u32 %v478, 4294901760
        %3161 = vmatprep.subr.mxu0 %v3160
        %v3162 = vand.u32 %v477, 4294901760
        %3163 = vmatpush1.msra.mxu0 %v3162
        %v3164 = vand.u32 %v480, 4294901760
        %3165 = vmatprep.subr.mxu0 %v3164
        %v3166 = vand.u32 %v479, 4294901760
        %3167 = vmatpush1.msra.mxu0 %v3166
        %v3168 = vand.u32 %v482, 4294901760
        %3169 = vmatprep.subr.mxu0 %v3168
        %v3170 = vand.u32 %v481, 4294901760
        %3171 = vmatpush1.msra.mxu0 %v3170
        %v3172 = vand.u32 %v484, 4294901760
        %3173 = vmatprep.subr.mxu0 %v3172
        %v3174 = vand.u32 %v483, 4294901760
        %3175 = vmatpush1.msra.mxu0 %v3174
        %v3176 = vand.u32 %v486, 4294901760
        %3177 = vmatprep.subr.mxu0 %v3176
        %v3178 = vand.u32 %v485, 4294901760
        %3179 = vmatpush1.msra.mxu0 %v3178
        %v3180 = vand.u32 %v488, 4294901760
        %3181 = vmatprep.subr.mxu0 %v3180
        %v3182 = vand.u32 %v487, 4294901760
        %3183 = vmatpush1.msra.mxu0 %v3182
        %v3184 = vand.u32 %v490, 4294901760
        %3185 = vmatprep.subr.mxu0 %v3184
        %v3186 = vand.u32 %v489, 4294901760
        %3187 = vmatpush1.msra.mxu0 %v3186
        %v3188 = vand.u32 %v492, 4294901760
        %3189 = vmatprep.subr.mxu0 %v3188
        %v3190 = vand.u32 %v491, 4294901760
        %3191 = vmatpush1.msra.mxu0 %v3190
        %v3192 = vand.u32 %v494, 4294901760
        %3193 = vmatprep.subr.mxu0 %v3192
        %v3194 = vand.u32 %v493, 4294901760
        %3195 = vmatpush1.msra.mxu0 %v3194
        %v3196 = vand.u32 %v496, 4294901760
        %3197 = vmatprep.subr.mxu0 %v3196
        %v3198 = vand.u32 %v495, 4294901760
        %3199 = vmatpush1.msra.mxu0 %v3198
        %v3200 = vand.u32 %v498, 4294901760
        %3201 = vmatprep.subr.mxu0 %v3200
        %v3202 = vand.u32 %v497, 4294901760
        %3203 = vmatpush1.msra.mxu0 %v3202
        %v3204 = vand.u32 %v500, 4294901760
        %3205 = vmatprep.subr.mxu0 %v3204
        %v3206 = vand.u32 %v499, 4294901760
        %3207 = vmatpush1.msra.mxu0 %v3206
        %v3208 = vand.u32 %v502, 4294901760
        %3209 = vmatprep.subr.mxu0 %v3208
        %v3210 = vand.u32 %v501, 4294901760
        %3211 = vmatpush1.msra.mxu0 %v3210
        %v3212 = vand.u32 %v504, 4294901760
        %3213 = vmatprep.subr.mxu0 %v3212
        %v3214 = vand.u32 %v503, 4294901760
        %3215 = vmatpush1.msra.mxu0 %v3214
        %v3216 = vand.u32 %v506, 4294901760
        %3217 = vmatprep.subr.mxu0 %v3216
        %v3218 = vand.u32 %v505, 4294901760
        %3219 = vmatpush1.msra.mxu0 %v3218
        %v3220 = vand.u32 %v508, 4294901760
        %3221 = vmatprep.subr.mxu0 %v3220
        %v3222 = vand.u32 %v507, 4294901760
        %3223 = vmatpush1.msra.mxu0 %v3222
        %v3224 = vand.u32 %v510, 4294901760
        %3225 = vmatprep.subr.mxu0 %v3224
        %v3226 = vand.u32 %v509, 4294901760
        %3227 = vmatpush1.msra.mxu0 %v3226
        %v3228 = vand.u32 %v662, 4294901760
        %3229 = vmatprep.mubr.f32.mxu0 %v3228
        %v3230 = vand.u32 %v654, 4294901760
        %3231 = vmatmul.mubr.f32.gmra.mrb[0].mxu0 %v3230
        %v3232 = vpop.f32.mrb[0].mxu0
        %v3233 = vadd.f32 %v3096, %v3232
        %v3234 = vpop.f32.mrb[0].mxu0
        %v3235 = vadd.f32 %v3098, %v3234
        %3236 = vdwg.mxu0
        %v3237 = vand.u32 %v512, 4294901760
        %3238 = vmatprep.subr.mxu0 %v3237
        %v3239 = vand.u32 %v511, 4294901760
        %3240 = vmatpush1.msra.mxu0 %v3239
        %v3241 = vand.u32 %v514, 4294901760
        %3242 = vmatprep.subr.mxu0 %v3241
        %v3243 = vand.u32 %v513, 4294901760
        %3244 = vmatpush1.msra.mxu0 %v3243
        %v3245 = vand.u32 %v516, 4294901760
        %3246 = vmatprep.subr.mxu0 %v3245
        %v3247 = vand.u32 %v515, 4294901760
        %3248 = vmatpush1.msra.mxu0 %v3247
        %v3249 = vand.u32 %v518, 4294901760
        %3250 = vmatprep.subr.mxu0 %v3249
        %v3251 = vand.u32 %v517, 4294901760
        %3252 = vmatpush1.msra.mxu0 %v3251
        %v3253 = vand.u32 %v520, 4294901760
        %3254 = vmatprep.subr.mxu0 %v3253
        %v3255 = vand.u32 %v519, 4294901760
        %3256 = vmatpush1.msra.mxu0 %v3255
        %v3257 = vand.u32 %v522, 4294901760
        %3258 = vmatprep.subr.mxu0 %v3257
        %v3259 = vand.u32 %v521, 4294901760
        %3260 = vmatpush1.msra.mxu0 %v3259
        %v3261 = vand.u32 %v524, 4294901760
        %3262 = vmatprep.subr.mxu0 %v3261
        %v3263 = vand.u32 %v523, 4294901760
        %3264 = vmatpush1.msra.mxu0 %v3263
        %v3265 = vand.u32 %v526, 4294901760
        %3266 = vmatprep.subr.mxu0 %v3265
        %v3267 = vand.u32 %v525, 4294901760
        %3268 = vmatpush1.msra.mxu0 %v3267
        %v3269 = vand.u32 %v528, 4294901760
        %3270 = vmatprep.subr.mxu0 %v3269
        %v3271 = vand.u32 %v527, 4294901760
        %3272 = vmatpush1.msra.mxu0 %v3271
        %v3273 = vand.u32 %v530, 4294901760
        %3274 = vmatprep.subr.mxu0 %v3273
        %v3275 = vand.u32 %v529, 4294901760
        %3276 = vmatpush1.msra.mxu0 %v3275
        %v3277 = vand.u32 %v532, 4294901760
        %3278 = vmatprep.subr.mxu0 %v3277
        %v3279 = vand.u32 %v531, 4294901760
        %3280 = vmatpush1.msra.mxu0 %v3279
        %v3281 = vand.u32 %v534, 4294901760
        %3282 = vmatprep.subr.mxu0 %v3281
        %v3283 = vand.u32 %v533, 4294901760
        %3284 = vmatpush1.msra.mxu0 %v3283
        %v3285 = vand.u32 %v536, 4294901760
        %3286 = vmatprep.subr.mxu0 %v3285
        %v3287 = vand.u32 %v535, 4294901760
        %3288 = vmatpush1.msra.mxu0 %v3287
        %v3289 = vand.u32 %v538, 4294901760
        %3290 = vmatprep.subr.mxu0 %v3289
        %v3291 = vand.u32 %v537, 4294901760
        %3292 = vmatpush1.msra.mxu0 %v3291
        %v3293 = vand.u32 %v540, 4294901760
        %3294 = vmatprep.subr.mxu0 %v3293
        %v3295 = vand.u32 %v539, 4294901760
        %3296 = vmatpush1.msra.mxu0 %v3295
        %v3297 = vand.u32 %v542, 4294901760
        %3298 = vmatprep.subr.mxu0 %v3297
        %v3299 = vand.u32 %v541, 4294901760
        %3300 = vmatpush1.msra.mxu0 %v3299
        %v3301 = vand.u32 %v544, 4294901760
        %3302 = vmatprep.subr.mxu0 %v3301
        %v3303 = vand.u32 %v543, 4294901760
        %3304 = vmatpush1.msra.mxu0 %v3303
        %v3305 = vand.u32 %v546, 4294901760
        %3306 = vmatprep.subr.mxu0 %v3305
        %v3307 = vand.u32 %v545, 4294901760
        %3308 = vmatpush1.msra.mxu0 %v3307
        %v3309 = vand.u32 %v548, 4294901760
        %3310 = vmatprep.subr.mxu0 %v3309
        %v3311 = vand.u32 %v547, 4294901760
        %3312 = vmatpush1.msra.mxu0 %v3311
        %v3313 = vand.u32 %v550, 4294901760
        %3314 = vmatprep.subr.mxu0 %v3313
        %v3315 = vand.u32 %v549, 4294901760
        %3316 = vmatpush1.msra.mxu0 %v3315
        %v3317 = vand.u32 %v552, 4294901760
        %3318 = vmatprep.subr.mxu0 %v3317
        %v3319 = vand.u32 %v551, 4294901760
        %3320 = vmatpush1.msra.mxu0 %v3319
        %v3321 = vand.u32 %v554, 4294901760
        %3322 = vmatprep.subr.mxu0 %v3321
        %v3323 = vand.u32 %v553, 4294901760
        %3324 = vmatpush1.msra.mxu0 %v3323
        %v3325 = vand.u32 %v556, 4294901760
        %3326 = vmatprep.subr.mxu0 %v3325
        %v3327 = vand.u32 %v555, 4294901760
        %3328 = vmatpush1.msra.mxu0 %v3327
        %v3329 = vand.u32 %v558, 4294901760
        %3330 = vmatprep.subr.mxu0 %v3329
        %v3331 = vand.u32 %v557, 4294901760
        %3332 = vmatpush1.msra.mxu0 %v3331
        %v3333 = vand.u32 %v560, 4294901760
        %3334 = vmatprep.subr.mxu0 %v3333
        %v3335 = vand.u32 %v559, 4294901760
        %3336 = vmatpush1.msra.mxu0 %v3335
        %v3337 = vand.u32 %v562, 4294901760
        %3338 = vmatprep.subr.mxu0 %v3337
        %v3339 = vand.u32 %v561, 4294901760
        %3340 = vmatpush1.msra.mxu0 %v3339
        %v3341 = vand.u32 %v564, 4294901760
        %3342 = vmatprep.subr.mxu0 %v3341
        %v3343 = vand.u32 %v563, 4294901760
        %3344 = vmatpush1.msra.mxu0 %v3343
        %v3345 = vand.u32 %v566, 4294901760
        %3346 = vmatprep.subr.mxu0 %v3345
        %v3347 = vand.u32 %v565, 4294901760
        %3348 = vmatpush1.msra.mxu0 %v3347
        %v3349 = vand.u32 %v568, 4294901760
        %3350 = vmatprep.subr.mxu0 %v3349
        %v3351 = vand.u32 %v567, 4294901760
        %3352 = vmatpush1.msra.mxu0 %v3351
        %v3353 = vand.u32 %v570, 4294901760
        %3354 = vmatprep.subr.mxu0 %v3353
        %v3355 = vand.u32 %v569, 4294901760
        %3356 = vmatpush1.msra.mxu0 %v3355
        %v3357 = vand.u32 %v572, 4294901760
        %3358 = vmatprep.subr.mxu0 %v3357
        %v3359 = vand.u32 %v571, 4294901760
        %3360 = vmatpush1.msra.mxu0 %v3359
        %v3361 = vand.u32 %v574, 4294901760
        %3362 = vmatprep.subr.mxu0 %v3361
        %v3363 = vand.u32 %v573, 4294901760
        %3364 = vmatpush1.msra.mxu0 %v3363
        %v3365 = vand.u32 %v663, 4294901760
        %v3366 = vsub.f32 %v663, %v3365
        %v3367 = vand.u32 %v3366, 4294901760
        %v3368 = vsub.f32 %v3366, %v3367
        %v3369 = vand.u32 %v3368, 4294901760
        %3370 = vmatprep.mubr.f32.mxu0 %v3369
        %v3371 = vand.u32 %v655, 4294901760
        %v3372 = vsub.f32 %v655, %v3371
        %v3373 = vand.u32 %v3372, 4294901760
        %v3374 = vsub.f32 %v3372, %v3373
        %v3375 = vand.u32 %v3374, 4294901760
        %3376 = vmatmul.mubr.f32.gmra.mrb[0].mxu0 %v3375
        %v3377 = vpop.f32.mrb[0].mxu0
        %v3378 = vadd.f32 %v3233, %v3377
        %v3379 = vpop.f32.mrb[0].mxu0
        %v3380 = vadd.f32 %v3235, %v3379
        %3381 = vdwg.mxu0
        %v3382 = vand.u32 %v512, 4294901760
        %v3383 = vsub.f32 %v512, %v3382
        %v3384 = vand.u32 %v3383, 4294901760
        %v3385 = vsub.f32 %v3383, %v3384
        %v3386 = vand.u32 %v3385, 4294901760
        %3387 = vmatprep.subr.mxu0 %v3386
        %v3388 = vand.u32 %v511, 4294901760
        %v3389 = vsub.f32 %v511, %v3388
        %v3390 = vand.u32 %v3389, 4294901760
        %v3391 = vsub.f32 %v3389, %v3390
        %v3392 = vand.u32 %v3391, 4294901760
        %3393 = vmatpush1.msra.mxu0 %v3392
        %v3394 = vand.u32 %v514, 4294901760
        %v3395 = vsub.f32 %v514, %v3394
        %v3396 = vand.u32 %v3395, 4294901760
        %v3397 = vsub.f32 %v3395, %v3396
        %v3398 = vand.u32 %v3397, 4294901760
        %3399 = vmatprep.subr.mxu0 %v3398
        %v3400 = vand.u32 %v513, 4294901760
        %v3401 = vsub.f32 %v513, %v3400
        %v3402 = vand.u32 %v3401, 4294901760
        %v3403 = vsub.f32 %v3401, %v3402
        %v3404 = vand.u32 %v3403, 4294901760
        %3405 = vmatpush1.msra.mxu0 %v3404
        %v3406 = vand.u32 %v516, 4294901760
        %v3407 = vsub.f32 %v516, %v3406
        %v3408 = vand.u32 %v3407, 4294901760
        %v3409 = vsub.f32 %v3407, %v3408
        %v3410 = vand.u32 %v3409, 4294901760
        %3411 = vmatprep.subr.mxu0 %v3410
        %v3412 = vand.u32 %v515, 4294901760
        %v3413 = vsub.f32 %v515, %v3412
        %v3414 = vand.u32 %v3413, 4294901760
        %v3415 = vsub.f32 %v3413, %v3414
        %v3416 = vand.u32 %v3415, 4294901760
        %3417 = vmatpush1.msra.mxu0 %v3416
        %v3418 = vand.u32 %v518, 4294901760
        %v3419 = vsub.f32 %v518, %v3418
        %v3420 = vand.u32 %v3419, 4294901760
        %v3421 = vsub.f32 %v3419, %v3420
        %v3422 = vand.u32 %v3421, 4294901760
        %3423 = vmatprep.subr.mxu0 %v3422
        %v3424 = vand.u32 %v517, 4294901760
        %v3425 = vsub.f32 %v517, %v3424
        %v3426 = vand.u32 %v3425, 4294901760
        %v3427 = vsub.f32 %v3425, %v3426
        %v3428 = vand.u32 %v3427, 4294901760
        %3429 = vmatpush1.msra.mxu0 %v3428
        %v3430 = vand.u32 %v520, 4294901760
        %v3431 = vsub.f32 %v520, %v3430
        %v3432 = vand.u32 %v3431, 4294901760
        %v3433 = vsub.f32 %v3431, %v3432
        %v3434 = vand.u32 %v3433, 4294901760
        %3435 = vmatprep.subr.mxu0 %v3434
        %v3436 = vand.u32 %v519, 4294901760
        %v3437 = vsub.f32 %v519, %v3436
        %v3438 = vand.u32 %v3437, 4294901760
        %v3439 = vsub.f32 %v3437, %v3438
        %v3440 = vand.u32 %v3439, 4294901760
        %3441 = vmatpush1.msra.mxu0 %v3440
        %v3442 = vand.u32 %v522, 4294901760
        %v3443 = vsub.f32 %v522, %v3442
        %v3444 = vand.u32 %v3443, 4294901760
        %v3445 = vsub.f32 %v3443, %v3444
        %v3446 = vand.u32 %v3445, 4294901760
        %3447 = vmatprep.subr.mxu0 %v3446
        %v3448 = vand.u32 %v521, 4294901760
        %v3449 = vsub.f32 %v521, %v3448
        %v3450 = vand.u32 %v3449, 4294901760
        %v3451 = vsub.f32 %v3449, %v3450
        %v3452 = vand.u32 %v3451, 4294901760
        %3453 = vmatpush1.msra.mxu0 %v3452
        %v3454 = vand.u32 %v524, 4294901760
        %v3455 = vsub.f32 %v524, %v3454
        %v3456 = vand.u32 %v3455, 4294901760
        %v3457 = vsub.f32 %v3455, %v3456
        %v3458 = vand.u32 %v3457, 4294901760
        %3459 = vmatprep.subr.mxu0 %v3458
        %v3460 = vand.u32 %v523, 4294901760
        %v3461 = vsub.f32 %v523, %v3460
        %v3462 = vand.u32 %v3461, 4294901760
        %v3463 = vsub.f32 %v3461, %v3462
        %v3464 = vand.u32 %v3463, 4294901760
        %3465 = vmatpush1.msra.mxu0 %v3464
        %v3466 = vand.u32 %v526, 4294901760
        %v3467 = vsub.f32 %v526, %v3466
        %v3468 = vand.u32 %v3467, 4294901760
        %v3469 = vsub.f32 %v3467, %v3468
        %v3470 = vand.u32 %v3469, 4294901760
        %3471 = vmatprep.subr.mxu0 %v3470
        %v3472 = vand.u32 %v525, 4294901760
        %v3473 = vsub.f32 %v525, %v3472
        %v3474 = vand.u32 %v3473, 4294901760
        %v3475 = vsub.f32 %v3473, %v3474
        %v3476 = vand.u32 %v3475, 4294901760
        %3477 = vmatpush1.msra.mxu0 %v3476
        %v3478 = vand.u32 %v528, 4294901760
        %v3479 = vsub.f32 %v528, %v3478
        %v3480 = vand.u32 %v3479, 4294901760
        %v3481 = vsub.f32 %v3479, %v3480
        %v3482 = vand.u32 %v3481, 4294901760
        %3483 = vmatprep.subr.mxu0 %v3482
        %v3484 = vand.u32 %v527, 4294901760
        %v3485 = vsub.f32 %v527, %v3484
        %v3486 = vand.u32 %v3485, 4294901760
        %v3487 = vsub.f32 %v3485, %v3486
        %v3488 = vand.u32 %v3487, 4294901760
        %3489 = vmatpush1.msra.mxu0 %v3488
        %v3490 = vand.u32 %v530, 4294901760
        %v3491 = vsub.f32 %v530, %v3490
        %v3492 = vand.u32 %v3491, 4294901760
        %v3493 = vsub.f32 %v3491, %v3492
        %v3494 = vand.u32 %v3493, 4294901760
        %3495 = vmatprep.subr.mxu0 %v3494
        %v3496 = vand.u32 %v529, 4294901760
        %v3497 = vsub.f32 %v529, %v3496
        %v3498 = vand.u32 %v3497, 4294901760
        %v3499 = vsub.f32 %v3497, %v3498
        %v3500 = vand.u32 %v3499, 4294901760
        %3501 = vmatpush1.msra.mxu0 %v3500
        %v3502 = vand.u32 %v532, 4294901760
        %v3503 = vsub.f32 %v532, %v3502
        %v3504 = vand.u32 %v3503, 4294901760
        %v3505 = vsub.f32 %v3503, %v3504
        %v3506 = vand.u32 %v3505, 4294901760
        %3507 = vmatprep.subr.mxu0 %v3506
        %v3508 = vand.u32 %v531, 4294901760
        %v3509 = vsub.f32 %v531, %v3508
        %v3510 = vand.u32 %v3509, 4294901760
        %v3511 = vsub.f32 %v3509, %v3510
        %v3512 = vand.u32 %v3511, 4294901760
        %3513 = vmatpush1.msra.mxu0 %v3512
        %v3514 = vand.u32 %v534, 4294901760
        %v3515 = vsub.f32 %v534, %v3514
        %v3516 = vand.u32 %v3515, 4294901760
        %v3517 = vsub.f32 %v3515, %v3516
        %v3518 = vand.u32 %v3517, 4294901760
        %3519 = vmatprep.subr.mxu0 %v3518
        %v3520 = vand.u32 %v533, 4294901760
        %v3521 = vsub.f32 %v533, %v3520
        %v3522 = vand.u32 %v3521, 4294901760
        %v3523 = vsub.f32 %v3521, %v3522
        %v3524 = vand.u32 %v3523, 4294901760
        %3525 = vmatpush1.msra.mxu0 %v3524
        %v3526 = vand.u32 %v536, 4294901760
        %v3527 = vsub.f32 %v536, %v3526
        %v3528 = vand.u32 %v3527, 4294901760
        %v3529 = vsub.f32 %v3527, %v3528
        %v3530 = vand.u32 %v3529, 4294901760
        %3531 = vmatprep.subr.mxu0 %v3530
        %v3532 = vand.u32 %v535, 4294901760
        %v3533 = vsub.f32 %v535, %v3532
        %v3534 = vand.u32 %v3533, 4294901760
        %v3535 = vsub.f32 %v3533, %v3534
        %v3536 = vand.u32 %v3535, 4294901760
        %3537 = vmatpush1.msra.mxu0 %v3536
        %v3538 = vand.u32 %v538, 4294901760
        %v3539 = vsub.f32 %v538, %v3538
        %v3540 = vand.u32 %v3539, 4294901760
        %v3541 = vsub.f32 %v3539, %v3540
        %v3542 = vand.u32 %v3541, 4294901760
        %3543 = vmatprep.subr.mxu0 %v3542
        %v3544 = vand.u32 %v537, 4294901760
        %v3545 = vsub.f32 %v537, %v3544
        %v3546 = vand.u32 %v3545, 4294901760
        %v3547 = vsub.f32 %v3545, %v3546
        %v3548 = vand.u32 %v3547, 4294901760
        %3549 = vmatpush1.msra.mxu0 %v3548
        %v3550 = vand.u32 %v540, 4294901760
        %v3551 = vsub.f32 %v540, %v3550
        %v3552 = vand.u32 %v3551, 4294901760
        %v3553 = vsub.f32 %v3551, %v3552
        %v3554 = vand.u32 %v3553, 4294901760
        %3555 = vmatprep.subr.mxu0 %v3554
        %v3556 = vand.u32 %v539, 4294901760
        %v3557 = vsub.f32 %v539, %v3556
        %v3558 = vand.u32 %v3557, 4294901760
        %v3559 = vsub.f32 %v3557, %v3558
        %v3560 = vand.u32 %v3559, 4294901760
        %3561 = vmatpush1.msra.mxu0 %v3560
        %v3562 = vand.u32 %v542, 4294901760
        %v3563 = vsub.f32 %v542, %v3562
        %v3564 = vand.u32 %v3563, 4294901760
        %v3565 = vsub.f32 %v3563, %v3564
        %v3566 = vand.u32 %v3565, 4294901760
        %3567 = vmatprep.subr.mxu0 %v3566
        %v3568 = vand.u32 %v541, 4294901760
        %v3569 = vsub.f32 %v541, %v3568
        %v3570 = vand.u32 %v3569, 4294901760
        %v3571 = vsub.f32 %v3569, %v3570
        %v3572 = vand.u32 %v3571, 4294901760
        %3573 = vmatpush1.msra.mxu0 %v3572
        %v3574 = vand.u32 %v544, 4294901760
        %v3575 = vsub.f32 %v544, %v3574
        %v3576 = vand.u32 %v3575, 4294901760
        %v3577 = vsub.f32 %v3575, %v3576
        %v3578 = vand.u32 %v3577, 4294901760
        %3579 = vmatprep.subr.mxu0 %v3578
        %v3580 = vand.u32 %v543, 4294901760
        %v3581 = vsub.f32 %v543, %v3580
        %v3582 = vand.u32 %v3581, 4294901760
        %v3583 = vsub.f32 %v3581, %v3582
        %v3584 = vand.u32 %v3583, 4294901760
        %3585 = vmatpush1.msra.mxu0 %v3584
        %v3586 = vand.u32 %v546, 4294901760
        %v3587 = vsub.f32 %v546, %v3586
        %v3588 = vand.u32 %v3587, 4294901760
        %v3589 = vsub.f32 %v3587, %v3588
        %v3590 = vand.u32 %v3589, 4294901760
        %3591 = vmatprep.subr.mxu0 %v3590
        %v3592 = vand.u32 %v545, 4294901760
        %v3593 = vsub.f32 %v545, %v3592
        %v3594 = vand.u32 %v3593, 4294901760
        %v3595 = vsub.f32 %v3593, %v3594
        %v3596 = vand.u32 %v3595, 4294901760
        %3597 = vmatpush1.msra.mxu0 %v3596
        %v3598 = vand.u32 %v548, 4294901760
        %v3599 = vsub.f32 %v548, %v3598
        %v3600 = vand.u32 %v3599, 4294901760
        %v3601 = vsub.f32 %v3599, %v3600
        %v3602 = vand.u32 %v3601, 4294901760
        %3603 = vmatprep.subr.mxu0 %v3602
        %v3604 = vand.u32 %v547, 4294901760
        %v3605 = vsub.f32 %v547, %v3604
        %v3606 = vand.u32 %v3605, 4294901760
        %v3607 = vsub.f32 %v3605, %v3606
        %v3608 = vand.u32 %v3607, 4294901760
        %3609 = vmatpush1.msra.mxu0 %v3608
        %v3610 = vand.u32 %v550, 4294901760
        %v3611 = vsub.f32 %v550, %v3610
        %v3612 = vand.u32 %v3611, 4294901760
        %v3613 = vsub.f32 %v3611, %v3612
        %v3614 = vand.u32 %v3613, 4294901760
        %3615 = vmatprep.subr.mxu0 %v3614
        %v3616 = vand.u32 %v549, 4294901760
        %v3617 = vsub.f32 %v549, %v3616
        %v3618 = vand.u32 %v3617, 4294901760
        %v3619 = vsub.f32 %v3617, %v3618
        %v3620 = vand.u32 %v3619, 4294901760
        %3621 = vmatpush1.msra.mxu0 %v3620
        %v3622 = vand.u32 %v552, 4294901760
        %v3623 = vsub.f32 %v552, %v3622
        %v3624 = vand.u32 %v3623, 4294901760
        %v3625 = vsub.f32 %v3623, %v3624
        %v3626 = vand.u32 %v3625, 4294901760
        %3627 = vmatprep.subr.mxu0 %v3626
        %v3628 = vand.u32 %v551, 4294901760
        %v3629 = vsub.f32 %v551, %v3628
        %v3630 = vand.u32 %v3629, 4294901760
        %v3631 = vsub.f32 %v3629, %v3630
        %v3632 = vand.u32 %v3631, 4294901760
        %3633 = vmatpush1.msra.mxu0 %v3632
        %v3634 = vand.u32 %v554, 4294901760
        %v3635 = vsub.f32 %v554, %v3634
        %v3636 = vand.u32 %v3635, 4294901760
        %v3637 = vsub.f32 %v3635, %v3636
        %v3638 = vand.u32 %v3637, 4294901760
        %3639 = vmatprep.subr.mxu0 %v3638
        %v3640 = vand.u32 %v553, 4294901760
        %v3641 = vsub.f32 %v553, %v3640
        %v3642 = vand.u32 %v3641, 4294901760
        %v3643 = vsub.f32 %v3641, %v3642
        %v3644 = vand.u32 %v3643, 4294901760
        %3645 = vmatpush1.msra.mxu0 %v3644
        %v3646 = vand.u32 %v556, 4294901760
        %v3647 = vsub.f32 %v556, %v3646
        %v3648 = vand.u32 %v3647, 4294901760
        %v3649 = vsub.f32 %v3647, %v3648
        %v3650 = vand.u32 %v3649, 4294901760
        %3651 = vmatprep.subr.mxu0 %v3650
        %v3652 = vand.u32 %v555, 4294901760
        %v3653 = vsub.f32 %v555, %v3652
        %v3654 = vand.u32 %v3653, 4294901760
        %v3655 = vsub.f32 %v3653, %v3654
        %v3656 = vand.u32 %v3655, 4294901760
        %3657 = vmatpush1.msra.mxu0 %v3656
        %v3658 = vand.u32 %v558, 4294901760
        %v3659 = vsub.f32 %v558, %v3658
        %v3660 = vand.u32 %v3659, 4294901760
        %v3661 = vsub.f32 %v3659, %v3660
        %v3662 = vand.u32 %v3661, 4294901760
        %3663 = vmatprep.subr.mxu0 %v3662
        %v3664 = vand.u32 %v557, 4294901760
        %v3665 = vsub.f32 %v557, %v3664
        %v3666 = vand.u32 %v3665, 4294901760
        %v3667 = vsub.f32 %v3665, %v3666
        %v3668 = vand.u32 %v3667, 4294901760
        %3669 = vmatpush1.msra.mxu0 %v3668
        %v3670 = vand.u32 %v560, 4294901760
        %v3671 = vsub.f32 %v560, %v3670
        %v3672 = vand.u32 %v3671, 4294901760
        %v3673 = vsub.f32 %v3671, %v3672
        %v3674 = vand.u32 %v3673, 4294901760
        %3675 = vmatprep.subr.mxu0 %v3674
        %v3676 = vand.u32 %v559, 4294901760
        %v3677 = vsub.f32 %v559, %v3676
        %v3678 = vand.u32 %v3677, 4294901760
        %v3679 = vsub.f32 %v3677, %v3678
        %v3680 = vand.u32 %v3679, 4294901760
        %3681 = vmatpush1.msra.mxu0 %v3680
        %v3682 = vand.u32 %v562, 4294901760
        %v3683 = vsub.f32 %v562, %v3682
        %v3684 = vand.u32 %v3683, 4294901760
        %v3685 = vsub.f32 %v3683, %v3684
        %v3686 = vand.u32 %v3685, 4294901760
        %3687 = vmatprep.subr.mxu0 %v3686
        %v3688 = vand.u32 %v561, 4294901760
        %v3689 = vsub.f32 %v561, %v3688
        %v3690 = vand.u32 %v3689, 4294901760
        %v3691 = vsub.f32 %v3689, %v3690
        %v3692 = vand.u32 %v3691, 4294901760
        %3693 = vmatpush1.msra.mxu0 %v3692
        %v3694 = vand.u32 %v564, 4294901760
        %v3695 = vsub.f32 %v564, %v3694
        %v3696 = vand.u32 %v3695, 4294901760
        %v3697 = vsub.f32 %v3695, %v3696
        %v3698 = vand.u32 %v3697, 4294901760
        %3699 = vmatprep.subr.mxu0 %v3698
        %v3700 = vand.u32 %v563, 4294901760
        %v3701 = vsub.f32 %v563, %v3700
        %v3702 = vand.u32 %v3701, 4294901760
        %v3703 = vsub.f32 %v3701, %v3702
        %v3704 = vand.u32 %v3703, 4294901760
        %3705 = vmatpush1.msra.mxu0 %v3704
        %v3706 = vand.u32 %v566, 4294901760
        %v3707 = vsub.f32 %v566, %v3706
        %v3708 = vand.u32 %v3707, 4294901760
        %v3709 = vsub.f32 %v3707, %v3708
        %v3710 = vand.u32 %v3709, 4294901760
        %3711 = vmatprep.subr.mxu0 %v3710
        %v3712 = vand.u32 %v565, 4294901760
        %v3713 = vsub.f32 %v565, %v3712
        %v3714 = vand.u32 %v3713, 4294901760
        %v3715 = vsub.f32 %v3713, %v3714
        %v3716 = vand.u32 %v3715, 4294901760
        %3717 = vmatpush1.msra.mxu0 %v3716
        %v3718 = vand.u32 %v568, 4294901760
        %v3719 = vsub.f32 %v568, %v3718
        %v3720 = vand.u32 %v3719, 4294901760
        %v3721 = vsub.f32 %v3719, %v3720
        %v3722 = vand.u32 %v3721, 4294901760
        %3723 = vmatprep.subr.mxu0 %v3722
        %v3724 = vand.u32 %v567, 4294901760
        %v3725 = vsub.f32 %v567, %v3724
        %v3726 = vand.u32 %v3725, 4294901760
        %v3727 = vsub.f32 %v3725, %v3726
        %v3728 = vand.u32 %v3727, 4294901760
        %3729 = vmatpush1.msra.mxu0 %v3728
        %v3730 = vand.u32 %v570, 4294901760
        %v3731 = vsub.f32 %v570, %v3730
        %v3732 = vand.u32 %v3731, 4294901760
        %v3733 = vsub.f32 %v3731, %v3732
        %v3734 = vand.u32 %v3733, 4294901760
        %3735 = vmatprep.subr.mxu0 %v3734
        %v3736 = vand.u32 %v569, 4294901760
        %v3737 = vsub.f32 %v569, %v3736
        %v3738 = vand.u32 %v3737, 4294901760
        %v3739 = vsub.f32 %v3737, %v3738
        %v3740 = vand.u32 %v3739, 4294901760
        %3741 = vmatpush1.msra.mxu0 %v3740
        %v3742 = vand.u32 %v572, 4294901760
        %v3743 = vsub.f32 %v572, %v3742
        %v3744 = vand.u32 %v3743, 4294901760
        %v3745 = vsub.f32 %v3743, %v3744
        %v3746 = vand.u32 %v3745, 4294901760
        %3747 = vmatprep.subr.mxu0 %v3746
        %v3748 = vand.u32 %v571, 4294901760
        %v3749 = vsub.f32 %v571, %v3748
        %v3750 = vand.u32 %v3749, 4294901760
        %v3751 = vsub.f32 %v3749, %v3750
        %v3752 = vand.u32 %v3751, 4294901760
        %3753 = vmatpush1.msra.mxu0 %v3752
        %v3754 = vand.u32 %v574, 4294901760
        %v3755 = vsub.f32 %v574, %v3754
        %v3756 = vand.u32 %v3755, 4294901760
        %v3757 = vsub.f32 %v3755, %v3756
        %v3758 = vand.u32 %v3757, 4294901760
        %3759 = vmatprep.subr.mxu0 %v3758
        %v3760 = vand.u32 %v573, 4294901760
        %v3761 = vsub.f32 %v573, %v3760
        %v3762 = vand.u32 %v3761, 4294901760
        %v3763 = vsub.f32 %v3761, %v3762
        %v3764 = vand.u32 %v3763, 4294901760
        %3765 = vmatpush1.msra.mxu0 %v3764
        %v3766 = vand.u32 %v663, 4294901760
        %3767 = vmatprep.mubr.f32.mxu0 %v3766
        %v3768 = vand.u32 %v655, 4294901760
        %3769 = vmatmul.mubr.f32.gmra.mrb[0].mxu0 %v3768
        %v3770 = vpop.f32.mrb[0].mxu0
        %v3771 = vadd.f32 %v3378, %v3770
        %v3772 = vpop.f32.mrb[0].mxu0
        %v3773 = vadd.f32 %v3380, %v3772
        %3774 = vdwg.mxu0
        %v3775 = vand.u32 %v512, 4294901760
        %v3776 = vsub.f32 %v512, %v3775
        %3777 = vmatprep.subr.mxu0 %v3776
        %v3778 = vand.u32 %v511, 4294901760
        %v3779 = vsub.f32 %v511, %v3778
        %3780 = vmatpush1.msra.mxu0 %v3779
        %v3781 = vand.u32 %v514, 4294901760
        %v3782 = vsub.f32 %v514, %v3781
        %3783 = vmatprep.subr.mxu0 %v3782
        %v3784 = vand.u32 %v513, 4294901760
        %v3785 = vsub.f32 %v513, %v3784
        %3786 = vmatpush1.msra.mxu0 %v3785
        %v3787 = vand.u32 %v516, 4294901760
        %v3788 = vsub.f32 %v516, %v3787
        %3789 = vmatprep.subr.mxu0 %v3788
        %v3790 = vand.u32 %v515, 4294901760
        %v3791 = vsub.f32 %v515, %v3790
        %3792 = vmatpush1.msra.mxu0 %v3791
        %v3793 = vand.u32 %v518, 4294901760
        %v3794 = vsub.f32 %v518, %v3793
        %3795 = vmatprep.subr.mxu0 %v3794
        %v3796 = vand.u32 %v517, 4294901760
        %v3797 = vsub.f32 %v517, %v3796
        %3798 = vmatpush1.msra.mxu0 %v3797
        %v3799 = vand.u32 %v520, 4294901760
        %v3800 = vsub.f32 %v520, %v3799
        %3801 = vmatprep.subr.mxu0 %v3800
        %v3802 = vand.u32 %v519, 4294901760
        %v3803 = vsub.f32 %v519, %v3802
        %3804 = vmatpush1.msra.mxu0 %v3803
        %v3805 = vand.u32 %v522, 4294901760
        %v3806 = vsub.f32 %v522, %v3805
        %3807 = vmatprep.subr.mxu0 %v3806
        %v3808 = vand.u32 %v521, 4294901760
        %v3809 = vsub.f32 %v521, %v3808
        %3810 = vmatpush1.msra.mxu0 %v3809
        %v3811 = vand.u32 %v524, 4294901760
        %v3812 = vsub.f32 %v524, %v3811
        %3813 = vmatprep.subr.mxu0 %v3812
        %v3814 = vand.u32 %v523, 4294901760
        %v3815 = vsub.f32 %v523, %v3814
        %3816 = vmatpush1.msra.mxu0 %v3815
        %v3817 = vand.u32 %v526, 4294901760
        %v3818 = vsub.f32 %v526, %v3817
        %3819 = vmatprep.subr.mxu0 %v3818
        %v3820 = vand.u32 %v525, 4294901760
        %v3821 = vsub.f32 %v525, %v3820
        %3822 = vmatpush1.msra.mxu0 %v3821
        %v3823 = vand.u32 %v528, 4294901760
        %v3824 = vsub.f32 %v528, %v3823
        %3825 = vmatprep.subr.mxu0 %v3824
        %v3826 = vand.u32 %v527, 4294901760
        %v3827 = vsub.f32 %v527, %v3826
        %3828 = vmatpush1.msra.mxu0 %v3827
        %v3829 = vand.u32 %v530, 4294901760
        %v3830 = vsub.f32 %v530, %v3829
        %3831 = vmatprep.subr.mxu0 %v3830
        %v3832 = vand.u32 %v529, 4294901760
        %v3833 = vsub.f32 %v529, %v3832
        %3834 = vmatpush1.msra.mxu0 %v3833
        %v3835 = vand.u32 %v532, 4294901760
        %v3836 = vsub.f32 %v532, %v3835
        %3837 = vmatprep.subr.mxu0 %v3836
        %v3838 = vand.u32 %v531, 4294901760
        %v3839 = vsub.f32 %v531, %v3838
        %3840 = vmatpush1.msra.mxu0 %v3839
        %v3841 = vand.u32 %v534, 4294901760
        %v3842 = vsub.f32 %v534, %v3841
        %3843 = vmatprep.subr.mxu0 %v3842
        %v3844 = vand.u32 %v533, 4294901760
        %v3845 = vsub.f32 %v533, %v3844
        %3846 = vmatpush1.msra.mxu0 %v3845
        %v3847 = vand.u32 %v536, 4294901760
        %v3848 = vsub.f32 %v536, %v3847
        %3849 = vmatprep.subr.mxu0 %v3848
        %v3850 = vand.u32 %v535, 4294901760
        %v3851 = vsub.f32 %v535, %v3850
        %3852 = vmatpush1.msra.mxu0 %v3851
        %v3853 = vand.u32 %v538, 4294901760
        %v3854 = vsub.f32 %v538, %v3853
        %3855 = vmatprep.subr.mxu0 %v3854
        %v3856 = vand.u32 %v537, 4294901760
        %v3857 = vsub.f32 %v537, %v3856
        %3858 = vmatpush1.msra.mxu0 %v3857
        %v3859 = vand.u32 %v540, 4294901760
        %v3860 = vsub.f32 %v540, %v3859
        %3861 = vmatprep.subr.mxu0 %v3860
        %v3862 = vand.u32 %v539, 4294901760
        %v3863 = vsub.f32 %v539, %v3862
        %3864 = vmatpush1.msra.mxu0 %v3863
        %v3865 = vand.u32 %v542, 4294901760
        %v3866 = vsub.f32 %v542, %v3865
        %3867 = vmatprep.subr.mxu0 %v3866
        %v3868 = vand.u32 %v541, 4294901760
        %v3869 = vsub.f32 %v541, %v3868
        %3870 = vmatpush1.msra.mxu0 %v3869
        %v3871 = vand.u32 %v544, 4294901760
        %v3872 = vsub.f32 %v544, %v3871
        %3873 = vmatprep.subr.mxu0 %v3872
        %v3874 = vand.u32 %v543, 4294901760
        %v3875 = vsub.f32 %v543, %v3874
        %3876 = vmatpush1.msra.mxu0 %v3875
        %v3877 = vand.u32 %v546, 4294901760
        %v3878 = vsub.f32 %v546, %v3877
        %3879 = vmatprep.subr.mxu0 %v3878
        %v3880 = vand.u32 %v545, 4294901760
        %v3881 = vsub.f32 %v545, %v3880
        %3882 = vmatpush1.msra.mxu0 %v3881
        %v3883 = vand.u32 %v548, 4294901760
        %v3884 = vsub.f32 %v548, %v3883
        %3885 = vmatprep.subr.mxu0 %v3884
        %v3886 = vand.u32 %v547, 4294901760
        %v3887 = vsub.f32 %v547, %v3886
        %3888 = vmatpush1.msra.mxu0 %v3887
        %v3889 = vand.u32 %v550, 4294901760
        %v3890 = vsub.f32 %v550, %v3889
        %3891 = vmatprep.subr.mxu0 %v3890
        %v3892 = vand.u32 %v549, 4294901760
        %v3893 = vsub.f32 %v549, %v3892
        %3894 = vmatpush1.msra.mxu0 %v3893
        %v3895 = vand.u32 %v552, 4294901760
        %v3896 = vsub.f32 %v552, %v3895
        %3897 = vmatprep.subr.mxu0 %v3896
        %v3898 = vand.u32 %v551, 4294901760
        %v3899 = vsub.f32 %v551, %v3898
        %3900 = vmatpush1.msra.mxu0 %v3899
        %v3901 = vand.u32 %v554, 4294901760
        %v3902 = vsub.f32 %v554, %v3901
        %3903 = vmatprep.subr.mxu0 %v3902
        %v3904 = vand.u32 %v553, 4294901760
        %v3905 = vsub.f32 %v553, %v3904
        %3906 = vmatpush1.msra.mxu0 %v3905
        %v3907 = vand.u32 %v556, 4294901760
        %v3908 = vsub.f32 %v556, %v3907
        %3909 = vmatprep.subr.mxu0 %v3908
        %v3910 = vand.u32 %v555, 4294901760
        %v3911 = vsub.f32 %v555, %v3910
        %3912 = vmatpush1.msra.mxu0 %v3911
        %v3913 = vand.u32 %v558, 4294901760
        %v3914 = vsub.f32 %v558, %v3913
        %3915 = vmatprep.subr.mxu0 %v3914
        %v3916 = vand.u32 %v557, 4294901760
        %v3917 = vsub.f32 %v557, %v3916
        %3918 = vmatpush1.msra.mxu0 %v3917
        %v3919 = vand.u32 %v560, 4294901760
        %v3920 = vsub.f32 %v560, %v3919
        %3921 = vmatprep.subr.mxu0 %v3920
        %v3922 = vand.u32 %v559, 4294901760
        %v3923 = vsub.f32 %v559, %v3922
        %3924 = vmatpush1.msra.mxu0 %v3923
        %v3925 = vand.u32 %v562, 4294901760
        %v3926 = vsub.f32 %v562, %v3925
        %3927 = vmatprep.subr.mxu0 %v3926
        %v3928 = vand.u32 %v561, 4294901760
        %v3929 = vsub.f32 %v561, %v3928
        %3930 = vmatpush1.msra.mxu0 %v3929
        %v3931 = vand.u32 %v564, 4294901760
        %v3932 = vsub.f32 %v564, %v3931
        %3933 = vmatprep.subr.mxu0 %v3932
        %v3934 = vand.u32 %v563, 4294901760
        %v3935 = vsub.f32 %v563, %v3934
        %3936 = vmatpush1.msra.mxu0 %v3935
        %v3937 = vand.u32 %v566, 4294901760
        %v3938 = vsub.f32 %v566, %v3937
        %3939 = vmatprep.subr.mxu0 %v3938
        %v3940 = vand.u32 %v565, 4294901760
        %v3941 = vsub.f32 %v565, %v3940
        %3942 = vmatpush1.msra.mxu0 %v3941
        %v3943 = vand.u32 %v568, 4294901760
        %v3944 = vsub.f32 %v568, %v3943
        %3945 = vmatprep.subr.mxu0 %v3944
        %v3946 = vand.u32 %v567, 4294901760
        %v3947 = vsub.f32 %v567, %v3946
        %3948 = vmatpush1.msra.mxu0 %v3947
        %v3949 = vand.u32 %v570, 4294901760
        %v3950 = vsub.f32 %v570, %v3949
        %3951 = vmatprep.subr.mxu0 %v3950
        %v3952 = vand.u32 %v569, 4294901760
        %v3953 = vsub.f32 %v569, %v3952
        %3954 = vmatpush1.msra.mxu0 %v3953
        %v3955 = vand.u32 %v572, 4294901760
        %v3956 = vsub.f32 %v572, %v3955
        %3957 = vmatprep.subr.mxu0 %v3956
        %v3958 = vand.u32 %v571, 4294901760
        %v3959 = vsub.f32 %v571, %v3958
        %3960 = vmatpush1.msra.mxu0 %v3959
        %v3961 = vand.u32 %v574, 4294901760
        %v3962 = vsub.f32 %v574, %v3961
        %3963 = vmatprep.subr.mxu0 %v3962
        %v3964 = vand.u32 %v573, 4294901760
        %v3965 = vsub.f32 %v573, %v3964
        %3966 = vmatpush1.msra.mxu0 %v3965
        %v3967 = vand.u32 %v663, 4294901760
        %v3968 = vsub.f32 %v663, %v3967
        %3969 = vmatprep.mubr.f32.mxu0 %v3968
        %v3970 = vand.u32 %v655, 4294901760
        %v3971 = vsub.f32 %v655, %v3970
        %3972 = vmatmul.mubr.f32.gmra.mrb[0].mxu0 %v3971
        %v3973 = vpop.f32.mrb[0].mxu0
        %v3974 = vadd.f32 %v3771, %v3973
        %v3975 = vpop.f32.mrb[0].mxu0
        %v3976 = vadd.f32 %v3773, %v3975
        %3977 = vdwg.mxu0
        %v3978 = vand.u32 %v512, 4294901760
        %3979 = vmatprep.subr.mxu0 %v3978
        %v3980 = vand.u32 %v511, 4294901760
        %3981 = vmatpush1.msra.mxu0 %v3980
        %v3982 = vand.u32 %v514, 4294901760
        %3983 = vmatprep.subr.mxu0 %v3982
        %v3984 = vand.u32 %v513, 4294901760
        %3985 = vmatpush1.msra.mxu0 %v3984
        %v3986 = vand.u32 %v516, 4294901760
        %3987 = vmatprep.subr.mxu0 %v3986
        %v3988 = vand.u32 %v515, 4294901760
        %3989 = vmatpush1.msra.mxu0 %v3988
        %v3990 = vand.u32 %v518, 4294901760
        %3991 = vmatprep.subr.mxu0 %v3990
        %v3992 = vand.u32 %v517, 4294901760
        %3993 = vmatpush1.msra.mxu0 %v3992
        %v3994 = vand.u32 %v520, 4294901760
        %3995 = vmatprep.subr.mxu0 %v3994
        %v3996 = vand.u32 %v519, 4294901760
        %3997 = vmatpush1.msra.mxu0 %v3996
        %v3998 = vand.u32 %v522, 4294901760
        %3999 = vmatprep.subr.mxu0 %v3998
        %v4000 = vand.u32 %v521, 4294901760
        %4001 = vmatpush1.msra.mxu0 %v4000
        %v4002 = vand.u32 %v524, 4294901760
        %4003 = vmatprep.subr.mxu0 %v4002
        %v4004 = vand.u32 %v523, 4294901760
        %4005 = vmatpush1.msra.mxu0 %v4004
        %v4006 = vand.u32 %v526, 4294901760
        %4007 = vmatprep.subr.mxu0 %v4006
        %v4008 = vand.u32 %v525, 4294901760
        %4009 = vmatpush1.msra.mxu0 %v4008
        %v4010 = vand.u32 %v528, 4294901760
        %4011 = vmatprep.subr.mxu0 %v4010
        %v4012 = vand.u32 %v527, 4294901760
        %4013 = vmatpush1.msra.mxu0 %v4012
        %v4014 = vand.u32 %v530, 4294901760
        %4015 = vmatprep.subr.mxu0 %v4014
        %v4016 = vand.u32 %v529, 4294901760
        %4017 = vmatpush1.msra.mxu0 %v4016
        %v4018 = vand.u32 %v532, 4294901760
        %4019 = vmatprep.subr.mxu0 %v4018
        %v4020 = vand.u32 %v531, 4294901760
        %4021 = vmatpush1.msra.mxu0 %v4020
        %v4022 = vand.u32 %v534, 4294901760
        %4023 = vmatprep.subr.mxu0 %v4022
        %v4024 = vand.u32 %v533, 4294901760
        %4025 = vmatpush1.msra.mxu0 %v4024
        %v4026 = vand.u32 %v536, 4294901760
        %4027 = vmatprep.subr.mxu0 %v4026
        %v4028 = vand.u32 %v535, 4294901760
        %4029 = vmatpush1.msra.mxu0 %v4028
        %v4030 = vand.u32 %v538, 4294901760
        %4031 = vmatprep.subr.mxu0 %v4030
        %v4032 = vand.u32 %v537, 4294901760
        %4033 = vmatpush1.msra.mxu0 %v4032
        %v4034 = vand.u32 %v540, 4294901760
        %4035 = vmatprep.subr.mxu0 %v4034
        %v4036 = vand.u32 %v539, 4294901760
        %4037 = vmatpush1.msra.mxu0 %v4036
        %v4038 = vand.u32 %v542, 4294901760
        %4039 = vmatprep.subr.mxu0 %v4038
        %v4040 = vand.u32 %v541, 4294901760
        %4041 = vmatpush1.msra.mxu0 %v4040
        %v4042 = vand.u32 %v544, 4294901760
        %4043 = vmatprep.subr.mxu0 %v4042
        %v4044 = vand.u32 %v543, 4294901760
        %4045 = vmatpush1.msra.mxu0 %v4044
        %v4046 = vand.u32 %v546, 4294901760
        %4047 = vmatprep.subr.mxu0 %v4046
        %v4048 = vand.u32 %v545, 4294901760
        %4049 = vmatpush1.msra.mxu0 %v4048
        %v4050 = vand.u32 %v548, 4294901760
        %4051 = vmatprep.subr.mxu0 %v4050
        %v4052 = vand.u32 %v547, 4294901760
        %4053 = vmatpush1.msra.mxu0 %v4052
        %v4054 = vand.u32 %v550, 4294901760
        %4055 = vmatprep.subr.mxu0 %v4054
        %v4056 = vand.u32 %v549, 4294901760
        %4057 = vmatpush1.msra.mxu0 %v4056
        %v4058 = vand.u32 %v552, 4294901760
        %4059 = vmatprep.subr.mxu0 %v4058
        %v4060 = vand.u32 %v551, 4294901760
        %4061 = vmatpush1.msra.mxu0 %v4060
        %v4062 = vand.u32 %v554, 4294901760
        %4063 = vmatprep.subr.mxu0 %v4062
        %v4064 = vand.u32 %v553, 4294901760
        %4065 = vmatpush1.msra.mxu0 %v4064
        %v4066 = vand.u32 %v556, 4294901760
        %4067 = vmatprep.subr.mxu0 %v4066
        %v4068 = vand.u32 %v555, 4294901760
        %4069 = vmatpush1.msra.mxu0 %v4068
        %v4070 = vand.u32 %v558, 4294901760
        %4071 = vmatprep.subr.mxu0 %v4070
        %v4072 = vand.u32 %v557, 4294901760
        %4073 = vmatpush1.msra.mxu0 %v4072
        %v4074 = vand.u32 %v560, 4294901760
        %4075 = vmatprep.subr.mxu0 %v4074
        %v4076 = vand.u32 %v559, 4294901760
        %4077 = vmatpush1.msra.mxu0 %v4076
        %v4078 = vand.u32 %v562, 4294901760
        %4079 = vmatprep.subr.mxu0 %v4078
        %v4080 = vand.u32 %v561, 4294901760
        %4081 = vmatpush1.msra.mxu0 %v4080
        %v4082 = vand.u32 %v564, 4294901760
        %4083 = vmatprep.subr.mxu0 %v4082
        %v4084 = vand.u32 %v563, 4294901760
        %4085 = vmatpush1.msra.mxu0 %v4084
        %v4086 = vand.u32 %v566, 4294901760
        %4087 = vmatprep.subr.mxu0 %v4086
        %v4088 = vand.u32 %v565, 4294901760
        %4089 = vmatpush1.msra.mxu0 %v4088
        %v4090 = vand.u32 %v568, 4294901760
        %4091 = vmatprep.subr.mxu0 %v4090
        %v4092 = vand.u32 %v567, 4294901760
        %4093 = vmatpush1.msra.mxu0 %v4092
        %v4094 = vand.u32 %v570, 4294901760
        %4095 = vmatprep.subr.mxu0 %v4094
        %v4096 = vand.u32 %v569, 4294901760
        %4097 = vmatpush1.msra.mxu0 %v4096
        %v4098 = vand.u32 %v572, 4294901760
        %4099 = vmatprep.subr.mxu0 %v4098
        %v4100 = vand.u32 %v571, 4294901760
        %4101 = vmatpush1.msra.mxu0 %v4100
        %v4102 = vand.u32 %v574, 4294901760
        %4103 = vmatprep.subr.mxu0 %v4102
        %v4104 = vand.u32 %v573, 4294901760
        %4105 = vmatpush1.msra.mxu0 %v4104
        %v4106 = vand.u32 %v663, 4294901760
        %v4107 = vsub.f32 %v663, %v4106
        %v4108 = vand.u32 %v4107, 4294901760
        %4109 = vmatprep.mubr.f32.mxu0 %v4108
        %v4110 = vand.u32 %v655, 4294901760
        %v4111 = vsub.f32 %v655, %v4110
        %v4112 = vand.u32 %v4111, 4294901760
        %4113 = vmatmul.mubr.f32.gmra.mrb[0].mxu0 %v4112
        %v4114 = vpop.f32.mrb[0].mxu0
        %v4115 = vadd.f32 %v3974, %v4114
        %v4116 = vpop.f32.mrb[0].mxu0
        %v4117 = vadd.f32 %v3976, %v4116
        %4118 = vdwg.mxu0
        %v4119 = vand.u32 %v512, 4294901760
        %v4120 = vsub.f32 %v512, %v4119
        %v4121 = vand.u32 %v4120, 4294901760
        %4122 = vmatprep.subr.mxu0 %v4121
        %v4123 = vand.u32 %v511, 4294901760
        %v4124 = vsub.f32 %v511, %v4123
        %v4125 = vand.u32 %v4124, 4294901760
        %4126 = vmatpush1.msra.mxu0 %v4125
        %v4127 = vand.u32 %v514, 4294901760
        %v4128 = vsub.f32 %v514, %v4127
        %v4129 = vand.u32 %v4128, 4294901760
        %4130 = vmatprep.subr.mxu0 %v4129
        %v4131 = vand.u32 %v513, 4294901760
        %v4132 = vsub.f32 %v513, %v4131
        %v4133 = vand.u32 %v4132, 4294901760
        %4134 = vmatpush1.msra.mxu0 %v4133
        %v4135 = vand.u32 %v516, 4294901760
        %v4136 = vsub.f32 %v516, %v4135
        %v4137 = vand.u32 %v4136, 4294901760
        %4138 = vmatprep.subr.mxu0 %v4137
        %v4139 = vand.u32 %v515, 4294901760
        %v4140 = vsub.f32 %v515, %v4139
        %v4141 = vand.u32 %v4140, 4294901760
        %4142 = vmatpush1.msra.mxu0 %v4141
        %v4143 = vand.u32 %v518, 4294901760
        %v4144 = vsub.f32 %v518, %v4143
        %v4145 = vand.u32 %v4144, 4294901760
        %4146 = vmatprep.subr.mxu0 %v4145
        %v4147 = vand.u32 %v517, 4294901760
        %v4148 = vsub.f32 %v517, %v4147
        %v4149 = vand.u32 %v4148, 4294901760
        %4150 = vmatpush1.msra.mxu0 %v4149
        %v4151 = vand.u32 %v520, 4294901760
        %v4152 = vsub.f32 %v520, %v4151
        %v4153 = vand.u32 %v4152, 4294901760
        %4154 = vmatprep.subr.mxu0 %v4153
        %v4155 = vand.u32 %v519, 4294901760
        %v4156 = vsub.f32 %v519, %v4155
        %v4157 = vand.u32 %v4156, 4294901760
        %4158 = vmatpush1.msra.mxu0 %v4157
        %v4159 = vand.u32 %v522, 4294901760
        %v4160 = vsub.f32 %v522, %v4159
        %v4161 = vand.u32 %v4160, 4294901760
        %4162 = vmatprep.subr.mxu0 %v4161
        %v4163 = vand.u32 %v521, 4294901760
        %v4164 = vsub.f32 %v521, %v4163
        %v4165 = vand.u32 %v4164, 4294901760
        %4166 = vmatpush1.msra.mxu0 %v4165
        %v4167 = vand.u32 %v524, 4294901760
        %v4168 = vsub.f32 %v524, %v4167
        %v4169 = vand.u32 %v4168, 4294901760
        %4170 = vmatprep.subr.mxu0 %v4169
        %v4171 = vand.u32 %v523, 4294901760
        %v4172 = vsub.f32 %v523, %v4171
        %v4173 = vand.u32 %v4172, 4294901760
        %4174 = vmatpush1.msra.mxu0 %v4173
        %v4175 = vand.u32 %v526, 4294901760
        %v4176 = vsub.f32 %v526, %v4175
        %v4177 = vand.u32 %v4176, 4294901760
        %4178 = vmatprep.subr.mxu0 %v4177
        %v4179 = vand.u32 %v525, 4294901760
        %v4180 = vsub.f32 %v525, %v4179
        %v4181 = vand.u32 %v4180, 4294901760
        %4182 = vmatpush1.msra.mxu0 %v4181
        %v4183 = vand.u32 %v528, 4294901760
        %v4184 = vsub.f32 %v528, %v4183
        %v4185 = vand.u32 %v4184, 4294901760
        %4186 = vmatprep.subr.mxu0 %v4185
        %v4187 = vand.u32 %v527, 4294901760
        %v4188 = vsub.f32 %v527, %v4187
        %v4189 = vand.u32 %v4188, 4294901760
        %4190 = vmatpush1.msra.mxu0 %v4189
        %v4191 = vand.u32 %v530, 4294901760
        %v4192 = vsub.f32 %v530, %v4191
        %v4193 = vand.u32 %v4192, 4294901760
        %4194 = vmatprep.subr.mxu0 %v4193
        %v4195 = vand.u32 %v529, 4294901760
        %v4196 = vsub.f32 %v529, %v4195
        %v4197 = vand.u32 %v4196, 4294901760
        %4198 = vmatpush1.msra.mxu0 %v4197
        %v4199 = vand.u32 %v532, 4294901760
        %v4200 = vsub.f32 %v532, %v4199
        %v4201 = vand.u32 %v4200, 4294901760
        %4202 = vmatprep.subr.mxu0 %v4201
        %v4203 = vand.u32 %v531, 4294901760
        %v4204 = vsub.f32 %v531, %v4203
        %v4205 = vand.u32 %v4204, 4294901760
        %4206 = vmatpush1.msra.mxu0 %v4205
        %v4207 = vand.u32 %v534, 4294901760
        %v4208 = vsub.f32 %v534, %v4207
        %v4209 = vand.u32 %v4208, 4294901760
        %4210 = vmatprep.subr.mxu0 %v4209
        %v4211 = vand.u32 %v533, 4294901760
        %v4212 = vsub.f32 %v533, %v4211
        %v4213 = vand.u32 %v4212, 4294901760
        %4214 = vmatpush1.msra.mxu0 %v4213
        %v4215 = vand.u32 %v536, 4294901760
        %v4216 = vsub.f32 %v536, %v4215
        %v4217 = vand.u32 %v4216, 4294901760
        %4218 = vmatprep.subr.mxu0 %v4217
        %v4219 = vand.u32 %v535, 4294901760
        %v4220 = vsub.f32 %v535, %v4219
        %v4221 = vand.u32 %v4220, 4294901760
        %4222 = vmatpush1.msra.mxu0 %v4221
        %v4223 = vand.u32 %v538, 4294901760
        %v4224 = vsub.f32 %v538, %v4223
        %v4225 = vand.u32 %v4224, 4294901760
        %4226 = vmatprep.subr.mxu0 %v4225
        %v4227 = vand.u32 %v537, 4294901760
        %v4228 = vsub.f32 %v537, %v4227
        %v4229 = vand.u32 %v4228, 4294901760
        %4230 = vmatpush1.msra.mxu0 %v4229
        %v4231 = vand.u32 %v540, 4294901760
        %v4232 = vsub.f32 %v540, %v4231
        %v4233 = vand.u32 %v4232, 4294901760
        %4234 = vmatprep.subr.mxu0 %v4233
        %v4235 = vand.u32 %v539, 4294901760
        %v4236 = vsub.f32 %v539, %v4235
        %v4237 = vand.u32 %v4236, 4294901760
        %4238 = vmatpush1.msra.mxu0 %v4237
        %v4239 = vand.u32 %v542, 4294901760
        %v4240 = vsub.f32 %v542, %v4239
        %v4241 = vand.u32 %v4240, 4294901760
        %4242 = vmatprep.subr.mxu0 %v4241
        %v4243 = vand.u32 %v541, 4294901760
        %v4244 = vsub.f32 %v541, %v4243
        %v4245 = vand.u32 %v4244, 4294901760
        %4246 = vmatpush1.msra.mxu0 %v4245
        %v4247 = vand.u32 %v544, 4294901760
        %v4248 = vsub.f32 %v544, %v4247
        %v4249 = vand.u32 %v4248, 4294901760
        %4250 = vmatprep.subr.mxu0 %v4249
        %v4251 = vand.u32 %v543, 4294901760
        %v4252 = vsub.f32 %v543, %v4251
        %v4253 = vand.u32 %v4252, 4294901760
        %4254 = vmatpush1.msra.mxu0 %v4253
        %v4255 = vand.u32 %v546, 4294901760
        %v4256 = vsub.f32 %v546, %v4255
        %v4257 = vand.u32 %v4256, 4294901760
        %4258 = vmatprep.subr.mxu0 %v4257
        %v4259 = vand.u32 %v545, 4294901760
        %v4260 = vsub.f32 %v545, %v4259
        %v4261 = vand.u32 %v4260, 4294901760
        %4262 = vmatpush1.msra.mxu0 %v4261
        %v4263 = vand.u32 %v548, 4294901760
        %v4264 = vsub.f32 %v548, %v4263
        %v4265 = vand.u32 %v4264, 4294901760
        %4266 = vmatprep.subr.mxu0 %v4265
        %v4267 = vand.u32 %v547, 4294901760
        %v4268 = vsub.f32 %v547, %v4267
        %v4269 = vand.u32 %v4268, 4294901760
        %4270 = vmatpush1.msra.mxu0 %v4269
        %v4271 = vand.u32 %v550, 4294901760
        %v4272 = vsub.f32 %v550, %v4271
        %v4273 = vand.u32 %v4272, 4294901760
        %4274 = vmatprep.subr.mxu0 %v4273
        %v4275 = vand.u32 %v549, 4294901760
        %v4276 = vsub.f32 %v549, %v4275
        %v4277 = vand.u32 %v4276, 4294901760
        %4278 = vmatpush1.msra.mxu0 %v4277
        %v4279 = vand.u32 %v552, 4294901760
        %v4280 = vsub.f32 %v552, %v4279
        %v4281 = vand.u32 %v4280, 4294901760
        %4282 = vmatprep.subr.mxu0 %v4281
        %v4283 = vand.u32 %v551, 4294901760
        %v4284 = vsub.f32 %v551, %v4283
        %v4285 = vand.u32 %v4284, 4294901760
        %4286 = vmatpush1.msra.mxu0 %v4285
        %v4287 = vand.u32 %v554, 4294901760
        %v4288 = vsub.f32 %v554, %v4287
        %v4289 = vand.u32 %v4288, 4294901760
        %4290 = vmatprep.subr.mxu0 %v4289
        %v4291 = vand.u32 %v553, 4294901760
        %v4292 = vsub.f32 %v553, %v4291
        %v4293 = vand.u32 %v4292, 4294901760
        %4294 = vmatpush1.msra.mxu0 %v4293
        %v4295 = vand.u32 %v556, 4294901760
        %v4296 = vsub.f32 %v556, %v4295
        %v4297 = vand.u32 %v4296, 4294901760
        %4298 = vmatprep.subr.mxu0 %v4297
        %v4299 = vand.u32 %v555, 4294901760
        %v4300 = vsub.f32 %v555, %v4299
        %v4301 = vand.u32 %v4300, 4294901760
        %4302 = vmatpush1.msra.mxu0 %v4301
        %v4303 = vand.u32 %v558, 4294901760
        %v4304 = vsub.f32 %v558, %v4303
        %v4305 = vand.u32 %v4304, 4294901760
        %4306 = vmatprep.subr.mxu0 %v4305
        %v4307 = vand.u32 %v557, 4294901760
        %v4308 = vsub.f32 %v557, %v4307
        %v4309 = vand.u32 %v4308, 4294901760
        %4310 = vmatpush1.msra.mxu0 %v4309
        %v4311 = vand.u32 %v560, 4294901760
        %v4312 = vsub.f32 %v560, %v4311
        %v4313 = vand.u32 %v4312, 4294901760
        %4314 = vmatprep.subr.mxu0 %v4313
        %v4315 = vand.u32 %v559, 4294901760
        %v4316 = vsub.f32 %v559, %v4315
        %v4317 = vand.u32 %v4316, 4294901760
        %4318 = vmatpush1.msra.mxu0 %v4317
        %v4319 = vand.u32 %v562, 4294901760
        %v4320 = vsub.f32 %v562, %v4319
        %v4321 = vand.u32 %v4320, 4294901760
        %4322 = vmatprep.subr.mxu0 %v4321
        %v4323 = vand.u32 %v561, 4294901760
        %v4324 = vsub.f32 %v561, %v4323
        %v4325 = vand.u32 %v4324, 4294901760
        %4326 = vmatpush1.msra.mxu0 %v4325
        %v4327 = vand.u32 %v564, 4294901760
        %v4328 = vsub.f32 %v564, %v4327
        %v4329 = vand.u32 %v4328, 4294901760
        %4330 = vmatprep.subr.mxu0 %v4329
        %v4331 = vand.u32 %v563, 4294901760
        %v4332 = vsub.f32 %v563, %v4331
        %v4333 = vand.u32 %v4332, 4294901760
        %4334 = vmatpush1.msra.mxu0 %v4333
        %v4335 = vand.u32 %v566, 4294901760
        %v4336 = vsub.f32 %v566, %v4335
        %v4337 = vand.u32 %v4336, 4294901760
        %4338 = vmatprep.subr.mxu0 %v4337
        %v4339 = vand.u32 %v565, 4294901760
        %v4340 = vsub.f32 %v565, %v4339
        %v4341 = vand.u32 %v4340, 4294901760
        %4342 = vmatpush1.msra.mxu0 %v4341
        %v4343 = vand.u32 %v568, 4294901760
        %v4344 = vsub.f32 %v568, %v4343
        %v4345 = vand.u32 %v4344, 4294901760
        %4346 = vmatprep.subr.mxu0 %v4345
        %v4347 = vand.u32 %v567, 4294901760
        %v4348 = vsub.f32 %v567, %v4347
        %v4349 = vand.u32 %v4348, 4294901760
        %4350 = vmatpush1.msra.mxu0 %v4349
        %v4351 = vand.u32 %v570, 4294901760
        %v4352 = vsub.f32 %v570, %v4351
        %v4353 = vand.u32 %v4352, 4294901760
        %4354 = vmatprep.subr.mxu0 %v4353
        %v4355 = vand.u32 %v569, 4294901760
        %v4356 = vsub.f32 %v569, %v4355
        %v4357 = vand.u32 %v4356, 4294901760
        %4358 = vmatpush1.msra.mxu0 %v4357
        %v4359 = vand.u32 %v572, 4294901760
        %v4360 = vsub.f32 %v572, %v4359
        %v4361 = vand.u32 %v4360, 4294901760
        %4362 = vmatprep.subr.mxu0 %v4361
        %v4363 = vand.u32 %v571, 4294901760
        %v4364 = vsub.f32 %v571, %v4363
        %v4365 = vand.u32 %v4364, 4294901760
        %4366 = vmatpush1.msra.mxu0 %v4365
        %v4367 = vand.u32 %v574, 4294901760
        %v4368 = vsub.f32 %v574, %v4367
        %v4369 = vand.u32 %v4368, 4294901760
        %4370 = vmatprep.subr.mxu0 %v4369
        %v4371 = vand.u32 %v573, 4294901760
        %v4372 = vsub.f32 %v573, %v4371
        %v4373 = vand.u32 %v4372, 4294901760
        %4374 = vmatpush1.msra.mxu0 %v4373
        %v4375 = vand.u32 %v663, 4294901760
        %4376 = vmatprep.mubr.f32.mxu0 %v4375
        %v4377 = vand.u32 %v655, 4294901760
        %4378 = vmatmul.mubr.f32.gmra.mrb[0].mxu0 %v4377
        %v4379 = vpop.f32.mrb[0].mxu0
        %v4380 = vadd.f32 %v4115, %v4379
        %v4381 = vpop.f32.mrb[0].mxu0
        %v4382 = vadd.f32 %v4117, %v4381
        %4383 = vdwg.mxu0
        %v4384 = vand.u32 %v512, 4294901760
        %4385 = vmatprep.subr.mxu0 %v4384
        %v4386 = vand.u32 %v511, 4294901760
        %4387 = vmatpush1.msra.mxu0 %v4386
        %v4388 = vand.u32 %v514, 4294901760
        %4389 = vmatprep.subr.mxu0 %v4388
        %v4390 = vand.u32 %v513, 4294901760
        %4391 = vmatpush1.msra.mxu0 %v4390
        %v4392 = vand.u32 %v516, 4294901760
        %4393 = vmatprep.subr.mxu0 %v4392
        %v4394 = vand.u32 %v515, 4294901760
        %4395 = vmatpush1.msra.mxu0 %v4394
        %v4396 = vand.u32 %v518, 4294901760
        %4397 = vmatprep.subr.mxu0 %v4396
        %v4398 = vand.u32 %v517, 4294901760
        %4399 = vmatpush1.msra.mxu0 %v4398
        %v4400 = vand.u32 %v520, 4294901760
        %4401 = vmatprep.subr.mxu0 %v4400
        %v4402 = vand.u32 %v519, 4294901760
        %4403 = vmatpush1.msra.mxu0 %v4402
        %v4404 = vand.u32 %v522, 4294901760
        %4405 = vmatprep.subr.mxu0 %v4404
        %v4406 = vand.u32 %v521, 4294901760
        %4407 = vmatpush1.msra.mxu0 %v4406
        %v4408 = vand.u32 %v524, 4294901760
        %4409 = vmatprep.subr.mxu0 %v4408
        %v4410 = vand.u32 %v523, 4294901760
        %4411 = vmatpush1.msra.mxu0 %v4410
        %v4412 = vand.u32 %v526, 4294901760
        %4413 = vmatprep.subr.mxu0 %v4412
        %v4414 = vand.u32 %v525, 4294901760
        %4415 = vmatpush1.msra.mxu0 %v4414
        %v4416 = vand.u32 %v528, 4294901760
        %4417 = vmatprep.subr.mxu0 %v4416
        %v4418 = vand.u32 %v527, 4294901760
        %4419 = vmatpush1.msra.mxu0 %v4418
        %v4420 = vand.u32 %v530, 4294901760
        %4421 = vmatprep.subr.mxu0 %v4420
        %v4422 = vand.u32 %v529, 4294901760
        %4423 = vmatpush1.msra.mxu0 %v4422
        %v4424 = vand.u32 %v532, 4294901760
        %4425 = vmatprep.subr.mxu0 %v4424
        %v4426 = vand.u32 %v531, 4294901760
        %4427 = vmatpush1.msra.mxu0 %v4426
        %v4428 = vand.u32 %v534, 4294901760
        %4429 = vmatprep.subr.mxu0 %v4428
        %v4430 = vand.u32 %v533, 4294901760
        %4431 = vmatpush1.msra.mxu0 %v4430
        %v4432 = vand.u32 %v536, 4294901760
        %4433 = vmatprep.subr.mxu0 %v4432
        %v4434 = vand.u32 %v535, 4294901760
        %4435 = vmatpush1.msra.mxu0 %v4434
        %v4436 = vand.u32 %v538, 4294901760
        %4437 = vmatprep.subr.mxu0 %v4436
        %v4438 = vand.u32 %v537, 4294901760
        %4439 = vmatpush1.msra.mxu0 %v4438
        %v4440 = vand.u32 %v540, 4294901760
        %4441 = vmatprep.subr.mxu0 %v4440
        %v4442 = vand.u32 %v539, 4294901760
        %4443 = vmatpush1.msra.mxu0 %v4442
        %v4444 = vand.u32 %v542, 4294901760
        %4445 = vmatprep.subr.mxu0 %v4444
        %v4446 = vand.u32 %v541, 4294901760
        %4447 = vmatpush1.msra.mxu0 %v4446
        %v4448 = vand.u32 %v544, 4294901760
        %4449 = vmatprep.subr.mxu0 %v4448
        %v4450 = vand.u32 %v543, 4294901760
        %4451 = vmatpush1.msra.mxu0 %v4450
        %v4452 = vand.u32 %v546, 4294901760
        %4453 = vmatprep.subr.mxu0 %v4452
        %v4454 = vand.u32 %v545, 4294901760
        %4455 = vmatpush1.msra.mxu0 %v4454
        %v4456 = vand.u32 %v548, 4294901760
        %4457 = vmatprep.subr.mxu0 %v4456
        %v4458 = vand.u32 %v547, 4294901760
        %4459 = vmatpush1.msra.mxu0 %v4458
        %v4460 = vand.u32 %v550, 4294901760
        %4461 = vmatprep.subr.mxu0 %v4460
        %v4462 = vand.u32 %v549, 4294901760
        %4463 = vmatpush1.msra.mxu0 %v4462
        %v4464 = vand.u32 %v552, 4294901760
        %4465 = vmatprep.subr.mxu0 %v4464
        %v4466 = vand.u32 %v551, 4294901760
        %4467 = vmatpush1.msra.mxu0 %v4466
        %v4468 = vand.u32 %v554, 4294901760
        %4469 = vmatprep.subr.mxu0 %v4468
        %v4470 = vand.u32 %v553, 4294901760
        %4471 = vmatpush1.msra.mxu0 %v4470
        %v4472 = vand.u32 %v556, 4294901760
        %4473 = vmatprep.subr.mxu0 %v4472
        %v4474 = vand.u32 %v555, 4294901760
        %4475 = vmatpush1.msra.mxu0 %v4474
        %v4476 = vand.u32 %v558, 4294901760
        %4477 = vmatprep.subr.mxu0 %v4476
        %v4478 = vand.u32 %v557, 4294901760
        %4479 = vmatpush1.msra.mxu0 %v4478
        %v4480 = vand.u32 %v560, 4294901760
        %4481 = vmatprep.subr.mxu0 %v4480
        %v4482 = vand.u32 %v559, 4294901760
        %4483 = vmatpush1.msra.mxu0 %v4482
        %v4484 = vand.u32 %v562, 4294901760
        %4485 = vmatprep.subr.mxu0 %v4484
        %v4486 = vand.u32 %v561, 4294901760
        %4487 = vmatpush1.msra.mxu0 %v4486
        %v4488 = vand.u32 %v564, 4294901760
        %4489 = vmatprep.subr.mxu0 %v4488
        %v4490 = vand.u32 %v563, 4294901760
        %4491 = vmatpush1.msra.mxu0 %v4490
        %v4492 = vand.u32 %v566, 4294901760
        %4493 = vmatprep.subr.mxu0 %v4492
        %v4494 = vand.u32 %v565, 4294901760
        %4495 = vmatpush1.msra.mxu0 %v4494
        %v4496 = vand.u32 %v568, 4294901760
        %4497 = vmatprep.subr.mxu0 %v4496
        %v4498 = vand.u32 %v567, 4294901760
        %4499 = vmatpush1.msra.mxu0 %v4498
        %v4500 = vand.u32 %v570, 4294901760
        %4501 = vmatprep.subr.mxu0 %v4500
        %v4502 = vand.u32 %v569, 4294901760
        %4503 = vmatpush1.msra.mxu0 %v4502
        %v4504 = vand.u32 %v572, 4294901760
        %4505 = vmatprep.subr.mxu0 %v4504
        %v4506 = vand.u32 %v571, 4294901760
        %4507 = vmatpush1.msra.mxu0 %v4506
        %v4508 = vand.u32 %v574, 4294901760
        %4509 = vmatprep.subr.mxu0 %v4508
        %v4510 = vand.u32 %v573, 4294901760
        %4511 = vmatpush1.msra.mxu0 %v4510
        %v4512 = vand.u32 %v663, 4294901760
        %4513 = vmatprep.mubr.f32.mxu0 %v4512
        %v4514 = vand.u32 %v655, 4294901760
        %4515 = vmatmul.mubr.f32.gmra.mrb[0].mxu0 %v4514
        %v4516 = vpop.f32.mrb[0].mxu0
        %v4517 = vadd.f32 %v4380, %v4516
        %v4518 = vpop.f32.mrb[0].mxu0
        %v4519 = vadd.f32 %v4382, %v4518
        %4520 = vdwg.mxu0
        %v4521 = vand.u32 %v576, 4294901760
        %4522 = vmatprep.subr.mxu0 %v4521
        %v4523 = vand.u32 %v575, 4294901760
        %4524 = vmatpush1.msra.mxu0 %v4523
        %v4525 = vand.u32 %v578, 4294901760
        %4526 = vmatprep.subr.mxu0 %v4525
        %v4527 = vand.u32 %v577, 4294901760
        %4528 = vmatpush1.msra.mxu0 %v4527
        %v4529 = vand.u32 %v580, 4294901760
        %4530 = vmatprep.subr.mxu0 %v4529
        %v4531 = vand.u32 %v579, 4294901760
        %4532 = vmatpush1.msra.mxu0 %v4531
        %v4533 = vand.u32 %v582, 4294901760
        %4534 = vmatprep.subr.mxu0 %v4533
        %v4535 = vand.u32 %v581, 4294901760
        %4536 = vmatpush1.msra.mxu0 %v4535
        %v4537 = vand.u32 %v584, 4294901760
        %4538 = vmatprep.subr.mxu0 %v4537
        %v4539 = vand.u32 %v583, 4294901760
        %4540 = vmatpush1.msra.mxu0 %v4539
        %v4541 = vand.u32 %v586, 4294901760
        %4542 = vmatprep.subr.mxu0 %v4541
        %v4543 = vand.u32 %v585, 4294901760
        %4544 = vmatpush1.msra.mxu0 %v4543
        %v4545 = vand.u32 %v588, 4294901760
        %4546 = vmatprep.subr.mxu0 %v4545
        %v4547 = vand.u32 %v587, 4294901760
        %4548 = vmatpush1.msra.mxu0 %v4547
        %v4549 = vand.u32 %v590, 4294901760
        %4550 = vmatprep.subr.mxu0 %v4549
        %v4551 = vand.u32 %v589, 4294901760
        %4552 = vmatpush1.msra.mxu0 %v4551
        %v4553 = vand.u32 %v592, 4294901760
        %4554 = vmatprep.subr.mxu0 %v4553
        %v4555 = vand.u32 %v591, 4294901760
        %4556 = vmatpush1.msra.mxu0 %v4555
        %v4557 = vand.u32 %v594, 4294901760
        %4558 = vmatprep.subr.mxu0 %v4557
        %v4559 = vand.u32 %v593, 4294901760
        %4560 = vmatpush1.msra.mxu0 %v4559
        %v4561 = vand.u32 %v596, 4294901760
        %4562 = vmatprep.subr.mxu0 %v4561
        %v4563 = vand.u32 %v595, 4294901760
        %4564 = vmatpush1.msra.mxu0 %v4563
        %v4565 = vand.u32 %v598, 4294901760
        %4566 = vmatprep.subr.mxu0 %v4565
        %v4567 = vand.u32 %v597, 4294901760
        %4568 = vmatpush1.msra.mxu0 %v4567
        %v4569 = vand.u32 %v600, 4294901760
        %4570 = vmatprep.subr.mxu0 %v4569
        %v4571 = vand.u32 %v599, 4294901760
        %4572 = vmatpush1.msra.mxu0 %v4571
        %v4573 = vand.u32 %v602, 4294901760
        %4574 = vmatprep.subr.mxu0 %v4573
        %v4575 = vand.u32 %v601, 4294901760
        %4576 = vmatpush1.msra.mxu0 %v4575
        %v4577 = vand.u32 %v604, 4294901760
        %4578 = vmatprep.subr.mxu0 %v4577
        %v4579 = vand.u32 %v603, 4294901760
        %4580 = vmatpush1.msra.mxu0 %v4579
        %v4581 = vand.u32 %v606, 4294901760
        %4582 = vmatprep.subr.mxu0 %v4581
        %v4583 = vand.u32 %v605, 4294901760
        %4584 = vmatpush1.msra.mxu0 %v4583
        %v4585 = vand.u32 %v608, 4294901760
        %4586 = vmatprep.subr.mxu0 %v4585
        %v4587 = vand.u32 %v607, 4294901760
        %4588 = vmatpush1.msra.mxu0 %v4587
        %v4589 = vand.u32 %v610, 4294901760
        %4590 = vmatprep.subr.mxu0 %v4589
        %v4591 = vand.u32 %v609, 4294901760
        %4592 = vmatpush1.msra.mxu0 %v4591
        %v4593 = vand.u32 %v612, 4294901760
        %4594 = vmatprep.subr.mxu0 %v4593
        %v4595 = vand.u32 %v611, 4294901760
        %4596 = vmatpush1.msra.mxu0 %v4595
        %v4597 = vand.u32 %v614, 4294901760
        %4598 = vmatprep.subr.mxu0 %v4597
        %v4599 = vand.u32 %v613, 4294901760
        %4600 = vmatpush1.msra.mxu0 %v4599
        %v4601 = vand.u32 %v616, 4294901760
        %4602 = vmatprep.subr.mxu0 %v4601
        %v4603 = vand.u32 %v615, 4294901760
        %4604 = vmatpush1.msra.mxu0 %v4603
        %v4605 = vand.u32 %v618, 4294901760
        %4606 = vmatprep.subr.mxu0 %v4605
        %v4607 = vand.u32 %v617, 4294901760
        %4608 = vmatpush1.msra.mxu0 %v4607
        %v4609 = vand.u32 %v620, 4294901760
        %4610 = vmatprep.subr.mxu0 %v4609
        %v4611 = vand.u32 %v619, 4294901760
        %4612 = vmatpush1.msra.mxu0 %v4611
        %v4613 = vand.u32 %v622, 4294901760
        %4614 = vmatprep.subr.mxu0 %v4613
        %v4615 = vand.u32 %v621, 4294901760
        %4616 = vmatpush1.msra.mxu0 %v4615
        %v4617 = vand.u32 %v624, 4294901760
        %4618 = vmatprep.subr.mxu0 %v4617
        %v4619 = vand.u32 %v623, 4294901760
        %4620 = vmatpush1.msra.mxu0 %v4619
        %v4621 = vand.u32 %v626, 4294901760
        %4622 = vmatprep.subr.mxu0 %v4621
        %v4623 = vand.u32 %v625, 4294901760
        %4624 = vmatpush1.msra.mxu0 %v4623
        %v4625 = vand.u32 %v628, 4294901760
        %4626 = vmatprep.subr.mxu0 %v4625
        %v4627 = vand.u32 %v627, 4294901760
        %4628 = vmatpush1.msra.mxu0 %v4627
        %v4629 = vand.u32 %v630, 4294901760
        %4630 = vmatprep.subr.mxu0 %v4629
        %v4631 = vand.u32 %v629, 4294901760
        %4632 = vmatpush1.msra.mxu0 %v4631
        %v4633 = vand.u32 %v632, 4294901760
        %4634 = vmatprep.subr.mxu0 %v4633
        %v4635 = vand.u32 %v631, 4294901760
        %4636 = vmatpush1.msra.mxu0 %v4635
        %v4637 = vand.u32 %v634, 4294901760
        %4638 = vmatprep.subr.mxu0 %v4637
        %v4639 = vand.u32 %v633, 4294901760
        %4640 = vmatpush1.msra.mxu0 %v4639
        %v4641 = vand.u32 %v636, 4294901760
        %4642 = vmatprep.subr.mxu0 %v4641
        %v4643 = vand.u32 %v635, 4294901760
        %4644 = vmatpush1.msra.mxu0 %v4643
        %v4645 = vand.u32 %v638, 4294901760
        %4646 = vmatprep.subr.mxu0 %v4645
        %v4647 = vand.u32 %v637, 4294901760
        %4648 = vmatpush1.msra.mxu0 %v4647
        %v4649 = vand.u32 %v664, 4294901760
        %v4650 = vsub.f32 %v664, %v4649
        %v4651 = vand.u32 %v4650, 4294901760
        %v4652 = vsub.f32 %v4650, %v4651
        %v4653 = vand.u32 %v4652, 4294901760
        %4654 = vmatprep.mubr.f32.mxu0 %v4653
        %v4655 = vand.u32 %v656, 4294901760
        %v4656 = vsub.f32 %v656, %v4655
        %v4657 = vand.u32 %v4656, 4294901760
        %v4658 = vsub.f32 %v4656, %v4657
        %v4659 = vand.u32 %v4658, 4294901760
        %4660 = vmatmul.mubr.f32.gmra.mrb[0].mxu0 %v4659
        %v4661 = vpop.f32.mrb[0].mxu0
        %v4662 = vadd.f32 %v4517, %v4661
        %v4663 = vpop.f32.mrb[0].mxu0
        %v4664 = vadd.f32 %v4519, %v4663
        %4665 = vdwg.mxu0
        %v4666 = vand.u32 %v576, 4294901760
        %v4667 = vsub.f32 %v576, %v4666
        %v4668 = vand.u32 %v4667, 4294901760
        %v4669 = vsub.f32 %v4667, %v4668
        %v4670 = vand.u32 %v4669, 4294901760
        %4671 = vmatprep.subr.mxu0 %v4670
        %v4672 = vand.u32 %v575, 4294901760
        %v4673 = vsub.f32 %v575, %v4672
        %v4674 = vand.u32 %v4673, 4294901760
        %v4675 = vsub.f32 %v4673, %v4674
        %v4676 = vand.u32 %v4675, 4294901760
        %4677 = vmatpush1.msra.mxu0 %v4676
        %v4678 = vand.u32 %v578, 4294901760
        %v4679 = vsub.f32 %v578, %v4678
        %v4680 = vand.u32 %v4679, 4294901760
        %v4681 = vsub.f32 %v4679, %v4680
        %v4682 = vand.u32 %v4681, 4294901760
        %4683 = vmatprep.subr.mxu0 %v4682
        %v4684 = vand.u32 %v577, 4294901760
        %v4685 = vsub.f32 %v577, %v4684
        %v4686 = vand.u32 %v4685, 4294901760
        %v4687 = vsub.f32 %v4685, %v4686
        %v4688 = vand.u32 %v4687, 4294901760
        %4689 = vmatpush1.msra.mxu0 %v4688
        %v4690 = vand.u32 %v580, 4294901760
        %v4691 = vsub.f32 %v580, %v4690
        %v4692 = vand.u32 %v4691, 4294901760
        %v4693 = vsub.f32 %v4691, %v4692
        %v4694 = vand.u32 %v4693, 4294901760
        %4695 = vmatprep.subr.mxu0 %v4694
        %v4696 = vand.u32 %v579, 4294901760
        %v4697 = vsub.f32 %v579, %v4696
        %v4698 = vand.u32 %v4697, 4294901760
        %v4699 = vsub.f32 %v4697, %v4698
        %v4700 = vand.u32 %v4699, 4294901760
        %4701 = vmatpush1.msra.mxu0 %v4700
        %v4702 = vand.u32 %v582, 4294901760
        %v4703 = vsub.f32 %v582, %v4702
        %v4704 = vand.u32 %v4703, 4294901760
        %v4705 = vsub.f32 %v4703, %v4704
        %v4706 = vand.u32 %v4705, 4294901760
        %4707 = vmatprep.subr.mxu0 %v4706
        %v4708 = vand.u32 %v581, 4294901760
        %v4709 = vsub.f32 %v581, %v4708
        %v4710 = vand.u32 %v4709, 4294901760
        %v4711 = vsub.f32 %v4709, %v4710
        %v4712 = vand.u32 %v4711, 4294901760
        %4713 = vmatpush1.msra.mxu0 %v4712
        %v4714 = vand.u32 %v584, 4294901760
        %v4715 = vsub.f32 %v584, %v4714
        %v4716 = vand.u32 %v4715, 4294901760
        %v4717 = vsub.f32 %v4715, %v4716
        %v4718 = vand.u32 %v4717, 4294901760
        %4719 = vmatprep.subr.mxu0 %v4718
        %v4720 = vand.u32 %v583, 4294901760
        %v4721 = vsub.f32 %v583, %v4720
        %v4722 = vand.u32 %v4721, 4294901760
        %v4723 = vsub.f32 %v4721, %v4722
        %v4724 = vand.u32 %v4723, 4294901760
        %4725 = vmatpush1.msra.mxu0 %v4724
        %v4726 = vand.u32 %v586, 4294901760
        %v4727 = vsub.f32 %v586, %v4726
        %v4728 = vand.u32 %v4727, 4294901760
        %v4729 = vsub.f32 %v4727, %v4728
        %v4730 = vand.u32 %v4729, 4294901760
        %4731 = vmatprep.subr.mxu0 %v4730
        %v4732 = vand.u32 %v585, 4294901760
        %v4733 = vsub.f32 %v585, %v4732
        %v4734 = vand.u32 %v4733, 4294901760
        %v4735 = vsub.f32 %v4733, %v4734
        %v4736 = vand.u32 %v4735, 4294901760
        %4737 = vmatpush1.msra.mxu0 %v4736
        %v4738 = vand.u32 %v588, 4294901760
        %v4739 = vsub.f32 %v588, %v4738
        %v4740 = vand.u32 %v4739, 4294901760
        %v4741 = vsub.f32 %v4739, %v4740
        %v4742 = vand.u32 %v4741, 4294901760
        %4743 = vmatprep.subr.mxu0 %v4742
        %v4744 = vand.u32 %v587, 4294901760
        %v4745 = vsub.f32 %v587, %v4744
        %v4746 = vand.u32 %v4745, 4294901760
        %v4747 = vsub.f32 %v4745, %v4746
        %v4748 = vand.u32 %v4747, 4294901760
        %4749 = vmatpush1.msra.mxu0 %v4748
        %v4750 = vand.u32 %v590, 4294901760
        %v4751 = vsub.f32 %v590, %v4750
        %v4752 = vand.u32 %v4751, 4294901760
        %v4753 = vsub.f32 %v4751, %v4752
        %v4754 = vand.u32 %v4753, 4294901760
        %4755 = vmatprep.subr.mxu0 %v4754
        %v4756 = vand.u32 %v589, 4294901760
        %v4757 = vsub.f32 %v589, %v4756
        %v4758 = vand.u32 %v4757, 4294901760
        %v4759 = vsub.f32 %v4757, %v4758
        %v4760 = vand.u32 %v4759, 4294901760
        %4761 = vmatpush1.msra.mxu0 %v4760
        %v4762 = vand.u32 %v592, 4294901760
        %v4763 = vsub.f32 %v592, %v4762
        %v4764 = vand.u32 %v4763, 4294901760
        %v4765 = vsub.f32 %v4763, %v4764
        %v4766 = vand.u32 %v4765, 4294901760
        %4767 = vmatprep.subr.mxu0 %v4766
        %v4768 = vand.u32 %v591, 4294901760
        %v4769 = vsub.f32 %v591, %v4768
        %v4770 = vand.u32 %v4769, 4294901760
        %v4771 = vsub.f32 %v4769, %v4770
        %v4772 = vand.u32 %v4771, 4294901760
        %4773 = vmatpush1.msra.mxu0 %v4772
        %v4774 = vand.u32 %v594, 4294901760
        %v4775 = vsub.f32 %v594, %v4774
        %v4776 = vand.u32 %v4775, 4294901760
        %v4777 = vsub.f32 %v4775, %v4776
        %v4778 = vand.u32 %v4777, 4294901760
        %4779 = vmatprep.subr.mxu0 %v4778
        %v4780 = vand.u32 %v593, 4294901760
        %v4781 = vsub.f32 %v593, %v4780
        %v4782 = vand.u32 %v4781, 4294901760
        %v4783 = vsub.f32 %v4781, %v4782
        %v4784 = vand.u32 %v4783, 4294901760
        %4785 = vmatpush1.msra.mxu0 %v4784
        %v4786 = vand.u32 %v596, 4294901760
        %v4787 = vsub.f32 %v596, %v4786
        %v4788 = vand.u32 %v4787, 4294901760
        %v4789 = vsub.f32 %v4787, %v4788
        %v4790 = vand.u32 %v4789, 4294901760
        %4791 = vmatprep.subr.mxu0 %v4790
        %v4792 = vand.u32 %v595, 4294901760
        %v4793 = vsub.f32 %v595, %v4792
        %v4794 = vand.u32 %v4793, 4294901760
        %v4795 = vsub.f32 %v4793, %v4794
        %v4796 = vand.u32 %v4795, 4294901760
        %4797 = vmatpush1.msra.mxu0 %v4796
        %v4798 = vand.u32 %v598, 4294901760
        %v4799 = vsub.f32 %v598, %v4798
        %v4800 = vand.u32 %v4799, 4294901760
        %v4801 = vsub.f32 %v4799, %v4800
        %v4802 = vand.u32 %v4801, 4294901760
        %4803 = vmatprep.subr.mxu0 %v4802
        %v4804 = vand.u32 %v597, 4294901760
        %v4805 = vsub.f32 %v597, %v4804
        %v4806 = vand.u32 %v4805, 4294901760
        %v4807 = vsub.f32 %v4805, %v4806
        %v4808 = vand.u32 %v4807, 4294901760
        %4809 = vmatpush1.msra.mxu0 %v4808
        %v4810 = vand.u32 %v600, 4294901760
        %v4811 = vsub.f32 %v600, %v4810
        %v4812 = vand.u32 %v4811, 4294901760
        %v4813 = vsub.f32 %v4811, %v4812
        %v4814 = vand.u32 %v4813, 4294901760
        %4815 = vmatprep.subr.mxu0 %v4814
        %v4816 = vand.u32 %v599, 4294901760
        %v4817 = vsub.f32 %v599, %v4816
        %v4818 = vand.u32 %v4817, 4294901760
        %v4819 = vsub.f32 %v4817, %v4818
        %v4820 = vand.u32 %v4819, 4294901760
        %4821 = vmatpush1.msra.mxu0 %v4820
        %v4822 = vand.u32 %v602, 4294901760
        %v4823 = vsub.f32 %v602, %v4822
        %v4824 = vand.u32 %v4823, 4294901760
        %v4825 = vsub.f32 %v4823, %v4824
        %v4826 = vand.u32 %v4825, 4294901760
        %4827 = vmatprep.subr.mxu0 %v4826
        %v4828 = vand.u32 %v601, 4294901760
        %v4829 = vsub.f32 %v601, %v4828
        %v4830 = vand.u32 %v4829, 4294901760
        %v4831 = vsub.f32 %v4829, %v4830
        %v4832 = vand.u32 %v4831, 4294901760
        %4833 = vmatpush1.msra.mxu0 %v4832
        %v4834 = vand.u32 %v604, 4294901760
        %v4835 = vsub.f32 %v604, %v4834
        %v4836 = vand.u32 %v4835, 4294901760
        %v4837 = vsub.f32 %v4835, %v4836
        %v4838 = vand.u32 %v4837, 4294901760
        %4839 = vmatprep.subr.mxu0 %v4838
        %v4840 = vand.u32 %v603, 4294901760
        %v4841 = vsub.f32 %v603, %v4840
        %v4842 = vand.u32 %v4841, 4294901760
        %v4843 = vsub.f32 %v4841, %v4842
        %v4844 = vand.u32 %v4843, 4294901760
        %4845 = vmatpush1.msra.mxu0 %v4844
        %v4846 = vand.u32 %v606, 4294901760
        %v4847 = vsub.f32 %v606, %v4846
        %v4848 = vand.u32 %v4847, 4294901760
        %v4849 = vsub.f32 %v4847, %v4848
        %v4850 = vand.u32 %v4849, 4294901760
        %4851 = vmatprep.subr.mxu0 %v4850
        %v4852 = vand.u32 %v605, 4294901760
        %v4853 = vsub.f32 %v605, %v4852
        %v4854 = vand.u32 %v4853, 4294901760
        %v4855 = vsub.f32 %v4853, %v4854
        %v4856 = vand.u32 %v4855, 4294901760
        %4857 = vmatpush1.msra.mxu0 %v4856
        %v4858 = vand.u32 %v608, 4294901760
        %v4859 = vsub.f32 %v608, %v4858
        %v4860 = vand.u32 %v4859, 4294901760
        %v4861 = vsub.f32 %v4859, %v4860
        %v4862 = vand.u32 %v4861, 4294901760
        %4863 = vmatprep.subr.mxu0 %v4862
        %v4864 = vand.u32 %v607, 4294901760
        %v4865 = vsub.f32 %v607, %v4864
        %v4866 = vand.u32 %v4865, 4294901760
        %v4867 = vsub.f32 %v4865, %v4866
        %v4868 = vand.u32 %v4867, 4294901760
        %4869 = vmatpush1.msra.mxu0 %v4868
        %v4870 = vand.u32 %v610, 4294901760
        %v4871 = vsub.f32 %v610, %v4870
        %v4872 = vand.u32 %v4871, 4294901760
        %v4873 = vsub.f32 %v4871, %v4872
        %v4874 = vand.u32 %v4873, 4294901760
        %4875 = vmatprep.subr.mxu0 %v4874
        %v4876 = vand.u32 %v609, 4294901760
        %v4877 = vsub.f32 %v609, %v4876
        %v4878 = vand.u32 %v4877, 4294901760
        %v4879 = vsub.f32 %v4877, %v4878
        %v4880 = vand.u32 %v4879, 4294901760
        %4881 = vmatpush1.msra.mxu0 %v4880
        %v4882 = vand.u32 %v612, 4294901760
        %v4883 = vsub.f32 %v612, %v4882
        %v4884 = vand.u32 %v4883, 4294901760
        %v4885 = vsub.f32 %v4883, %v4884
        %v4886 = vand.u32 %v4885, 4294901760
        %4887 = vmatprep.subr.mxu0 %v4886
        %v4888 = vand.u32 %v611, 4294901760
        %v4889 = vsub.f32 %v611, %v4888
        %v4890 = vand.u32 %v4889, 4294901760
        %v4891 = vsub.f32 %v4889, %v4890
        %v4892 = vand.u32 %v4891, 4294901760
        %4893 = vmatpush1.msra.mxu0 %v4892
        %v4894 = vand.u32 %v614, 4294901760
        %v4895 = vsub.f32 %v614, %v4894
        %v4896 = vand.u32 %v4895, 4294901760
        %v4897 = vsub.f32 %v4895, %v4896
        %v4898 = vand.u32 %v4897, 4294901760
        %4899 = vmatprep.subr.mxu0 %v4898
        %v4900 = vand.u32 %v613, 4294901760
        %v4901 = vsub.f32 %v613, %v4900
        %v4902 = vand.u32 %v4901, 4294901760
        %v4903 = vsub.f32 %v4901, %v4902
        %v4904 = vand.u32 %v4903, 4294901760
        %4905 = vmatpush1.msra.mxu0 %v4904
        %v4906 = vand.u32 %v616, 4294901760
        %v4907 = vsub.f32 %v616, %v4906
        %v4908 = vand.u32 %v4907, 4294901760
        %v4909 = vsub.f32 %v4907, %v4908
        %v4910 = vand.u32 %v4909, 4294901760
        %4911 = vmatprep.subr.mxu0 %v4910
        %v4912 = vand.u32 %v615, 4294901760
        %v4913 = vsub.f32 %v615, %v4912
        %v4914 = vand.u32 %v4913, 4294901760
        %v4915 = vsub.f32 %v4913, %v4914
        %v4916 = vand.u32 %v4915, 4294901760
        %4917 = vmatpush1.msra.mxu0 %v4916
        %v4918 = vand.u32 %v618, 4294901760
        %v4919 = vsub.f32 %v618, %v4918
        %v4920 = vand.u32 %v4919, 4294901760
        %v4921 = vsub.f32 %v4919, %v4920
        %v4922 = vand.u32 %v4921, 4294901760
        %4923 = vmatprep.subr.mxu0 %v4922
        %v4924 = vand.u32 %v617, 4294901760
        %v4925 = vsub.f32 %v617, %v4924
        %v4926 = vand.u32 %v4925, 4294901760
        %v4927 = vsub.f32 %v4925, %v4926
        %v4928 = vand.u32 %v4927, 4294901760
        %4929 = vmatpush1.msra.mxu0 %v4928
        %v4930 = vand.u32 %v620, 4294901760
        %v4931 = vsub.f32 %v620, %v4930
        %v4932 = vand.u32 %v4931, 4294901760
        %v4933 = vsub.f32 %v4931, %v4932
        %v4934 = vand.u32 %v4933, 4294901760
        %4935 = vmatprep.subr.mxu0 %v4934
        %v4936 = vand.u32 %v619, 4294901760
        %v4937 = vsub.f32 %v619, %v4936
        %v4938 = vand.u32 %v4937, 4294901760
        %v4939 = vsub.f32 %v4937, %v4938
        %v4940 = vand.u32 %v4939, 4294901760
        %4941 = vmatpush1.msra.mxu0 %v4940
        %v4942 = vand.u32 %v622, 4294901760
        %v4943 = vsub.f32 %v622, %v4942
        %v4944 = vand.u32 %v4943, 4294901760
        %v4945 = vsub.f32 %v4943, %v4944
        %v4946 = vand.u32 %v4945, 4294901760
        %4947 = vmatprep.subr.mxu0 %v4946
        %v4948 = vand.u32 %v621, 4294901760
        %v4949 = vsub.f32 %v621, %v4948
        %v4950 = vand.u32 %v4949, 4294901760
        %v4951 = vsub.f32 %v4949, %v4950
        %v4952 = vand.u32 %v4951, 4294901760
        %4953 = vmatpush1.msra.mxu0 %v4952
        %v4954 = vand.u32 %v624, 4294901760
        %v4955 = vsub.f32 %v624, %v4954
        %v4956 = vand.u32 %v4955, 4294901760
        %v4957 = vsub.f32 %v4955, %v4956
        %v4958 = vand.u32 %v4957, 4294901760
        %4959 = vmatprep.subr.mxu0 %v4958
        %v4960 = vand.u32 %v623, 4294901760
        %v4961 = vsub.f32 %v623, %v4960
        %v4962 = vand.u32 %v4961, 4294901760
        %v4963 = vsub.f32 %v4961, %v4962
        %v4964 = vand.u32 %v4963, 4294901760
        %4965 = vmatpush1.msra.mxu0 %v4964
        %v4966 = vand.u32 %v626, 4294901760
        %v4967 = vsub.f32 %v626, %v4966
        %v4968 = vand.u32 %v4967, 4294901760
        %v4969 = vsub.f32 %v4967, %v4968
        %v4970 = vand.u32 %v4969, 4294901760
        %4971 = vmatprep.subr.mxu0 %v4970
        %v4972 = vand.u32 %v625, 4294901760
        %v4973 = vsub.f32 %v625, %v4972
        %v4974 = vand.u32 %v4973, 4294901760
        %v4975 = vsub.f32 %v4973, %v4974
        %v4976 = vand.u32 %v4975, 4294901760
        %4977 = vmatpush1.msra.mxu0 %v4976
        %v4978 = vand.u32 %v628, 4294901760
        %v4979 = vsub.f32 %v628, %v4978
        %v4980 = vand.u32 %v4979, 4294901760
        %v4981 = vsub.f32 %v4979, %v4980
        %v4982 = vand.u32 %v4981, 4294901760
        %4983 = vmatprep.subr.mxu0 %v4982
        %v4984 = vand.u32 %v627, 4294901760
        %v4985 = vsub.f32 %v627, %v4984
        %v4986 = vand.u32 %v4985, 4294901760
        %v4987 = vsub.f32 %v4985, %v4986
        %v4988 = vand.u32 %v4987, 4294901760
        %4989 = vmatpush1.msra.mxu0 %v4988
        %v4990 = vand.u32 %v630, 4294901760
        %v4991 = vsub.f32 %v630, %v4990
        %v4992 = vand.u32 %v4991, 4294901760
        %v4993 = vsub.f32 %v4991, %v4992
        %v4994 = vand.u32 %v4993, 4294901760
        %4995 = vmatprep.subr.mxu0 %v4994
        %v4996 = vand.u32 %v629, 4294901760
        %v4997 = vsub.f32 %v629, %v4996
        %v4998 = vand.u32 %v4997, 4294901760
        %v4999 = vsub.f32 %v4997, %v4998
        %v5000 = vand.u32 %v4999, 4294901760
        %5001 = vmatpush1.msra.mxu0 %v5000
        %v5002 = vand.u32 %v632, 4294901760
        %v5003 = vsub.f32 %v632, %v5002
        %v5004 = vand.u32 %v5003, 4294901760
        %v5005 = vsub.f32 %v5003, %v5004
        %v5006 = vand.u32 %v5005, 4294901760
        %5007 = vmatprep.subr.mxu0 %v5006
        %v5008 = vand.u32 %v631, 4294901760
        %v5009 = vsub.f32 %v631, %v5008
        %v5010 = vand.u32 %v5009, 4294901760
        %v5011 = vsub.f32 %v5009, %v5010
        %v5012 = vand.u32 %v5011, 4294901760
        %5013 = vmatpush1.msra.mxu0 %v5012
        %v5014 = vand.u32 %v634, 4294901760
        %v5015 = vsub.f32 %v634, %v5014
        %v5016 = vand.u32 %v5015, 4294901760
        %v5017 = vsub.f32 %v5015, %v5016
        %v5018 = vand.u32 %v5017, 4294901760
        %5019 = vmatprep.subr.mxu0 %v5018
        %v5020 = vand.u32 %v633, 4294901760
        %v5021 = vsub.f32 %v633, %v5020
        %v5022 = vand.u32 %v5021, 4294901760
        %v5023 = vsub.f32 %v5021, %v5022
        %v5024 = vand.u32 %v5023, 4294901760
        %5025 = vmatpush1.msra.mxu0 %v5024
        %v5026 = vand.u32 %v636, 4294901760
        %v5027 = vsub.f32 %v636, %v5026
        %v5028 = vand.u32 %v5027, 4294901760
        %v5029 = vsub.f32 %v5027, %v5028
        %v5030 = vand.u32 %v5029, 4294901760
        %5031 = vmatprep.subr.mxu0 %v5030
        %v5032 = vand.u32 %v635, 4294901760
        %v5033 = vsub.f32 %v635, %v5032
        %v5034 = vand.u32 %v5033, 4294901760
        %v5035 = vsub.f32 %v5033, %v5034
        %v5036 = vand.u32 %v5035, 4294901760
        %5037 = vmatpush1.msra.mxu0 %v5036
        %v5038 = vand.u32 %v638, 4294901760
        %v5039 = vsub.f32 %v638, %v5038
        %v5040 = vand.u32 %v5039, 4294901760
        %v5041 = vsub.f32 %v5039, %v5040
        %v5042 = vand.u32 %v5041, 4294901760
        %5043 = vmatprep.subr.mxu0 %v5042
        %v5044 = vand.u32 %v637, 4294901760
        %v5045 = vsub.f32 %v637, %v5044
        %v5046 = vand.u32 %v5045, 4294901760
        %v5047 = vsub.f32 %v5045, %v5046
        %v5048 = vand.u32 %v5047, 4294901760
        %5049 = vmatpush1.msra.mxu0 %v5048
        %v5050 = vand.u32 %v664, 4294901760
        %5051 = vmatprep.mubr.f32.mxu0 %v5050
        %v5052 = vand.u32 %v656, 4294901760
        %5053 = vmatmul.mubr.f32.gmra.mrb[0].mxu0 %v5052
        %v5054 = vpop.f32.mrb[0].mxu0
        %v5055 = vadd.f32 %v4662, %v5054
        %v5056 = vpop.f32.mrb[0].mxu0
        %v5057 = vadd.f32 %v4664, %v5056
        %5058 = vdwg.mxu0
        %v5059 = vand.u32 %v576, 4294901760
        %v5060 = vsub.f32 %v576, %v5059
        %5061 = vmatprep.subr.mxu0 %v5060
        %v5062 = vand.u32 %v575, 4294901760
        %v5063 = vsub.f32 %v575, %v5062
        %5064 = vmatpush1.msra.mxu0 %v5063
        %v5065 = vand.u32 %v578, 4294901760
        %v5066 = vsub.f32 %v578, %v5065
        %5067 = vmatprep.subr.mxu0 %v5066
        %v5068 = vand.u32 %v577, 4294901760
        %v5069 = vsub.f32 %v577, %v5068
        %5070 = vmatpush1.msra.mxu0 %v5069
        %v5071 = vand.u32 %v580, 4294901760
        %v5072 = vsub.f32 %v580, %v5071
        %5073 = vmatprep.subr.mxu0 %v5072
        %v5074 = vand.u32 %v579, 4294901760
        %v5075 = vsub.f32 %v579, %v5074
        %5076 = vmatpush1.msra.mxu0 %v5075
        %v5077 = vand.u32 %v582, 4294901760
        %v5078 = vsub.f32 %v582, %v5077
        %5079 = vmatprep.subr.mxu0 %v5078
        %v5080 = vand.u32 %v581, 4294901760
        %v5081 = vsub.f32 %v581, %v5080
        %5082 = vmatpush1.msra.mxu0 %v5081
        %v5083 = vand.u32 %v584, 4294901760
        %v5084 = vsub.f32 %v584, %v5083
        %5085 = vmatprep.subr.mxu0 %v5084
        %v5086 = vand.u32 %v583, 4294901760
        %v5087 = vsub.f32 %v583, %v5086
        %5088 = vmatpush1.msra.mxu0 %v5087
        %v5089 = vand.u32 %v586, 4294901760
        %v5090 = vsub.f32 %v586, %v5089
        %5091 = vmatprep.subr.mxu0 %v5090
        %v5092 = vand.u32 %v585, 4294901760
        %v5093 = vsub.f32 %v585, %v5092
        %5094 = vmatpush1.msra.mxu0 %v5093
        %v5095 = vand.u32 %v588, 4294901760
        %v5096 = vsub.f32 %v588, %v5095
        %5097 = vmatprep.subr.mxu0 %v5096
        %v5098 = vand.u32 %v587, 4294901760
        %v5099 = vsub.f32 %v587, %v5098
        %5100 = vmatpush1.msra.mxu0 %v5099
        %v5101 = vand.u32 %v590, 4294901760
        %v5102 = vsub.f32 %v590, %v5101
        %5103 = vmatprep.subr.mxu0 %v5102
        %v5104 = vand.u32 %v589, 4294901760
        %v5105 = vsub.f32 %v589, %v5104
        %5106 = vmatpush1.msra.mxu0 %v5105
        %v5107 = vand.u32 %v592, 4294901760
        %v5108 = vsub.f32 %v592, %v5107
        %5109 = vmatprep.subr.mxu0 %v5108
        %v5110 = vand.u32 %v591, 4294901760
        %v5111 = vsub.f32 %v591, %v5110
        %5112 = vmatpush1.msra.mxu0 %v5111
        %v5113 = vand.u32 %v594, 4294901760
        %v5114 = vsub.f32 %v594, %v5113
        %5115 = vmatprep.subr.mxu0 %v5114
        %v5116 = vand.u32 %v593, 4294901760
        %v5117 = vsub.f32 %v593, %v5116
        %5118 = vmatpush1.msra.mxu0 %v5117
        %v5119 = vand.u32 %v596, 4294901760
        %v5120 = vsub.f32 %v596, %v5119
        %5121 = vmatprep.subr.mxu0 %v5120
        %v5122 = vand.u32 %v595, 4294901760
        %v5123 = vsub.f32 %v595, %v5122
        %5124 = vmatpush1.msra.mxu0 %v5123
        %v5125 = vand.u32 %v598, 4294901760
        %v5126 = vsub.f32 %v598, %v5125
        %5127 = vmatprep.subr.mxu0 %v5126
        %v5128 = vand.u32 %v597, 4294901760
        %v5129 = vsub.f32 %v597, %v5128
        %5130 = vmatpush1.msra.mxu0 %v5129
        %v5131 = vand.u32 %v600, 4294901760
        %v5132 = vsub.f32 %v600, %v5131
        %5133 = vmatprep.subr.mxu0 %v5132
        %v5134 = vand.u32 %v599, 4294901760
        %v5135 = vsub.f32 %v599, %v5134
        %5136 = vmatpush1.msra.mxu0 %v5135
        %v5137 = vand.u32 %v602, 4294901760
        %v5138 = vsub.f32 %v602, %v5137
        %5139 = vmatprep.subr.mxu0 %v5138
        %v5140 = vand.u32 %v601, 4294901760
        %v5141 = vsub.f32 %v601, %v5140
        %5142 = vmatpush1.msra.mxu0 %v5141
        %v5143 = vand.u32 %v604, 4294901760
        %v5144 = vsub.f32 %v604, %v5143
        %5145 = vmatprep.subr.mxu0 %v5144
        %v5146 = vand.u32 %v603, 4294901760
        %v5147 = vsub.f32 %v603, %v5146
        %5148 = vmatpush1.msra.mxu0 %v5147
        %v5149 = vand.u32 %v606, 4294901760
        %v5150 = vsub.f32 %v606, %v5149
        %5151 = vmatprep.subr.mxu0 %v5150
        %v5152 = vand.u32 %v605, 4294901760
        %v5153 = vsub.f32 %v605, %v5152
        %5154 = vmatpush1.msra.mxu0 %v5153
        %v5155 = vand.u32 %v608, 4294901760
        %v5156 = vsub.f32 %v608, %v5155
        %5157 = vmatprep.subr.mxu0 %v5156
        %v5158 = vand.u32 %v607, 4294901760
        %v5159 = vsub.f32 %v607, %v5158
        %5160 = vmatpush1.msra.mxu0 %v5159
        %v5161 = vand.u32 %v610, 4294901760
        %v5162 = vsub.f32 %v610, %v5161
        %5163 = vmatprep.subr.mxu0 %v5162
        %v5164 = vand.u32 %v609, 4294901760
        %v5165 = vsub.f32 %v609, %v5164
        %5166 = vmatpush1.msra.mxu0 %v5165
        %v5167 = vand.u32 %v612, 4294901760
        %v5168 = vsub.f32 %v612, %v5167
        %5169 = vmatprep.subr.mxu0 %v5168
        %v5170 = vand.u32 %v611, 4294901760
        %v5171 = vsub.f32 %v611, %v5170
        %5172 = vmatpush1.msra.mxu0 %v5171
        %v5173 = vand.u32 %v614, 4294901760
        %v5174 = vsub.f32 %v614, %v5173
        %5175 = vmatprep.subr.mxu0 %v5174
        %v5176 = vand.u32 %v613, 4294901760
        %v5177 = vsub.f32 %v613, %v5176
        %5178 = vmatpush1.msra.mxu0 %v5177
        %v5179 = vand.u32 %v616, 4294901760
        %v5180 = vsub.f32 %v616, %v5179
        %5181 = vmatprep.subr.mxu0 %v5180
        %v5182 = vand.u32 %v615, 4294901760
        %v5183 = vsub.f32 %v615, %v5182
        %5184 = vmatpush1.msra.mxu0 %v5183
        %v5185 = vand.u32 %v618, 4294901760
        %v5186 = vsub.f32 %v618, %v5185
        %5187 = vmatprep.subr.mxu0 %v5186
        %v5188 = vand.u32 %v617, 4294901760
        %v5189 = vsub.f32 %v617, %v5188
        %5190 = vmatpush1.msra.mxu0 %v5189
        %v5191 = vand.u32 %v620, 4294901760
        %v5192 = vsub.f32 %v620, %v5191
        %5193 = vmatprep.subr.mxu0 %v5192
        %v5194 = vand.u32 %v619, 4294901760
        %v5195 = vsub.f32 %v619, %v5194
        %5196 = vmatpush1.msra.mxu0 %v5195
        %v5197 = vand.u32 %v622, 4294901760
        %v5198 = vsub.f32 %v622, %v5197
        %5199 = vmatprep.subr.mxu0 %v5198
        %v5200 = vand.u32 %v621, 4294901760
        %v5201 = vsub.f32 %v621, %v5200
        %5202 = vmatpush1.msra.mxu0 %v5201
        %v5203 = vand.u32 %v624, 4294901760
        %v5204 = vsub.f32 %v624, %v5203
        %5205 = vmatprep.subr.mxu0 %v5204
        %v5206 = vand.u32 %v623, 4294901760
        %v5207 = vsub.f32 %v623, %v5206
        %5208 = vmatpush1.msra.mxu0 %v5207
        %v5209 = vand.u32 %v626, 4294901760
        %v5210 = vsub.f32 %v626, %v5209
        %5211 = vmatprep.subr.mxu0 %v5210
        %v5212 = vand.u32 %v625, 4294901760
        %v5213 = vsub.f32 %v625, %v5212
        %5214 = vmatpush1.msra.mxu0 %v5213
        %v5215 = vand.u32 %v628, 4294901760
        %v5216 = vsub.f32 %v628, %v5215
        %5217 = vmatprep.subr.mxu0 %v5216
        %v5218 = vand.u32 %v627, 4294901760
        %v5219 = vsub.f32 %v627, %v5218
        %5220 = vmatpush1.msra.mxu0 %v5219
        %v5221 = vand.u32 %v630, 4294901760
        %v5222 = vsub.f32 %v630, %v5221
        %5223 = vmatprep.subr.mxu0 %v5222
        %v5224 = vand.u32 %v629, 4294901760
        %v5225 = vsub.f32 %v629, %v5224
        %5226 = vmatpush1.msra.mxu0 %v5225
        %v5227 = vand.u32 %v632, 4294901760
        %v5228 = vsub.f32 %v632, %v5227
        %5229 = vmatprep.subr.mxu0 %v5228
        %v5230 = vand.u32 %v631, 4294901760
        %v5231 = vsub.f32 %v631, %v5230
        %5232 = vmatpush1.msra.mxu0 %v5231
        %v5233 = vand.u32 %v634, 4294901760
        %v5234 = vsub.f32 %v634, %v5233
        %5235 = vmatprep.subr.mxu0 %v5234
        %v5236 = vand.u32 %v633, 4294901760
        %v5237 = vsub.f32 %v633, %v5236
        %5238 = vmatpush1.msra.mxu0 %v5237
        %v5239 = vand.u32 %v636, 4294901760
        %v5240 = vsub.f32 %v636, %v5239
        %5241 = vmatprep.subr.mxu0 %v5240
        %v5242 = vand.u32 %v635, 4294901760
        %v5243 = vsub.f32 %v635, %v5242
        %5244 = vmatpush1.msra.mxu0 %v5243
        %v5245 = vand.u32 %v638, 4294901760
        %v5246 = vsub.f32 %v638, %v5245
        %5247 = vmatprep.subr.mxu0 %v5246
        %v5248 = vand.u32 %v637, 4294901760
        %v5249 = vsub.f32 %v637, %v5248
        %5250 = vmatpush1.msra.mxu0 %v5249
        %v5251 = vand.u32 %v664, 4294901760
        %v5252 = vsub.f32 %v664, %v5251
        %5253 = vmatprep.mubr.f32.mxu0 %v5252
        %v5254 = vand.u32 %v656, 4294901760
        %v5255 = vsub.f32 %v656, %v5254
        %5256 = vmatmul.mubr.f32.gmra.mrb[0].mxu0 %v5255
        %v5257 = vpop.f32.mrb[0].mxu0
        %v5258 = vadd.f32 %v5055, %v5257
        %v5259 = vpop.f32.mrb[0].mxu0
        %v5260 = vadd.f32 %v5057, %v5259
        %5261 = vdwg.mxu0
        %v5262 = vand.u32 %v576, 4294901760
        %5263 = vmatprep.subr.mxu0 %v5262
        %v5264 = vand.u32 %v575, 4294901760
        %5265 = vmatpush1.msra.mxu0 %v5264
        %v5266 = vand.u32 %v578, 4294901760
        %5267 = vmatprep.subr.mxu0 %v5266
        %v5268 = vand.u32 %v577, 4294901760
        %5269 = vmatpush1.msra.mxu0 %v5268
        %v5270 = vand.u32 %v580, 4294901760
        %5271 = vmatprep.subr.mxu0 %v5270
        %v5272 = vand.u32 %v579, 4294901760
        %5273 = vmatpush1.msra.mxu0 %v5272
        %v5274 = vand.u32 %v582, 4294901760
        %5275 = vmatprep.subr.mxu0 %v5274
        %v5276 = vand.u32 %v581, 4294901760
        %5277 = vmatpush1.msra.mxu0 %v5276
        %v5278 = vand.u32 %v584, 4294901760
        %5279 = vmatprep.subr.mxu0 %v5278
        %v5280 = vand.u32 %v583, 4294901760
        %5281 = vmatpush1.msra.mxu0 %v5280
        %v5282 = vand.u32 %v586, 4294901760
        %5283 = vmatprep.subr.mxu0 %v5282
        %v5284 = vand.u32 %v585, 4294901760
        %5285 = vmatpush1.msra.mxu0 %v5284
        %v5286 = vand.u32 %v588, 4294901760
        %5287 = vmatprep.subr.mxu0 %v5286
        %v5288 = vand.u32 %v587, 4294901760
        %5289 = vmatpush1.msra.mxu0 %v5288
        %v5290 = vand.u32 %v590, 4294901760
        %5291 = vmatprep.subr.mxu0 %v5290
        %v5292 = vand.u32 %v589, 4294901760
        %5293 = vmatpush1.msra.mxu0 %v5292
        %v5294 = vand.u32 %v592, 4294901760
        %5295 = vmatprep.subr.mxu0 %v5294
        %v5296 = vand.u32 %v591, 4294901760
        %5297 = vmatpush1.msra.mxu0 %v5296
        %v5298 = vand.u32 %v594, 4294901760
        %5299 = vmatprep.subr.mxu0 %v5298
        %v5300 = vand.u32 %v593, 4294901760
        %5301 = vmatpush1.msra.mxu0 %v5300
        %v5302 = vand.u32 %v596, 4294901760
        %5303 = vmatprep.subr.mxu0 %v5302
        %v5304 = vand.u32 %v595, 4294901760
        %5305 = vmatpush1.msra.mxu0 %v5304
        %v5306 = vand.u32 %v598, 4294901760
        %5307 = vmatprep.subr.mxu0 %v5306
        %v5308 = vand.u32 %v597, 4294901760
        %5309 = vmatpush1.msra.mxu0 %v5308
        %v5310 = vand.u32 %v600, 4294901760
        %5311 = vmatprep.subr.mxu0 %v5310
        %v5312 = vand.u32 %v599, 4294901760
        %5313 = vmatpush1.msra.mxu0 %v5312
        %v5314 = vand.u32 %v602, 4294901760
        %5315 = vmatprep.subr.mxu0 %v5314
        %v5316 = vand.u32 %v601, 4294901760
        %5317 = vmatpush1.msra.mxu0 %v5316
        %v5318 = vand.u32 %v604, 4294901760
        %5319 = vmatprep.subr.mxu0 %v5318
        %v5320 = vand.u32 %v603, 4294901760
        %5321 = vmatpush1.msra.mxu0 %v5320
        %v5322 = vand.u32 %v606, 4294901760
        %5323 = vmatprep.subr.mxu0 %v5322
        %v5324 = vand.u32 %v605, 4294901760
        %5325 = vmatpush1.msra.mxu0 %v5324
        %v5326 = vand.u32 %v608, 4294901760
        %5327 = vmatprep.subr.mxu0 %v5326
        %v5328 = vand.u32 %v607, 4294901760
        %5329 = vmatpush1.msra.mxu0 %v5328
        %v5330 = vand.u32 %v610, 4294901760
        %5331 = vmatprep.subr.mxu0 %v5330
        %v5332 = vand.u32 %v609, 4294901760
        %5333 = vmatpush1.msra.mxu0 %v5332
        %v5334 = vand.u32 %v612, 4294901760
        %5335 = vmatprep.subr.mxu0 %v5334
        %v5336 = vand.u32 %v611, 4294901760
        %5337 = vmatpush1.msra.mxu0 %v5336
        %v5338 = vand.u32 %v614, 4294901760
        %5339 = vmatprep.subr.mxu0 %v5338
        %v5340 = vand.u32 %v613, 4294901760
        %5341 = vmatpush1.msra.mxu0 %v5340
        %v5342 = vand.u32 %v616, 4294901760
        %5343 = vmatprep.subr.mxu0 %v5342
        %v5344 = vand.u32 %v615, 4294901760
        %5345 = vmatpush1.msra.mxu0 %v5344
        %v5346 = vand.u32 %v618, 4294901760
        %5347 = vmatprep.subr.mxu0 %v5346
        %v5348 = vand.u32 %v617, 4294901760
        %5349 = vmatpush1.msra.mxu0 %v5348
        %v5350 = vand.u32 %v620, 4294901760
        %5351 = vmatprep.subr.mxu0 %v5350
        %v5352 = vand.u32 %v619, 4294901760
        %5353 = vmatpush1.msra.mxu0 %v5352
        %v5354 = vand.u32 %v622, 4294901760
        %5355 = vmatprep.subr.mxu0 %v5354
        %v5356 = vand.u32 %v621, 4294901760
        %5357 = vmatpush1.msra.mxu0 %v5356
        %v5358 = vand.u32 %v624, 4294901760
        %5359 = vmatprep.subr.mxu0 %v5358
        %v5360 = vand.u32 %v623, 4294901760
        %5361 = vmatpush1.msra.mxu0 %v5360
        %v5362 = vand.u32 %v626, 4294901760
        %5363 = vmatprep.subr.mxu0 %v5362
        %v5364 = vand.u32 %v625, 4294901760
        %5365 = vmatpush1.msra.mxu0 %v5364
        %v5366 = vand.u32 %v628, 4294901760
        %5367 = vmatprep.subr.mxu0 %v5366
        %v5368 = vand.u32 %v627, 4294901760
        %5369 = vmatpush1.msra.mxu0 %v5368
        %v5370 = vand.u32 %v630, 4294901760
        %5371 = vmatprep.subr.mxu0 %v5370
        %v5372 = vand.u32 %v629, 4294901760
        %5373 = vmatpush1.msra.mxu0 %v5372
        %v5374 = vand.u32 %v632, 4294901760
        %5375 = vmatprep.subr.mxu0 %v5374
        %v5376 = vand.u32 %v631, 4294901760
        %5377 = vmatpush1.msra.mxu0 %v5376
        %v5378 = vand.u32 %v634, 4294901760
        %5379 = vmatprep.subr.mxu0 %v5378
        %v5380 = vand.u32 %v633, 4294901760
        %5381 = vmatpush1.msra.mxu0 %v5380
        %v5382 = vand.u32 %v636, 4294901760
        %5383 = vmatprep.subr.mxu0 %v5382
        %v5384 = vand.u32 %v635, 4294901760
        %5385 = vmatpush1.msra.mxu0 %v5384
        %v5386 = vand.u32 %v638, 4294901760
        %5387 = vmatprep.subr.mxu0 %v5386
        %v5388 = vand.u32 %v637, 4294901760
        %5389 = vmatpush1.msra.mxu0 %v5388
        %v5390 = vand.u32 %v664, 4294901760
        %v5391 = vsub.f32 %v664, %v5390
        %v5392 = vand.u32 %v5391, 4294901760
        %5393 = vmatprep.mubr.f32.mxu0 %v5392
        %v5394 = vand.u32 %v656, 4294901760
        %v5395 = vsub.f32 %v656, %v5394
        %v5396 = vand.u32 %v5395, 4294901760
        %5397 = vmatmul.mubr.f32.gmra.mrb[0].mxu0 %v5396
        %v5398 = vpop.f32.mrb[0].mxu0
        %v5399 = vadd.f32 %v5258, %v5398
        %v5400 = vpop.f32.mrb[0].mxu0
        %v5401 = vadd.f32 %v5260, %v5400
        %5402 = vdwg.mxu0
        %v5403 = vand.u32 %v576, 4294901760
        %v5404 = vsub.f32 %v576, %v5403
        %v5405 = vand.u32 %v5404, 4294901760
        %5406 = vmatprep.subr.mxu0 %v5405
        %v5407 = vand.u32 %v575, 4294901760
        %v5408 = vsub.f32 %v575, %v5407
        %v5409 = vand.u32 %v5408, 4294901760
        %5410 = vmatpush1.msra.mxu0 %v5409
        %v5411 = vand.u32 %v578, 4294901760
        %v5412 = vsub.f32 %v578, %v5411
        %v5413 = vand.u32 %v5412, 4294901760
        %5414 = vmatprep.subr.mxu0 %v5413
        %v5415 = vand.u32 %v577, 4294901760
        %v5416 = vsub.f32 %v577, %v5415
        %v5417 = vand.u32 %v5416, 4294901760
        %5418 = vmatpush1.msra.mxu0 %v5417
        %v5419 = vand.u32 %v580, 4294901760
        %v5420 = vsub.f32 %v580, %v5419
        %v5421 = vand.u32 %v5420, 4294901760
        %5422 = vmatprep.subr.mxu0 %v5421
        %v5423 = vand.u32 %v579, 4294901760
        %v5424 = vsub.f32 %v579, %v5423
        %v5425 = vand.u32 %v5424, 4294901760
        %5426 = vmatpush1.msra.mxu0 %v5425
        %v5427 = vand.u32 %v582, 4294901760
        %v5428 = vsub.f32 %v582, %v5427
        %v5429 = vand.u32 %v5428, 4294901760
        %5430 = vmatprep.subr.mxu0 %v5429
        %v5431 = vand.u32 %v581, 4294901760
        %v5432 = vsub.f32 %v581, %v5431
        %v5433 = vand.u32 %v5432, 4294901760
        %5434 = vmatpush1.msra.mxu0 %v5433
        %v5435 = vand.u32 %v584, 4294901760
        %v5436 = vsub.f32 %v584, %v5435
        %v5437 = vand.u32 %v5436, 4294901760
        %5438 = vmatprep.subr.mxu0 %v5437
        %v5439 = vand.u32 %v583, 4294901760
        %v5440 = vsub.f32 %v583, %v5439
        %v5441 = vand.u32 %v5440, 4294901760
        %5442 = vmatpush1.msra.mxu0 %v5441
        %v5443 = vand.u32 %v586, 4294901760
        %v5444 = vsub.f32 %v586, %v5443
        %v5445 = vand.u32 %v5444, 4294901760
        %5446 = vmatprep.subr.mxu0 %v5445
        %v5447 = vand.u32 %v585, 4294901760
        %v5448 = vsub.f32 %v585, %v5447
        %v5449 = vand.u32 %v5448, 4294901760
        %5450 = vmatpush1.msra.mxu0 %v5449
        %v5451 = vand.u32 %v588, 4294901760
        %v5452 = vsub.f32 %v588, %v5451
        %v5453 = vand.u32 %v5452, 4294901760
        %5454 = vmatprep.subr.mxu0 %v5453
        %v5455 = vand.u32 %v587, 4294901760
        %v5456 = vsub.f32 %v587, %v5455
        %v5457 = vand.u32 %v5456, 4294901760
        %5458 = vmatpush1.msra.mxu0 %v5457
        %v5459 = vand.u32 %v590, 4294901760
        %v5460 = vsub.f32 %v590, %v5459
        %v5461 = vand.u32 %v5460, 4294901760
        %5462 = vmatprep.subr.mxu0 %v5461
        %v5463 = vand.u32 %v589, 4294901760
        %v5464 = vsub.f32 %v589, %v5463
        %v5465 = vand.u32 %v5464, 4294901760
        %5466 = vmatpush1.msra.mxu0 %v5465
        %v5467 = vand.u32 %v592, 4294901760
        %v5468 = vsub.f32 %v592, %v5467
        %v5469 = vand.u32 %v5468, 4294901760
        %5470 = vmatprep.subr.mxu0 %v5469
        %v5471 = vand.u32 %v591, 4294901760
        %v5472 = vsub.f32 %v591, %v5471
        %v5473 = vand.u32 %v5472, 4294901760
        %5474 = vmatpush1.msra.mxu0 %v5473
        %v5475 = vand.u32 %v594, 4294901760
        %v5476 = vsub.f32 %v594, %v5475
        %v5477 = vand.u32 %v5476, 4294901760
        %5478 = vmatprep.subr.mxu0 %v5477
        %v5479 = vand.u32 %v593, 4294901760
        %v5480 = vsub.f32 %v593, %v5479
        %v5481 = vand.u32 %v5480, 4294901760
        %5482 = vmatpush1.msra.mxu0 %v5481
        %v5483 = vand.u32 %v596, 4294901760
        %v5484 = vsub.f32 %v596, %v5483
        %v5485 = vand.u32 %v5484, 4294901760
        %5486 = vmatprep.subr.mxu0 %v5485
        %v5487 = vand.u32 %v595, 4294901760
        %v5488 = vsub.f32 %v595, %v5487
        %v5489 = vand.u32 %v5488, 4294901760
        %5490 = vmatpush1.msra.mxu0 %v5489
        %v5491 = vand.u32 %v598, 4294901760
        %v5492 = vsub.f32 %v598, %v5491
        %v5493 = vand.u32 %v5492, 4294901760
        %5494 = vmatprep.subr.mxu0 %v5493
        %v5495 = vand.u32 %v597, 4294901760
        %v5496 = vsub.f32 %v597, %v5495
        %v5497 = vand.u32 %v5496, 4294901760
        %5498 = vmatpush1.msra.mxu0 %v5497
        %v5499 = vand.u32 %v600, 4294901760
        %v5500 = vsub.f32 %v600, %v5499
        %v5501 = vand.u32 %v5500, 4294901760
        %5502 = vmatprep.subr.mxu0 %v5501
        %v5503 = vand.u32 %v599, 4294901760
        %v5504 = vsub.f32 %v599, %v5503
        %v5505 = vand.u32 %v5504, 4294901760
        %5506 = vmatpush1.msra.mxu0 %v5505
        %v5507 = vand.u32 %v602, 4294901760
        %v5508 = vsub.f32 %v602, %v5507
        %v5509 = vand.u32 %v5508, 4294901760
        %5510 = vmatprep.subr.mxu0 %v5509
        %v5511 = vand.u32 %v601, 4294901760
        %v5512 = vsub.f32 %v601, %v5511
        %v5513 = vand.u32 %v5512, 4294901760
        %5514 = vmatpush1.msra.mxu0 %v5513
        %v5515 = vand.u32 %v604, 4294901760
        %v5516 = vsub.f32 %v604, %v5515
        %v5517 = vand.u32 %v5516, 4294901760
        %5518 = vmatprep.subr.mxu0 %v5517
        %v5519 = vand.u32 %v603, 4294901760
        %v5520 = vsub.f32 %v603, %v5519
        %v5521 = vand.u32 %v5520, 4294901760
        %5522 = vmatpush1.msra.mxu0 %v5521
        %v5523 = vand.u32 %v606, 4294901760
        %v5524 = vsub.f32 %v606, %v5523
        %v5525 = vand.u32 %v5524, 4294901760
        %5526 = vmatprep.subr.mxu0 %v5525
        %v5527 = vand.u32 %v605, 4294901760
        %v5528 = vsub.f32 %v605, %v5527
        %v5529 = vand.u32 %v5528, 4294901760
        %5530 = vmatpush1.msra.mxu0 %v5529
        %v5531 = vand.u32 %v608, 4294901760
        %v5532 = vsub.f32 %v608, %v5531
        %v5533 = vand.u32 %v5532, 4294901760
        %5534 = vmatprep.subr.mxu0 %v5533
        %v5535 = vand.u32 %v607, 4294901760
        %v5536 = vsub.f32 %v607, %v5535
        %v5537 = vand.u32 %v5536, 4294901760
        %5538 = vmatpush1.msra.mxu0 %v5537
        %v5539 = vand.u32 %v610, 4294901760
        %v5540 = vsub.f32 %v610, %v5539
        %v5541 = vand.u32 %v5540, 4294901760
        %5542 = vmatprep.subr.mxu0 %v5541
        %v5543 = vand.u32 %v609, 4294901760
        %v5544 = vsub.f32 %v609, %v5543
        %v5545 = vand.u32 %v5544, 4294901760
        %5546 = vmatpush1.msra.mxu0 %v5545
        %v5547 = vand.u32 %v612, 4294901760
        %v5548 = vsub.f32 %v612, %v5547
        %v5549 = vand.u32 %v5548, 4294901760
        %5550 = vmatprep.subr.mxu0 %v5549
        %v5551 = vand.u32 %v611, 4294901760
        %v5552 = vsub.f32 %v611, %v5551
        %v5553 = vand.u32 %v5552, 4294901760
        %5554 = vmatpush1.msra.mxu0 %v5553
        %v5555 = vand.u32 %v614, 4294901760
        %v5556 = vsub.f32 %v614, %v5555
        %v5557 = vand.u32 %v5556, 4294901760
        %5558 = vmatprep.subr.mxu0 %v5557
        %v5559 = vand.u32 %v613, 4294901760
        %v5560 = vsub.f32 %v613, %v5559
        %v5561 = vand.u32 %v5560, 4294901760
        %5562 = vmatpush1.msra.mxu0 %v5561
        %v5563 = vand.u32 %v616, 4294901760
        %v5564 = vsub.f32 %v616, %v5563
        %v5565 = vand.u32 %v5564, 4294901760
        %5566 = vmatprep.subr.mxu0 %v5565
        %v5567 = vand.u32 %v615, 4294901760
        %v5568 = vsub.f32 %v615, %v5567
        %v5569 = vand.u32 %v5568, 4294901760
        %5570 = vmatpush1.msra.mxu0 %v5569
        %v5571 = vand.u32 %v618, 4294901760
        %v5572 = vsub.f32 %v618, %v5571
        %v5573 = vand.u32 %v5572, 4294901760
        %5574 = vmatprep.subr.mxu0 %v5573
        %v5575 = vand.u32 %v617, 4294901760
        %v5576 = vsub.f32 %v617, %v5575
        %v5577 = vand.u32 %v5576, 4294901760
        %5578 = vmatpush1.msra.mxu0 %v5577
        %v5579 = vand.u32 %v620, 4294901760
        %v5580 = vsub.f32 %v620, %v5579
        %v5581 = vand.u32 %v5580, 4294901760
        %5582 = vmatprep.subr.mxu0 %v5581
        %v5583 = vand.u32 %v619, 4294901760
        %v5584 = vsub.f32 %v619, %v5583
        %v5585 = vand.u32 %v5584, 4294901760
        %5586 = vmatpush1.msra.mxu0 %v5585
        %v5587 = vand.u32 %v622, 4294901760
        %v5588 = vsub.f32 %v622, %v5587
        %v5589 = vand.u32 %v5588, 4294901760
        %5590 = vmatprep.subr.mxu0 %v5589
        %v5591 = vand.u32 %v621, 4294901760
        %v5592 = vsub.f32 %v621, %v5591
        %v5593 = vand.u32 %v5592, 4294901760
        %5594 = vmatpush1.msra.mxu0 %v5593
        %v5595 = vand.u32 %v624, 4294901760
        %v5596 = vsub.f32 %v624, %v5595
        %v5597 = vand.u32 %v5596, 4294901760
        %5598 = vmatprep.subr.mxu0 %v5597
        %v5599 = vand.u32 %v623, 4294901760
        %v5600 = vsub.f32 %v623, %v5599
        %v5601 = vand.u32 %v5600, 4294901760
        %5602 = vmatpush1.msra.mxu0 %v5601
        %v5603 = vand.u32 %v626, 4294901760
        %v5604 = vsub.f32 %v626, %v5603
        %v5605 = vand.u32 %v5604, 4294901760
        %5606 = vmatprep.subr.mxu0 %v5605
        %v5607 = vand.u32 %v625, 4294901760
        %v5608 = vsub.f32 %v625, %v5607
        %v5609 = vand.u32 %v5608, 4294901760
        %5610 = vmatpush1.msra.mxu0 %v5609
        %v5611 = vand.u32 %v628, 4294901760
        %v5612 = vsub.f32 %v628, %v5611
        %v5613 = vand.u32 %v5612, 4294901760
        %5614 = vmatprep.subr.mxu0 %v5613
        %v5615 = vand.u32 %v627, 4294901760
        %v5616 = vsub.f32 %v627, %v5615
        %v5617 = vand.u32 %v5616, 4294901760
        %5618 = vmatpush1.msra.mxu0 %v5617
        %v5619 = vand.u32 %v630, 4294901760
        %v5620 = vsub.f32 %v630, %v5619
        %v5621 = vand.u32 %v5620, 4294901760
        %5622 = vmatprep.subr.mxu0 %v5621
        %v5623 = vand.u32 %v629, 4294901760
        %v5624 = vsub.f32 %v629, %v5623
        %v5625 = vand.u32 %v5624, 4294901760
        %5626 = vmatpush1.msra.mxu0 %v5625
        %v5627 = vand.u32 %v632, 4294901760
        %v5628 = vsub.f32 %v632, %v5627
        %v5629 = vand.u32 %v5628, 4294901760
        %5630 = vmatprep.subr.mxu0 %v5629
        %v5631 = vand.u32 %v631, 4294901760
        %v5632 = vsub.f32 %v631, %v5631
        %v5633 = vand.u32 %v5632, 4294901760
        %5634 = vmatpush1.msra.mxu0 %v5633
        %v5635 = vand.u32 %v634, 4294901760
        %v5636 = vsub.f32 %v634, %v5635
        %v5637 = vand.u32 %v5636, 4294901760
        %5638 = vmatprep.subr.mxu0 %v5637
        %v5639 = vand.u32 %v633, 4294901760
        %v5640 = vsub.f32 %v633, %v5639
        %v5641 = vand.u32 %v5640, 4294901760
        %5642 = vmatpush1.msra.mxu0 %v5641
        %v5643 = vand.u32 %v636, 4294901760
        %v5644 = vsub.f32 %v636, %v5643
        %v5645 = vand.u32 %v5644, 4294901760
        %5646 = vmatprep.subr.mxu0 %v5645
        %v5647 = vand.u32 %v635, 4294901760
        %v5648 = vsub.f32 %v635, %v5647
        %v5649 = vand.u32 %v5648, 4294901760
        %5650 = vmatpush1.msra.mxu0 %v5649
        %v5651 = vand.u32 %v638, 4294901760
        %v5652 = vsub.f32 %v638, %v5651
        %v5653 = vand.u32 %v5652, 4294901760
        %5654 = vmatprep.subr.mxu0 %v5653
        %v5655 = vand.u32 %v637, 4294901760
        %v5656 = vsub.f32 %v637, %v5655
        %v5657 = vand.u32 %v5656, 4294901760
        %5658 = vmatpush1.msra.mxu0 %v5657
        %v5659 = vand.u32 %v664, 4294901760
        %5660 = vmatprep.mubr.f32.mxu0 %v5659
        %v5661 = vand.u32 %v656, 4294901760
        %5662 = vmatmul.mubr.f32.gmra.mrb[0].mxu0 %v5661
        %v5663 = vpop.f32.mrb[0].mxu0
        %v5664 = vadd.f32 %v5399, %v5663
        %v5665 = vpop.f32.mrb[0].mxu0
        %v5666 = vadd.f32 %v5401, %v5665
        %5667 = vdwg.mxu0
        %v5668 = vand.u32 %v576, 4294901760
        %5669 = vmatprep.subr.mxu0 %v5668
        %v5670 = vand.u32 %v575, 4294901760
        %5671 = vmatpush1.msra.mxu0 %v5670
        %v5672 = vand.u32 %v578, 4294901760
        %5673 = vmatprep.subr.mxu0 %v5672
        %v5674 = vand.u32 %v577, 4294901760
        %5675 = vmatpush1.msra.mxu0 %v5674
        %v5676 = vand.u32 %v580, 4294901760
        %5677 = vmatprep.subr.mxu0 %v5676
        %v5678 = vand.u32 %v579, 4294901760
        %5679 = vmatpush1.msra.mxu0 %v5678
        %v5680 = vand.u32 %v582, 4294901760
        %5681 = vmatprep.subr.mxu0 %v5680
        %v5682 = vand.u32 %v581, 4294901760
        %5683 = vmatpush1.msra.mxu0 %v5682
        %v5684 = vand.u32 %v584, 4294901760
        %5685 = vmatprep.subr.mxu0 %v5684
        %v5686 = vand.u32 %v583, 4294901760
        %5687 = vmatpush1.msra.mxu0 %v5686
        %v5688 = vand.u32 %v586, 4294901760
        %5689 = vmatprep.subr.mxu0 %v5688
        %v5690 = vand.u32 %v585, 4294901760
        %5691 = vmatpush1.msra.mxu0 %v5690
        %v5692 = vand.u32 %v588, 4294901760
        %5693 = vmatprep.subr.mxu0 %v5692
        %v5694 = vand.u32 %v587, 4294901760
        %5695 = vmatpush1.msra.mxu0 %v5694
        %v5696 = vand.u32 %v590, 4294901760
        %5697 = vmatprep.subr.mxu0 %v5696
        %v5698 = vand.u32 %v589, 4294901760
        %5699 = vmatpush1.msra.mxu0 %v5698
        %v5700 = vand.u32 %v592, 4294901760
        %5701 = vmatprep.subr.mxu0 %v5700
        %v5702 = vand.u32 %v591, 4294901760
        %5703 = vmatpush1.msra.mxu0 %v5702
        %v5704 = vand.u32 %v594, 4294901760
        %5705 = vmatprep.subr.mxu0 %v5704
        %v5706 = vand.u32 %v593, 4294901760
        %5707 = vmatpush1.msra.mxu0 %v5706
        %v5708 = vand.u32 %v596, 4294901760
        %5709 = vmatprep.subr.mxu0 %v5708
        %v5710 = vand.u32 %v595, 4294901760
        %5711 = vmatpush1.msra.mxu0 %v5710
        %v5712 = vand.u32 %v598, 4294901760
        %5713 = vmatprep.subr.mxu0 %v5712
        %v5714 = vand.u32 %v597, 4294901760
        %5715 = vmatpush1.msra.mxu0 %v5714
        %v5716 = vand.u32 %v600, 4294901760
        %5717 = vmatprep.subr.mxu0 %v5716
        %v5718 = vand.u32 %v599, 4294901760
        %5719 = vmatpush1.msra.mxu0 %v5718
        %v5720 = vand.u32 %v602, 4294901760
        %5721 = vmatprep.subr.mxu0 %v5720
        %v5722 = vand.u32 %v601, 4294901760
        %5723 = vmatpush1.msra.mxu0 %v5722
        %v5724 = vand.u32 %v604, 4294901760
        %5725 = vmatprep.subr.mxu0 %v5724
        %v5726 = vand.u32 %v603, 4294901760
        %5727 = vmatpush1.msra.mxu0 %v5726
        %v5728 = vand.u32 %v606, 4294901760
        %5729 = vmatprep.subr.mxu0 %v5728
        %v5730 = vand.u32 %v605, 4294901760
        %5731 = vmatpush1.msra.mxu0 %v5730
        %v5732 = vand.u32 %v608, 4294901760
        %5733 = vmatprep.subr.mxu0 %v5732
        %v5734 = vand.u32 %v607, 4294901760
        %5735 = vmatpush1.msra.mxu0 %v5734
        %v5736 = vand.u32 %v610, 4294901760
        %5737 = vmatprep.subr.mxu0 %v5736
        %v5738 = vand.u32 %v609, 4294901760
        %5739 = vmatpush1.msra.mxu0 %v5738
        %v5740 = vand.u32 %v612, 4294901760
        %5741 = vmatprep.subr.mxu0 %v5740
        %v5742 = vand.u32 %v611, 4294901760
        %5743 = vmatpush1.msra.mxu0 %v5742
        %v5744 = vand.u32 %v614, 4294901760
        %5745 = vmatprep.subr.mxu0 %v5744
        %v5746 = vand.u32 %v613, 4294901760
        %5747 = vmatpush1.msra.mxu0 %v5746
        %v5748 = vand.u32 %v616, 4294901760
        %5749 = vmatprep.subr.mxu0 %v5748
        %v5750 = vand.u32 %v615, 4294901760
        %5751 = vmatpush1.msra.mxu0 %v5750
        %v5752 = vand.u32 %v618, 4294901760
        %5753 = vmatprep.subr.mxu0 %v5752
        %v5754 = vand.u32 %v617, 4294901760
        %5755 = vmatpush1.msra.mxu0 %v5754
        %v5756 = vand.u32 %v620, 4294901760
        %5757 = vmatprep.subr.mxu0 %v5756
        %v5758 = vand.u32 %v619, 4294901760
        %5759 = vmatpush1.msra.mxu0 %v5758
        %v5760 = vand.u32 %v622, 4294901760
        %5761 = vmatprep.subr.mxu0 %v5760
        %v5762 = vand.u32 %v621, 4294901760
        %5763 = vmatpush1.msra.mxu0 %v5762
        %v5764 = vand.u32 %v624, 4294901760
        %5765 = vmatprep.subr.mxu0 %v5764
        %v5766 = vand.u32 %v623, 4294901760
        %5767 = vmatpush1.msra.mxu0 %v5766
        %v5768 = vand.u32 %v626, 4294901760
        %5769 = vmatprep.subr.mxu0 %v5768
        %v5770 = vand.u32 %v625, 4294901760
        %5771 = vmatpush1.msra.mxu0 %v5770
        %v5772 = vand.u32 %v628, 4294901760
        %5773 = vmatprep.subr.mxu0 %v5772
        %v5774 = vand.u32 %v627, 4294901760
        %5775 = vmatpush1.msra.mxu0 %v5774
        %v5776 = vand.u32 %v630, 4294901760
        %5777 = vmatprep.subr.mxu0 %v5776
        %v5778 = vand.u32 %v629, 4294901760
        %5779 = vmatpush1.msra.mxu0 %v5778
        %v5780 = vand.u32 %v632, 4294901760
        %5781 = vmatprep.subr.mxu0 %v5780
        %v5782 = vand.u32 %v631, 4294901760
        %5783 = vmatpush1.msra.mxu0 %v5782
        %v5784 = vand.u32 %v634, 4294901760
        %5785 = vmatprep.subr.mxu0 %v5784
        %v5786 = vand.u32 %v633, 4294901760
        %5787 = vmatpush1.msra.mxu0 %v5786
        %v5788 = vand.u32 %v636, 4294901760
        %5789 = vmatprep.subr.mxu0 %v5788
        %v5790 = vand.u32 %v635, 4294901760
        %5791 = vmatpush1.msra.mxu0 %v5790
        %v5792 = vand.u32 %v638, 4294901760
        %5793 = vmatprep.subr.mxu0 %v5792
        %v5794 = vand.u32 %v637, 4294901760
        %5795 = vmatpush1.msra.mxu0 %v5794
        %v5796 = vand.u32 %v664, 4294901760
        %5797 = vmatprep.mubr.f32.mxu0 %v5796
        %v5798 = vand.u32 %v656, 4294901760
        %5799 = vmatmul.mubr.f32.gmra.mrb[0].mxu0 %v5798
        %v5800 = vpop.f32.mrb[0].mxu0
        %v5801 = vadd.f32 %v5664, %v5800
        %v5802 = vpop.f32.mrb[0].mxu0
        %v5803 = vadd.f32 %v5666, %v5802
        %5804 = vdwg.mxu0
        %vm5805 = vcmask 523264
        %v5807 = vsel %vm5805, %v639, 0
        %v5809 = vand.u32 %v368, 4294901760
        %5810 = vmatprep.subr.mxu0 %v5809
        %v5811 = vand.u32 %v367, 4294901760
        %5812 = vmatpush1.msra.mxu0 %v5811
        %v5813 = vand.u32 %v370, 4294901760
        %5814 = vmatprep.subr.mxu0 %v5813
        %v5815 = vand.u32 %v369, 4294901760
        %5816 = vmatpush1.msra.mxu0 %v5815
        %v5817 = vand.u32 %v372, 4294901760
        %5818 = vmatprep.subr.mxu0 %v5817
        %v5819 = vand.u32 %v371, 4294901760
        %5820 = vmatpush1.msra.mxu0 %v5819
        %v5821 = vand.u32 %v374, 4294901760
        %5822 = vmatprep.subr.mxu0 %v5821
        %v5823 = vand.u32 %v373, 4294901760
        %5824 = vmatpush1.msra.mxu0 %v5823
        %v5825 = vand.u32 %v376, 4294901760
        %5826 = vmatprep.subr.mxu0 %v5825
        %v5827 = vand.u32 %v375, 4294901760
        %5828 = vmatpush1.msra.mxu0 %v5827
        %v5829 = vand.u32 %v378, 4294901760
        %5830 = vmatprep.subr.mxu0 %v5829
        %v5831 = vand.u32 %v377, 4294901760
        %5832 = vmatpush1.msra.mxu0 %v5831
        %v5833 = vand.u32 %v380, 4294901760
        %5834 = vmatprep.subr.mxu0 %v5833
        %v5835 = vand.u32 %v379, 4294901760
        %5836 = vmatpush1.msra.mxu0 %v5835
        %v5837 = vand.u32 %v382, 4294901760
        %5838 = vmatprep.subr.mxu0 %v5837
        %v5839 = vand.u32 %v381, 4294901760
        %5840 = vmatpush1.msra.mxu0 %v5839
        %5841 = vmatprep.subr.mxu0 0.0
        %5842 = vmatpush1.msra.mxu0 0.0
        %5843 = vmatprep.subr.mxu0 0.0
        %5844 = vmatpush1.msra.mxu0 0.0
        %5845 = vmatprep.subr.mxu0 0.0
        %5846 = vmatpush1.msra.mxu0 0.0
        %5847 = vmatprep.subr.mxu0 0.0
        %5848 = vmatpush1.msra.mxu0 0.0
        %5849 = vmatprep.subr.mxu0 0.0
        %5850 = vmatpush1.msra.mxu0 0.0
        %5851 = vmatprep.subr.mxu0 0.0
        %5852 = vmatpush1.msra.mxu0 0.0
        %5853 = vmatprep.subr.mxu0 0.0
        %5854 = vmatpush1.msra.mxu0 0.0
        %5855 = vmatprep.subr.mxu0 0.0
        %5856 = vmatpush1.msra.mxu0 0.0
        %5857 = vmatprep.subr.mxu0 0.0
        %5858 = vmatpush1.msra.mxu0 0.0
        %5859 = vmatprep.subr.mxu0 0.0
        %5860 = vmatpush1.msra.mxu0 0.0
        %5861 = vmatprep.subr.mxu0 0.0
        %5862 = vmatpush1.msra.mxu0 0.0
        %5863 = vmatprep.subr.mxu0 0.0
        %5864 = vmatpush1.msra.mxu0 0.0
        %5865 = vmatprep.subr.mxu0 0.0
        %5866 = vmatpush1.msra.mxu0 0.0
        %5867 = vmatprep.subr.mxu0 0.0
        %5868 = vmatpush1.msra.mxu0 0.0
        %5869 = vmatprep.subr.mxu0 0.0
        %5870 = vmatpush1.msra.mxu0 0.0
        %5871 = vmatprep.subr.mxu0 0.0
        %5872 = vmatpush1.msra.mxu0 0.0
        %5873 = vmatprep.subr.mxu0 0.0
        %5874 = vmatpush1.msra.mxu0 0.0
        %5875 = vmatprep.subr.mxu0 0.0
        %5876 = vmatpush1.msra.mxu0 0.0
        %5877 = vmatprep.subr.mxu0 0.0
        %5878 = vmatpush1.msra.mxu0 0.0
        %5879 = vmatprep.subr.mxu0 0.0
        %5880 = vmatpush1.msra.mxu0 0.0
        %5881 = vmatprep.subr.mxu0 0.0
        %5882 = vmatpush1.msra.mxu0 0.0
        %5883 = vmatprep.subr.mxu0 0.0
        %5884 = vmatpush1.msra.mxu0 0.0
        %5885 = vmatprep.subr.mxu0 0.0
        %5886 = vmatpush1.msra.mxu0 0.0
        %5887 = vmatprep.subr.mxu0 0.0
        %5888 = vmatpush1.msra.mxu0 0.0
        %5889 = vmatprep.mubr.f32.mxu0 0.0
        %v5890 = vand.u32 %v5807, 4294901760
        %v5891 = vsub.f32 %v5807, %v5890
        %v5892 = vand.u32 %v5891, 4294901760
        %v5893 = vsub.f32 %v5891, %v5892
        %v5894 = vand.u32 %v5893, 4294901760
        %5895 = vmatmul.mubr.f32.gmra.mrb[0].mxu0 %v5894
        %v5896 = vpop.f32.mrb[0].mxu0
        %v5897 = vadd.f32 %v5801, %v5896
        %v5898 = vpop.f32.mrb[0].mxu0
        %v5899 = vadd.f32 %v5803, %v5898
        %5900 = vdwg.mxu0
        %v5901 = vand.u32 %v368, 4294901760
        %v5902 = vsub.f32 %v368, %v5901
        %v5903 = vand.u32 %v5902, 4294901760
        %v5904 = vsub.f32 %v5902, %v5903
        %v5905 = vand.u32 %v5904, 4294901760
        %5906 = vmatprep.subr.mxu0 %v5905
        %v5907 = vand.u32 %v367, 4294901760
        %v5908 = vsub.f32 %v367, %v5907
        %v5909 = vand.u32 %v5908, 4294901760
        %v5910 = vsub.f32 %v5908, %v5909
        %v5911 = vand.u32 %v5910, 4294901760
        %5912 = vmatpush1.msra.mxu0 %v5911
        %v5913 = vand.u32 %v370, 4294901760
        %v5914 = vsub.f32 %v370, %v5913
        %v5915 = vand.u32 %v5914, 4294901760
        %v5916 = vsub.f32 %v5914, %v5915
        %v5917 = vand.u32 %v5916, 4294901760
        %5918 = vmatprep.subr.mxu0 %v5917
        %v5919 = vand.u32 %v369, 4294901760
        %v5920 = vsub.f32 %v369, %v5919
        %v5921 = vand.u32 %v5920, 4294901760
        %v5922 = vsub.f32 %v5920, %v5921
        %v5923 = vand.u32 %v5922, 4294901760
        %5924 = vmatpush1.msra.mxu0 %v5923
        %v5925 = vand.u32 %v372, 4294901760
        %v5926 = vsub.f32 %v372, %v5925
        %v5927 = vand.u32 %v5926, 4294901760
        %v5928 = vsub.f32 %v5926, %v5927
        %v5929 = vand.u32 %v5928, 4294901760
        %5930 = vmatprep.subr.mxu0 %v5929
        %v5931 = vand.u32 %v371, 4294901760
        %v5932 = vsub.f32 %v371, %v5931
        %v5933 = vand.u32 %v5932, 4294901760
        %v5934 = vsub.f32 %v5932, %v5933
        %v5935 = vand.u32 %v5934, 4294901760
        %5936 = vmatpush1.msra.mxu0 %v5935
        %v5937 = vand.u32 %v374, 4294901760
        %v5938 = vsub.f32 %v374, %v5937
        %v5939 = vand.u32 %v5938, 4294901760
        %v5940 = vsub.f32 %v5938, %v5939
        %v5941 = vand.u32 %v5940, 4294901760
        %5942 = vmatprep.subr.mxu0 %v5941
        %v5943 = vand.u32 %v373, 4294901760
        %v5944 = vsub.f32 %v373, %v5943
        %v5945 = vand.u32 %v5944, 4294901760
        %v5946 = vsub.f32 %v5944, %v5945
        %v5947 = vand.u32 %v5946, 4294901760
        %5948 = vmatpush1.msra.mxu0 %v5947
        %v5949 = vand.u32 %v376, 4294901760
        %v5950 = vsub.f32 %v376, %v5949
        %v5951 = vand.u32 %v5950, 4294901760
        %v5952 = vsub.f32 %v5950, %v5951
        %v5953 = vand.u32 %v5952, 4294901760
        %5954 = vmatprep.subr.mxu0 %v5953
        %v5955 = vand.u32 %v375, 4294901760
        %v5956 = vsub.f32 %v375, %v5955
        %v5957 = vand.u32 %v5956, 4294901760
        %v5958 = vsub.f32 %v5956, %v5957
        %v5959 = vand.u32 %v5958, 4294901760
        %5960 = vmatpush1.msra.mxu0 %v5959
        %v5961 = vand.u32 %v378, 4294901760
        %v5962 = vsub.f32 %v378, %v5961
        %v5963 = vand.u32 %v5962, 4294901760
        %v5964 = vsub.f32 %v5962, %v5963
        %v5965 = vand.u32 %v5964, 4294901760
        %5966 = vmatprep.subr.mxu0 %v5965
        %v5967 = vand.u32 %v377, 4294901760
        %v5968 = vsub.f32 %v377, %v5967
        %v5969 = vand.u32 %v5968, 4294901760
        %v5970 = vsub.f32 %v5968, %v5969
        %v5971 = vand.u32 %v5970, 4294901760
        %5972 = vmatpush1.msra.mxu0 %v5971
        %v5973 = vand.u32 %v380, 4294901760
        %v5974 = vsub.f32 %v380, %v5973
        %v5975 = vand.u32 %v5974, 4294901760
        %v5976 = vsub.f32 %v5974, %v5975
        %v5977 = vand.u32 %v5976, 4294901760
        %5978 = vmatprep.subr.mxu0 %v5977
        %v5979 = vand.u32 %v379, 4294901760
        %v5980 = vsub.f32 %v379, %v5979
        %v5981 = vand.u32 %v5980, 4294901760
        %v5982 = vsub.f32 %v5980, %v5981
        %v5983 = vand.u32 %v5982, 4294901760
        %5984 = vmatpush1.msra.mxu0 %v5983
        %v5985 = vand.u32 %v382, 4294901760
        %v5986 = vsub.f32 %v382, %v5985
        %v5987 = vand.u32 %v5986, 4294901760
        %v5988 = vsub.f32 %v5986, %v5987
        %v5989 = vand.u32 %v5988, 4294901760
        %5990 = vmatprep.subr.mxu0 %v5989
        %v5991 = vand.u32 %v381, 4294901760
        %v5992 = vsub.f32 %v381, %v5991
        %v5993 = vand.u32 %v5992, 4294901760
        %v5994 = vsub.f32 %v5992, %v5993
        %v5995 = vand.u32 %v5994, 4294901760
        %5996 = vmatpush1.msra.mxu0 %v5995
        %5997 = vmatprep.subr.mxu0 0.0
        %5998 = vmatpush1.msra.mxu0 0.0
        %5999 = vmatprep.subr.mxu0 0.0
        %6000 = vmatpush1.msra.mxu0 0.0
        %6001 = vmatprep.subr.mxu0 0.0
        %6002 = vmatpush1.msra.mxu0 0.0
        %6003 = vmatprep.subr.mxu0 0.0
        %6004 = vmatpush1.msra.mxu0 0.0
        %6005 = vmatprep.subr.mxu0 0.0
        %6006 = vmatpush1.msra.mxu0 0.0
        %6007 = vmatprep.subr.mxu0 0.0
        %6008 = vmatpush1.msra.mxu0 0.0
        %6009 = vmatprep.subr.mxu0 0.0
        %6010 = vmatpush1.msra.mxu0 0.0
        %6011 = vmatprep.subr.mxu0 0.0
        %6012 = vmatpush1.msra.mxu0 0.0
        %6013 = vmatprep.subr.mxu0 0.0
        %6014 = vmatpush1.msra.mxu0 0.0
        %6015 = vmatprep.subr.mxu0 0.0
        %6016 = vmatpush1.msra.mxu0 0.0
        %6017 = vmatprep.subr.mxu0 0.0
        %6018 = vmatpush1.msra.mxu0 0.0
        %6019 = vmatprep.subr.mxu0 0.0
        %6020 = vmatpush1.msra.mxu0 0.0
        %6021 = vmatprep.subr.mxu0 0.0
        %6022 = vmatpush1.msra.mxu0 0.0
        %6023 = vmatprep.subr.mxu0 0.0
        %6024 = vmatpush1.msra.mxu0 0.0
        %6025 = vmatprep.subr.mxu0 0.0
        %6026 = vmatpush1.msra.mxu0 0.0
        %6027 = vmatprep.subr.mxu0 0.0
        %6028 = vmatpush1.msra.mxu0 0.0
        %6029 = vmatprep.subr.mxu0 0.0
        %6030 = vmatpush1.msra.mxu0 0.0
        %6031 = vmatprep.subr.mxu0 0.0
        %6032 = vmatpush1.msra.mxu0 0.0
        %6033 = vmatprep.subr.mxu0 0.0
        %6034 = vmatpush1.msra.mxu0 0.0
        %6035 = vmatprep.subr.mxu0 0.0
        %6036 = vmatpush1.msra.mxu0 0.0
        %6037 = vmatprep.subr.mxu0 0.0
        %6038 = vmatpush1.msra.mxu0 0.0
        %6039 = vmatprep.subr.mxu0 0.0
        %6040 = vmatpush1.msra.mxu0 0.0
        %6041 = vmatprep.subr.mxu0 0.0
        %6042 = vmatpush1.msra.mxu0 0.0
        %6043 = vmatprep.subr.mxu0 0.0
        %6044 = vmatpush1.msra.mxu0 0.0
        %6045 = vmatprep.mubr.f32.mxu0 0.0
        %v6046 = vand.u32 %v5807, 4294901760
        %6047 = vmatmul.mubr.f32.gmra.mrb[0].mxu0 %v6046
        %v6048 = vpop.f32.mrb[0].mxu0
        %v6049 = vadd.f32 %v5897, %v6048
        %v6050 = vpop.f32.mrb[0].mxu0
        %v6051 = vadd.f32 %v5899, %v6050
        %6052 = vdwg.mxu0
        %v6053 = vand.u32 %v368, 4294901760
        %v6054 = vsub.f32 %v368, %v6053
        %6055 = vmatprep.subr.mxu0 %v6054
        %v6056 = vand.u32 %v367, 4294901760
        %v6057 = vsub.f32 %v367, %v6056
        %6058 = vmatpush1.msra.mxu0 %v6057
        %v6059 = vand.u32 %v370, 4294901760
        %v6060 = vsub.f32 %v370, %v6059
        %6061 = vmatprep.subr.mxu0 %v6060
        %v6062 = vand.u32 %v369, 4294901760
        %v6063 = vsub.f32 %v369, %v6062
        %6064 = vmatpush1.msra.mxu0 %v6063
        %v6065 = vand.u32 %v372, 4294901760
        %v6066 = vsub.f32 %v372, %v6065
        %6067 = vmatprep.subr.mxu0 %v6066
        %v6068 = vand.u32 %v371, 4294901760
        %v6069 = vsub.f32 %v371, %v6068
        %6070 = vmatpush1.msra.mxu0 %v6069
        %v6071 = vand.u32 %v374, 4294901760
        %v6072 = vsub.f32 %v374, %v6071
        %6073 = vmatprep.subr.mxu0 %v6072
        %v6074 = vand.u32 %v373, 4294901760
        %v6075 = vsub.f32 %v373, %v6074
        %6076 = vmatpush1.msra.mxu0 %v6075
        %v6077 = vand.u32 %v376, 4294901760
        %v6078 = vsub.f32 %v376, %v6077
        %6079 = vmatprep.subr.mxu0 %v6078
        %v6080 = vand.u32 %v375, 4294901760
        %v6081 = vsub.f32 %v375, %v6080
        %6082 = vmatpush1.msra.mxu0 %v6081
        %v6083 = vand.u32 %v378, 4294901760
        %v6084 = vsub.f32 %v378, %v6083
        %6085 = vmatprep.subr.mxu0 %v6084
        %v6086 = vand.u32 %v377, 4294901760
        %v6087 = vsub.f32 %v377, %v6086
        %6088 = vmatpush1.msra.mxu0 %v6087
        %v6089 = vand.u32 %v380, 4294901760
        %v6090 = vsub.f32 %v380, %v6089
        %6091 = vmatprep.subr.mxu0 %v6090
        %v6092 = vand.u32 %v379, 4294901760
        %v6093 = vsub.f32 %v379, %v6092
        %6094 = vmatpush1.msra.mxu0 %v6093
        %v6095 = vand.u32 %v382, 4294901760
        %v6096 = vsub.f32 %v382, %v6095
        %6097 = vmatprep.subr.mxu0 %v6096
        %v6098 = vand.u32 %v381, 4294901760
        %v6099 = vsub.f32 %v381, %v6098
        %6100 = vmatpush1.msra.mxu0 %v6099
        %6101 = vmatprep.subr.mxu0 0.0
        %6102 = vmatpush1.msra.mxu0 0.0
        %6103 = vmatprep.subr.mxu0 0.0
        %6104 = vmatpush1.msra.mxu0 0.0
        %6105 = vmatprep.subr.mxu0 0.0
        %6106 = vmatpush1.msra.mxu0 0.0
        %6107 = vmatprep.subr.mxu0 0.0
        %6108 = vmatpush1.msra.mxu0 0.0
        %6109 = vmatprep.subr.mxu0 0.0
        %6110 = vmatpush1.msra.mxu0 0.0
        %6111 = vmatprep.subr.mxu0 0.0
        %6112 = vmatpush1.msra.mxu0 0.0
        %6113 = vmatprep.subr.mxu0 0.0
        %6114 = vmatpush1.msra.mxu0 0.0
        %6115 = vmatprep.subr.mxu0 0.0
        %6116 = vmatpush1.msra.mxu0 0.0
        %6117 = vmatprep.subr.mxu0 0.0
        %6118 = vmatpush1.msra.mxu0 0.0
        %6119 = vmatprep.subr.mxu0 0.0
        %6120 = vmatpush1.msra.mxu0 0.0
        %6121 = vmatprep.subr.mxu0 0.0
        %6122 = vmatpush1.msra.mxu0 0.0
        %6123 = vmatprep.subr.mxu0 0.0
        %6124 = vmatpush1.msra.mxu0 0.0
        %6125 = vmatprep.subr.mxu0 0.0
        %6126 = vmatpush1.msra.mxu0 0.0
        %6127 = vmatprep.subr.mxu0 0.0
        %6128 = vmatpush1.msra.mxu0 0.0
        %6129 = vmatprep.subr.mxu0 0.0
        %6130 = vmatpush1.msra.mxu0 0.0
        %6131 = vmatprep.subr.mxu0 0.0
        %6132 = vmatpush1.msra.mxu0 0.0
        %6133 = vmatprep.subr.mxu0 0.0
        %6134 = vmatpush1.msra.mxu0 0.0
        %6135 = vmatprep.subr.mxu0 0.0
        %6136 = vmatpush1.msra.mxu0 0.0
        %6137 = vmatprep.subr.mxu0 0.0
        %6138 = vmatpush1.msra.mxu0 0.0
        %6139 = vmatprep.subr.mxu0 0.0
        %6140 = vmatpush1.msra.mxu0 0.0
        %6141 = vmatprep.subr.mxu0 0.0
        %6142 = vmatpush1.msra.mxu0 0.0
        %6143 = vmatprep.subr.mxu0 0.0
        %6144 = vmatpush1.msra.mxu0 0.0
        %6145 = vmatprep.subr.mxu0 0.0
        %6146 = vmatpush1.msra.mxu0 0.0
        %6147 = vmatprep.subr.mxu0 0.0
        %6148 = vmatpush1.msra.mxu0 0.0
        %6149 = vmatprep.mubr.f32.mxu0 0.0
        %v6150 = vand.u32 %v5807, 4294901760
        %v6151 = vsub.f32 %v5807, %v6150
        %6152 = vmatmul.mubr.f32.gmra.mrb[0].mxu0 %v6151
        %v6153 = vpop.f32.mrb[0].mxu0
        %v6154 = vadd.f32 %v6049, %v6153
        %v6155 = vpop.f32.mrb[0].mxu0
        %v6156 = vadd.f32 %v6051, %v6155
        %6157 = vdwg.mxu0
        %v6158 = vand.u32 %v368, 4294901760
        %6159 = vmatprep.subr.mxu0 %v6158
        %v6160 = vand.u32 %v367, 4294901760
        %6161 = vmatpush1.msra.mxu0 %v6160
        %v6162 = vand.u32 %v370, 4294901760
        %6163 = vmatprep.subr.mxu0 %v6162
        %v6164 = vand.u32 %v369, 4294901760
        %6165 = vmatpush1.msra.mxu0 %v6164
        %v6166 = vand.u32 %v372, 4294901760
        %6167 = vmatprep.subr.mxu0 %v6166
        %v6168 = vand.u32 %v371, 4294901760
        %6169 = vmatpush1.msra.mxu0 %v6168
        %v6170 = vand.u32 %v374, 4294901760
        %6171 = vmatprep.subr.mxu0 %v6170
        %v6172 = vand.u32 %v373, 4294901760
        %6173 = vmatpush1.msra.mxu0 %v6172
        %v6174 = vand.u32 %v376, 4294901760
        %6175 = vmatprep.subr.mxu0 %v6174
        %v6176 = vand.u32 %v375, 4294901760
        %6177 = vmatpush1.msra.mxu0 %v6176
        %v6178 = vand.u32 %v378, 4294901760
        %6179 = vmatprep.subr.mxu0 %v6178
        %v6180 = vand.u32 %v377, 4294901760
        %6181 = vmatpush1.msra.mxu0 %v6180
        %v6182 = vand.u32 %v380, 4294901760
        %6183 = vmatprep.subr.mxu0 %v6182
        %v6184 = vand.u32 %v379, 4294901760
        %6185 = vmatpush1.msra.mxu0 %v6184
        %v6186 = vand.u32 %v382, 4294901760
        %6187 = vmatprep.subr.mxu0 %v6186
        %v6188 = vand.u32 %v381, 4294901760
        %6189 = vmatpush1.msra.mxu0 %v6188
        %6190 = vmatprep.subr.mxu0 0.0
        %6191 = vmatpush1.msra.mxu0 0.0
        %6192 = vmatprep.subr.mxu0 0.0
        %6193 = vmatpush1.msra.mxu0 0.0
        %6194 = vmatprep.subr.mxu0 0.0
        %6195 = vmatpush1.msra.mxu0 0.0
        %6196 = vmatprep.subr.mxu0 0.0
        %6197 = vmatpush1.msra.mxu0 0.0
        %6198 = vmatprep.subr.mxu0 0.0
        %6199 = vmatpush1.msra.mxu0 0.0
        %6200 = vmatprep.subr.mxu0 0.0
        %6201 = vmatpush1.msra.mxu0 0.0
        %6202 = vmatprep.subr.mxu0 0.0
        %6203 = vmatpush1.msra.mxu0 0.0
        %6204 = vmatprep.subr.mxu0 0.0
        %6205 = vmatpush1.msra.mxu0 0.0
        %6206 = vmatprep.subr.mxu0 0.0
        %6207 = vmatpush1.msra.mxu0 0.0
        %6208 = vmatprep.subr.mxu0 0.0
        %6209 = vmatpush1.msra.mxu0 0.0
        %6210 = vmatprep.subr.mxu0 0.0
        %6211 = vmatpush1.msra.mxu0 0.0
        %6212 = vmatprep.subr.mxu0 0.0
        %6213 = vmatpush1.msra.mxu0 0.0
        %6214 = vmatprep.subr.mxu0 0.0
        %6215 = vmatpush1.msra.mxu0 0.0
        %6216 = vmatprep.subr.mxu0 0.0
        %6217 = vmatpush1.msra.mxu0 0.0
        %6218 = vmatprep.subr.mxu0 0.0
        %6219 = vmatpush1.msra.mxu0 0.0
        %6220 = vmatprep.subr.mxu0 0.0
        %6221 = vmatpush1.msra.mxu0 0.0
        %6222 = vmatprep.subr.mxu0 0.0
        %6223 = vmatpush1.msra.mxu0 0.0
        %6224 = vmatprep.subr.mxu0 0.0
        %6225 = vmatpush1.msra.mxu0 0.0
        %6226 = vmatprep.subr.mxu0 0.0
        %6227 = vmatpush1.msra.mxu0 0.0
        %6228 = vmatprep.subr.mxu0 0.0
        %6229 = vmatpush1.msra.mxu0 0.0
        %6230 = vmatprep.subr.mxu0 0.0
        %6231 = vmatpush1.msra.mxu0 0.0
        %6232 = vmatprep.subr.mxu0 0.0
        %6233 = vmatpush1.msra.mxu0 0.0
        %6234 = vmatprep.subr.mxu0 0.0
        %6235 = vmatpush1.msra.mxu0 0.0
        %6236 = vmatprep.subr.mxu0 0.0
        %6237 = vmatpush1.msra.mxu0 0.0
        %6238 = vmatprep.mubr.f32.mxu0 0.0
        %v6239 = vand.u32 %v5807, 4294901760
        %v6240 = vsub.f32 %v5807, %v6239
        %v6241 = vand.u32 %v6240, 4294901760
        %6242 = vmatmul.mubr.f32.gmra.mrb[0].mxu0 %v6241
        %v6243 = vpop.f32.mrb[0].mxu0
        %v6244 = vadd.f32 %v6154, %v6243
        %v6245 = vpop.f32.mrb[0].mxu0
        %v6246 = vadd.f32 %v6156, %v6245
        %6247 = vdwg.mxu0
        %v6248 = vand.u32 %v368, 4294901760
        %v6249 = vsub.f32 %v368, %v6248
        %v6250 = vand.u32 %v6249, 4294901760
        %6251 = vmatprep.subr.mxu0 %v6250
        %v6252 = vand.u32 %v367, 4294901760
        %v6253 = vsub.f32 %v367, %v6252
        %v6254 = vand.u32 %v6253, 4294901760
        %6255 = vmatpush1.msra.mxu0 %v6254
        %v6256 = vand.u32 %v370, 4294901760
        %v6257 = vsub.f32 %v370, %v6256
        %v6258 = vand.u32 %v6257, 4294901760
        %6259 = vmatprep.subr.mxu0 %v6258
        %v6260 = vand.u32 %v369, 4294901760
        %v6261 = vsub.f32 %v369, %v6260
        %v6262 = vand.u32 %v6261, 4294901760
        %6263 = vmatpush1.msra.mxu0 %v6262
        %v6264 = vand.u32 %v372, 4294901760
        %v6265 = vsub.f32 %v372, %v6264
        %v6266 = vand.u32 %v6265, 4294901760
        %6267 = vmatprep.subr.mxu0 %v6266
        %v6268 = vand.u32 %v371, 4294901760
        %v6269 = vsub.f32 %v371, %v6268
        %v6270 = vand.u32 %v6269, 4294901760
        %6271 = vmatpush1.msra.mxu0 %v6270
        %v6272 = vand.u32 %v374, 4294901760
        %v6273 = vsub.f32 %v374, %v6272
        %v6274 = vand.u32 %v6273, 4294901760
        %6275 = vmatprep.subr.mxu0 %v6274
        %v6276 = vand.u32 %v373, 4294901760
        %v6277 = vsub.f32 %v373, %v6276
        %v6278 = vand.u32 %v6277, 4294901760
        %6279 = vmatpush1.msra.mxu0 %v6278
        %v6280 = vand.u32 %v376, 4294901760
        %v6281 = vsub.f32 %v376, %v6280
        %v6282 = vand.u32 %v6281, 4294901760
        %6283 = vmatprep.subr.mxu0 %v6282
        %v6284 = vand.u32 %v375, 4294901760
        %v6285 = vsub.f32 %v375, %v6284
        %v6286 = vand.u32 %v6285, 4294901760
        %6287 = vmatpush1.msra.mxu0 %v6286
        %v6288 = vand.u32 %v378, 4294901760
        %v6289 = vsub.f32 %v378, %v6288
        %v6290 = vand.u32 %v6289, 4294901760
        %6291 = vmatprep.subr.mxu0 %v6290
        %v6292 = vand.u32 %v377, 4294901760
        %v6293 = vsub.f32 %v377, %v6292
        %v6294 = vand.u32 %v6293, 4294901760
        %6295 = vmatpush1.msra.mxu0 %v6294
        %v6296 = vand.u32 %v380, 4294901760
        %v6297 = vsub.f32 %v380, %v6296
        %v6298 = vand.u32 %v6297, 4294901760
        %6299 = vmatprep.subr.mxu0 %v6298
        %v6300 = vand.u32 %v379, 4294901760
        %v6301 = vsub.f32 %v379, %v6300
        %v6302 = vand.u32 %v6301, 4294901760
        %6303 = vmatpush1.msra.mxu0 %v6302
        %v6304 = vand.u32 %v382, 4294901760
        %v6305 = vsub.f32 %v382, %v6304
        %v6306 = vand.u32 %v6305, 4294901760
        %6307 = vmatprep.subr.mxu0 %v6306
        %v6308 = vand.u32 %v381, 4294901760
        %v6309 = vsub.f32 %v381, %v6308
        %v6310 = vand.u32 %v6309, 4294901760
        %6311 = vmatpush1.msra.mxu0 %v6310
        %6312 = vmatprep.subr.mxu0 0.0
        %6313 = vmatpush1.msra.mxu0 0.0
        %6314 = vmatprep.subr.mxu0 0.0
        %6315 = vmatpush1.msra.mxu0 0.0
        %6316 = vmatprep.subr.mxu0 0.0
        %6317 = vmatpush1.msra.mxu0 0.0
        %6318 = vmatprep.subr.mxu0 0.0
        %6319 = vmatpush1.msra.mxu0 0.0
        %6320 = vmatprep.subr.mxu0 0.0
        %6321 = vmatpush1.msra.mxu0 0.0
        %6322 = vmatprep.subr.mxu0 0.0
        %6323 = vmatpush1.msra.mxu0 0.0
        %6324 = vmatprep.subr.mxu0 0.0
        %6325 = vmatpush1.msra.mxu0 0.0
        %6326 = vmatprep.subr.mxu0 0.0
        %6327 = vmatpush1.msra.mxu0 0.0
        %6328 = vmatprep.subr.mxu0 0.0
        %6329 = vmatpush1.msra.mxu0 0.0
        %6330 = vmatprep.subr.mxu0 0.0
        %6331 = vmatpush1.msra.mxu0 0.0
        %6332 = vmatprep.subr.mxu0 0.0
        %6333 = vmatpush1.msra.mxu0 0.0
        %6334 = vmatprep.subr.mxu0 0.0
        %6335 = vmatpush1.msra.mxu0 0.0
        %6336 = vmatprep.subr.mxu0 0.0
        %6337 = vmatpush1.msra.mxu0 0.0
        %6338 = vmatprep.subr.mxu0 0.0
        %6339 = vmatpush1.msra.mxu0 0.0
        %6340 = vmatprep.subr.mxu0 0.0
        %6341 = vmatpush1.msra.mxu0 0.0
        %6342 = vmatprep.subr.mxu0 0.0
        %6343 = vmatpush1.msra.mxu0 0.0
        %6344 = vmatprep.subr.mxu0 0.0
        %6345 = vmatpush1.msra.mxu0 0.0
        %6346 = vmatprep.subr.mxu0 0.0
        %6347 = vmatpush1.msra.mxu0 0.0
        %6348 = vmatprep.subr.mxu0 0.0
        %6349 = vmatpush1.msra.mxu0 0.0
        %6350 = vmatprep.subr.mxu0 0.0
        %6351 = vmatpush1.msra.mxu0 0.0
        %6352 = vmatprep.subr.mxu0 0.0
        %6353 = vmatpush1.msra.mxu0 0.0
        %6354 = vmatprep.subr.mxu0 0.0
        %6355 = vmatpush1.msra.mxu0 0.0
        %6356 = vmatprep.subr.mxu0 0.0
        %6357 = vmatpush1.msra.mxu0 0.0
        %6358 = vmatprep.subr.mxu0 0.0
        %6359 = vmatpush1.msra.mxu0 0.0
        %6360 = vmatprep.mubr.f32.mxu0 0.0
        %v6361 = vand.u32 %v5807, 4294901760
        %6362 = vmatmul.mubr.f32.gmra.mrb[0].mxu0 %v6361
        %v6363 = vpop.f32.mrb[0].mxu0
        %v6364 = vadd.f32 %v6244, %v6363
        %v6365 = vpop.f32.mrb[0].mxu0
        %v6366 = vadd.f32 %v6246, %v6365
        %6367 = vdwg.mxu0
        %v6368 = vand.u32 %v368, 4294901760
        %6369 = vmatprep.subr.mxu0 %v6368
        %v6370 = vand.u32 %v367, 4294901760
        %6371 = vmatpush1.msra.mxu0 %v6370
        %v6372 = vand.u32 %v370, 4294901760
        %6373 = vmatprep.subr.mxu0 %v6372
        %v6374 = vand.u32 %v369, 4294901760
        %6375 = vmatpush1.msra.mxu0 %v6374
        %v6376 = vand.u32 %v372, 4294901760
        %6377 = vmatprep.subr.mxu0 %v6376
        %v6378 = vand.u32 %v371, 4294901760
        %6379 = vmatpush1.msra.mxu0 %v6378
        %v6380 = vand.u32 %v374, 4294901760
        %6381 = vmatprep.subr.mxu0 %v6380
        %v6382 = vand.u32 %v373, 4294901760
        %6383 = vmatpush1.msra.mxu0 %v6382
        %v6384 = vand.u32 %v376, 4294901760
        %6385 = vmatprep.subr.mxu0 %v6384
        %v6386 = vand.u32 %v375, 4294901760
        %6387 = vmatpush1.msra.mxu0 %v6386
        %v6388 = vand.u32 %v378, 4294901760
        %6389 = vmatprep.subr.mxu0 %v6388
        %v6390 = vand.u32 %v377, 4294901760
        %6391 = vmatpush1.msra.mxu0 %v6390
        %v6392 = vand.u32 %v380, 4294901760
        %6393 = vmatprep.subr.mxu0 %v6392
        %v6394 = vand.u32 %v379, 4294901760
        %6395 = vmatpush1.msra.mxu0 %v6394
        %v6396 = vand.u32 %v382, 4294901760
        %6397 = vmatprep.subr.mxu0 %v6396
        %v6398 = vand.u32 %v381, 4294901760
        %6399 = vmatpush1.msra.mxu0 %v6398
        %6400 = vmatprep.subr.mxu0 0.0
        %6401 = vmatpush1.msra.mxu0 0.0
        %6402 = vmatprep.subr.mxu0 0.0
        %6403 = vmatpush1.msra.mxu0 0.0
        %6404 = vmatprep.subr.mxu0 0.0
        %6405 = vmatpush1.msra.mxu0 0.0
        %6406 = vmatprep.subr.mxu0 0.0
        %6407 = vmatpush1.msra.mxu0 0.0
        %6408 = vmatprep.subr.mxu0 0.0
        %6409 = vmatpush1.msra.mxu0 0.0
        %6410 = vmatprep.subr.mxu0 0.0
        %6411 = vmatpush1.msra.mxu0 0.0
        %6412 = vmatprep.subr.mxu0 0.0
        %6413 = vmatpush1.msra.mxu0 0.0
        %6414 = vmatprep.subr.mxu0 0.0
        %6415 = vmatpush1.msra.mxu0 0.0
        %6416 = vmatprep.subr.mxu0 0.0
        %6417 = vmatpush1.msra.mxu0 0.0
        %6418 = vmatprep.subr.mxu0 0.0
        %6419 = vmatpush1.msra.mxu0 0.0
        %6420 = vmatprep.subr.mxu0 0.0
        %6421 = vmatpush1.msra.mxu0 0.0
        %6422 = vmatprep.subr.mxu0 0.0
        %6423 = vmatpush1.msra.mxu0 0.0
        %6424 = vmatprep.subr.mxu0 0.0
        %6425 = vmatpush1.msra.mxu0 0.0
        %6426 = vmatprep.subr.mxu0 0.0
        %6427 = vmatpush1.msra.mxu0 0.0
        %6428 = vmatprep.subr.mxu0 0.0
        %6429 = vmatpush1.msra.mxu0 0.0
        %6430 = vmatprep.subr.mxu0 0.0
        %6431 = vmatpush1.msra.mxu0 0.0
        %6432 = vmatprep.subr.mxu0 0.0
        %6433 = vmatpush1.msra.mxu0 0.0
        %6434 = vmatprep.subr.mxu0 0.0
        %6435 = vmatpush1.msra.mxu0 0.0
        %6436 = vmatprep.subr.mxu0 0.0
        %6437 = vmatpush1.msra.mxu0 0.0
        %6438 = vmatprep.subr.mxu0 0.0
        %6439 = vmatpush1.msra.mxu0 0.0
        %6440 = vmatprep.subr.mxu0 0.0
        %6441 = vmatpush1.msra.mxu0 0.0
        %6442 = vmatprep.subr.mxu0 0.0
        %6443 = vmatpush1.msra.mxu0 0.0
        %6444 = vmatprep.subr.mxu0 0.0
        %6445 = vmatpush1.msra.mxu0 0.0
        %6446 = vmatprep.subr.mxu0 0.0
        %6447 = vmatpush1.msra.mxu0 0.0
        %6448 = vmatprep.mubr.f32.mxu0 0.0
        %v6449 = vand.u32 %v5807, 4294901760
        %6450 = vmatmul.mubr.f32.gmra.mrb[0].mxu0 %v6449
        %v6451 = vpop.f32.mrb[0].mxu0
        %v6452 = vadd.f32 %v6364, %v6451
        %v6453 = vpop.f32.mrb[0].mxu0
        %v6454 = vadd.f32 %v6366, %v6453
        %6455 = vdwg.mxu0
        %v6457 = vcombine.high %v652, %v652
        %v6459 = vmul.f32 %v651, %v652
        %v6460 = vmul.f32 %v651, %v6457
        %v6461 = vadd.f32 %v6452, %v6459
        %v6462 = vadd.f32 %v6454, %v6460
        %v6465 = vcombine.low %v6461, %v6462
        %6467 = vst [vmem:[%s366] sm:$0xff] %v6465
        %s6468 = sand.u32 %s174, 1
        %s6469 = scalar_lea.sflag [#allocation4], %s6468
        %s6470 = sand.u32 %s174, 1
        %s6471 = smul.addr %s6470, 8
        %s6472 = scalar_lea.vmem [#allocation11], %s6471
        // Predicated region
        $region61: #{tpu_custom_call.1} parent=39 // pred_check
          %p6473 = pneg %p184
        $region62: #{tpu_custom_call.1} parent=39 // pred_check_branch
          %6475 = sbr.rel (%p6473) target = $region64
        $region63: #{tpu_custom_call.1} parent=39 // pred_region
          %s6477 = ssub.s32 128, 128
          %6478 = vsyncadd %s6469, %s6477
          %s6479 = smul.addr %s31, 2
          %s6480 = smul.addr %s30, 2
          %s6481 = sadd.s32 %s6479, %s6480
          %s6482 = smul.addr %s6481, 64
          %s6483 = scalar_lea.hbm %s5, %s6482
          %s6485 = sshll.u32 %s6472, 4
          %s6486 = int_to_ptr.vmem [resolvable:$true] %s6485
          %6488 = dma.vmem_to_hbm [thread:$0]  %s6486, 128, %s6483, %s6469
        $region64: #{tpu_custom_call.1} parent=39 // pred_fallthru
          _
      $region40: #{tpu_custom_call.1} parent=5 // pred_fallthru
        _
      %p6489 = scmp.le.s32.totalorder 2, %s21
      // Predicated region
      $region65: #{tpu_custom_call.1} parent=5 // pred_check
        %p6490 = pneg %p6489
      $region66: #{tpu_custom_call.1} parent=5 // pred_check_branch
        %6492 = sbr.rel (%p6490) target = $region68
      $region67: #{tpu_custom_call.1} parent=5 // pred_region
        %s6493 = ssub.s32 %s21, 2
        // Predicated region
        $region69: #{tpu_custom_call.1} parent=67 // pred_check
          %p6494 = pneg %p190
        $region70: #{tpu_custom_call.1} parent=67 // pred_check_branch
          %6496 = sbr.rel (%p6494) target = $region72
        $region71: #{tpu_custom_call.1} parent=67 // pred_region
          %s6497 = sand.u32 %s175, 1
          %s6498 = scalar_lea.sflag [#allocation4], %s6497
          %s6499 = sand.u32 %s175, 1
          %s6500 = smul.addr %s6499, 8
          %s6501 = scalar_lea.vmem [#allocation11], %s6500
          %6502 = dma.done %s6498, 128
        $region72: #{tpu_custom_call.1} parent=67 // pred_fallthru
          _
      $region68: #{tpu_custom_call.1} parent=5 // pred_fallthru
        _
    $region6: #{tpu_custom_call.1} parent=1 // loop_footer
      %s25 = sadd.s32 1, %s21
    $region7: #{tpu_custom_call.1} parent=1 // loop_footer_branch
      %20 = sbr.rel target = $region3
    $region8: #{tpu_custom_call.1} parent=1 // loop_exit
      _
    %6503 = vsyncpa [#allocation3], 1
    %s6504 = scalar_lea.sflag [#allocation3], 1
    %6505 = vsyncpa %s6504, 1
    %6506 = vsyncpa [#allocation6], 1
    %s6507 = scalar_lea.sflag [#allocation6], 1
    %6508 = vsyncpa %s6507, 1
    %6509 = vsyncpa [#allocation9], 1
    %6510 = vsyncpa [#allocation4], 1
    %s6511 = scalar_lea.sflag [#allocation4], 1
    %6512 = vsyncpa %s6511, 1

</llo_original>
